<compile_context>
chip_gen: v5e
topology: v5e:2x2
jax: 0.10.0
libtpu: 0.0.40
codegen_flags: <defaults>
</compile_context>

<pallas_src>
import functools

import jax
import jax.numpy as jnp
from jax.experimental import pallas as pl
from jax.experimental.pallas import tpu as pltpu


# ---------------------------------------------------------------------------
# Kernel
# ---------------------------------------------------------------------------
def _make_kernel(num_layers, time_chunk, batch_block, layer_size,
                 compute_dtype, unroll):
    """Kernel body: `time_chunk` GRU-stack timesteps per grid step."""
    K, Bblk, L = time_chunk, batch_block, layer_size
    n_in = 5 + (2 if num_layers > 1 else 0)

    def kernel(*args):
        mask_ref, gi0_ref, h0_ref, whh_ref, bhn_ref = args[:5]
        if num_layers > 1:
            wih_ref, bih_ref = args[5], args[6]
        out_ref = args[n_in]
        h_scr = args[n_in + 1]                      # (num_layers, Bblk, L) f32

        tc = pl.program_id(1)                       # time-chunk index (sequential)

        # (Re)load the initial hidden state at the first time chunk of each
        # batch block (h0 is (Bblk, H); layer i occupies cols [i*L:(i+1)*L]).
        @pl.when(tc == 0)
        def _():
            for i in range(num_layers):
                h_scr[i] = h0_ref[:, i * L:(i + 1) * L]

        # Loop-invariant weights & biases: load / broadcast ONCE per chunk
        # (JAX does not CSE broadcast_in_dim -> keep out of the time loop).
        whh = tuple(whh_ref[i] for i in range(num_layers))             # (L, 3L)
        bhn = tuple(jnp.broadcast_to(bhn_ref[i].astype(jnp.float32), (Bblk, L))
                    for i in range(num_layers))
        if num_layers > 1:
            wih = tuple(wih_ref[j] for j in range(num_layers - 1))     # (L, 3L)
            bih = tuple(jnp.broadcast_to(bih_ref[j].astype(jnp.float32),
                                         (Bblk, 3 * L))
                        for j in range(num_layers - 1))

        # Carried hidden state lives in vregs inside the chunk (always f32);
        # scratch is only touched at chunk boundaries.
        hs0 = tuple(h_scr[i] for i in range(num_layers))

        def step(k, hs):
            m = jnp.broadcast_to(mask_ref[k], (Bblk, L))   # one broadcast / step
            gi0 = gi0_ref[k].astype(jnp.float32)           # (Bblk, 3L)
            new_hs = []
            x_prev = None
            for i in range(num_layers):
                h_i = hs[i] * m                            # reset mask
                if i == 0:
                    # Input projection hoisted to the wrapper; b_hh_r/z folded in.
                    gi = gi0
                else:
                    gi = jnp.dot(x_prev.astype(compute_dtype), wih[i - 1],
                                 preferred_element_type=jnp.float32) + bih[i - 1]
                gh = jnp.dot(h_i.astype(compute_dtype), whh[i],
                             preferred_element_type=jnp.float32)       # no bias
                r = jax.nn.sigmoid(gi[:, :L] + gh[:, :L])
                z = jax.nn.sigmoid(gi[:, L:2 * L] + gh[:, L:2 * L])
                n = jnp.tanh(gi[:, 2 * L:] + r * (gh[:, 2 * L:] + bhn[i]))
                h_new = (1.0 - z) * n + z * h_i            # f32 (Bblk, L)
                out_ref[k, :, i * L:(i + 1) * L] = h_new.astype(out_ref.dtype)
                new_hs.append(h_new)
                x_prev = h_new
            return tuple(new_hs)

        hs_final = jax.lax.fori_loop(0, K, step, hs0, unroll=unroll)

        # Persist the carried state for the next time chunk.
        for i in range(num_layers):
            h_scr[i] = hs_final[i]

    return kernel


# ---------------------------------------------------------------------------
# Helpers
# ---------------------------------------------------------------------------
def _const_spec(shape, single_buffer=True):
    """BlockSpec for a grid-constant operand; single-buffered when supported."""
    idx = lambda *_: (0,) * len(shape)   # noqa: E731
    if single_buffer and hasattr(pl, "Buffered"):
        try:
            return pl.BlockSpec(shape, idx, pipeline_mode=pl.Buffered(1))
        except TypeError:
            pass
    return pl.BlockSpec(shape, idx)


def _padded_bytes(shape, dtype):
    """Rough VMEM footprint of one block, padded to (8, 128) tiles."""
    dims = list(shape)
    if len(dims) >= 1:
        dims[-1] = ((dims[-1] + 127) // 128) * 128
    if len(dims) >= 2:
        dims[-2] = ((dims[-2] + 7) // 8) * 8
    size = 1
    for d in dims:
        size *= d
    return size * jnp.dtype(dtype).itemsize


# ---------------------------------------------------------------------------
# Wrapper
# ---------------------------------------------------------------------------
def recurrent_model_forward(obs, reset, h0, params, *, num_layers,
                            time_chunk=8, batch_block=None,
                            compute_dtype=jnp.float32, gi_dtype=None,
                            unroll=True, single_buffer_weights=True,
                            vmem_limit_bytes=None):
    """Pallas implementation of RecurrentModel.forward
    (gru_implementation=True, do_open_loop=False).

    obs:   (T, B, input_dim)  float32
    reset: (T, B)             bool
    h0:    (B, hidden_dim)    float32
    returns states_h: (T, B, hidden_dim) float32
    """
    T, B, Din = obs.shape
    H = h0.shape[1]
    L = H // num_layers
    assert L * num_layers == H, "hidden_dim must be divisible by gru_layers"

    K = min(time_chunk, T)
    assert T % K == 0, "T must be divisible by time_chunk"
    Bblk = B if batch_block is None else batch_block
    assert B % Bblk == 0, "B must be divisible by batch_block"
    assert Bblk == B or Bblk % 8 == 0, \
        "batch_block must be a multiple of 8 (sublane tiling) or equal to B"
    # Fast-path notes (not enforced for the demo): L % 128 == 0 for lane-dense
    # stores, Bblk >= 128/256 to fill the MXU M dim, B // Bblk >= 2 for v7x
    # megacore utilization.

    if gi_dtype is None:
        gi_dtype = compute_dtype
    f32 = jnp.float32

    obs = obs.astype(f32)
    mask = (~reset).astype(f32)[:, :, None]                        # (T, B, 1)

    # ---- fused input-side projection: ONE batched GEMM, no embed tensor ----
    lin_w = params["lin_w"].astype(f32)                            # (Din, H)
    lin_b = params["lin_b"].astype(f32)                            # (H,)
    w_ih_0 = params["w_ih_0"].astype(f32)                          # (H, 3L)
    zeros_L = jnp.zeros((L,), f32)
    # Fold recurrent r/z biases into the streamed gate input; only the n-gate
    # recurrent bias must stay inside the r-gated add in the kernel.
    b0 = (lin_b @ w_ih_0 + params["b_ih_0"].astype(f32)
          + jnp.concatenate([params["b_hh_0"].astype(f32)[:2 * L], zeros_L]))
    gi0 = obs.reshape(T * B, Din) @ (lin_w @ w_ih_0) + b0          # (T*B, 3L)
    gi0 = gi0.reshape(T, B, 3 * L).astype(gi_dtype)                # lane-dense

    h0_f32 = h0.astype(f32)                                        # (B, H)

    # Recurrent weights stacked layer-major; n-gate recurrent biases separate.
    w_hh_all = jnp.stack([params[f"w_hh_{i}"] for i in range(num_layers)]
                         ).astype(compute_dtype)                   # (nl, L, 3L)
    b_hh_n = jnp.stack([params[f"b_hh_{i}"].astype(f32)[2 * L:]
                        for i in range(num_layers)]).reshape(num_layers, 1, L)

    extra_inputs, extra_specs = [], []
    if num_layers > 1:
        w_ih_rest = jnp.stack([params[f"w_ih_{i}"] for i in range(1, num_layers)]
                              ).astype(compute_dtype)              # (nl-1, L, 3L)
        b_ih_rest = jnp.stack([
            params[f"b_ih_{i}"].astype(f32)
            + jnp.concatenate([params[f"b_hh_{i}"].astype(f32)[:2 * L], zeros_L])
            for i in range(1, num_layers)]).reshape(num_layers - 1, 1, 3 * L)
        extra_inputs = [w_ih_rest, b_ih_rest]
        extra_specs = [
            _const_spec((num_layers - 1, L, 3 * L), single_buffer_weights),
            _const_spec((num_layers - 1, 1, 3 * L), single_buffer_weights),
        ]

    # ---- generation-aware VMEM budget (estimate actual footprint + headroom) ----
    if vmem_limit_bytes is None:
        wbuf = 1 if single_buffer_weights else 2
        est = 2 * (_padded_bytes((K, Bblk, 1), f32)
                   + _padded_bytes((K, Bblk, 3 * L), gi_dtype)
                   + _padded_bytes((K, Bblk, H), f32)
                   + _padded_bytes((Bblk, H), f32))
        est += wbuf * (_padded_bytes((num_layers, L, 3 * L), compute_dtype)
                       + _padded_bytes((num_layers, 1, L), f32))
        if num_layers > 1:
            est += wbuf * (_padded_bytes((num_layers - 1, L, 3 * L), compute_dtype)
                           + _padded_bytes((num_layers - 1, 1, 3 * L), f32))
        est += _padded_bytes((num_layers, Bblk, L), f32)           # scratch
        try:
            cap = int(pltpu.get_tpu_info().vmem_capacity_bytes)    # 64 MiB on v7x
        except Exception:                                          # noqa: BLE001
            cap = 64 * 1024 * 1024
        vmem_limit_bytes = int(min(max(2 * est + (8 << 20), 32 << 20),
                                   int(0.9 * cap)))

    kernel = _make_kernel(num_layers, K, Bblk, L, compute_dtype, unroll)

    grid = (B // Bblk, T // K)               # (parallel batch, sequential time)
    grid_spec = pltpu.PrefetchScalarGridSpec(
        num_scalar_prefetch=0,
        grid=grid,
        in_specs=[
            pl.BlockSpec((K, Bblk, 1), lambda b, c: (c, b, 0)),        # mask
            pl.BlockSpec((K, Bblk, 3 * L), lambda b, c: (c, b, 0)),    # gi0
            pl.BlockSpec((Bblk, H), lambda b, c: (b, 0)),              # h0
            _const_spec((num_layers, L, 3 * L), single_buffer_weights),   # w_hh
            _const_spec((num_layers, 1, L), single_buffer_weights),       # b_hh_n
        ] + extra_specs,
        out_specs=pl.BlockSpec((K, Bblk, H), lambda b, c: (c, b, 0)),
        scratch_shapes=[pltpu.VMEM((num_layers, Bblk, L), jnp.float32)],
    )

    states = pl.pallas_call(
        kernel,
        out_shape=jax.ShapeDtypeStruct((T, B, H), jnp.float32),
        grid_spec=grid_spec,
        compiler_params=pltpu.CompilerParams(
            dimension_semantics=("parallel", "arbitrary"),  # time stays sequential
            vmem_limit_bytes=vmem_limit_bytes,
        ),
    )(mask, gi0, h0_f32, w_hh_all, b_hh_n, *extra_inputs)

    return states                                                  # (T, B, H)


# ---------------------------------------------------------------------------
# Pure-JAX reference (matches the PyTorch closed-loop forward)
# ---------------------------------------------------------------------------
def reference_forward(obs, reset, h0, params, *, num_layers):
    H = h0.shape[1]
    L = H // num_layers
    obs = obs.astype(jnp.float32)
    mask = (~reset).astype(jnp.float32)[:, :, None]

    lin_w = params["lin_w"]
    lin_b = params["lin_b"]

    def step(h, inp):
        x, m = inp
        e = x @ lin_w + lin_b
        h = h * m
        xl = e
        outs = []
        for i in range(num_layers):
            w_ih = params[f"w_ih_{i}"]
            w_hh = params[f"w_hh_{i}"]
            b_ih = params[f"b_ih_{i}"]
            b_hh = params[f"b_hh_{i}"]
            h_i = h[:, i * L:(i + 1) * L]
            gi = xl @ w_ih + b_ih
            gh = h_i @ w_hh + b_hh
            i_r, i_z, i_n = gi[:, :L], gi[:, L:2 * L], gi[:, 2 * L:]
            h_r, h_z, h_n = gh[:, :L], gh[:, L:2 * L], gh[:, 2 * L:]
            r = jax.nn.sigmoid(i_r + h_r)
            z = jax.nn.sigmoid(i_z + h_z)
            n = jnp.tanh(i_n + r * h_n)
            h_new = (1.0 - z) * n + z * h_i
            outs.append(h_new)
            xl = h_new
        h_next = jnp.concatenate(outs, axis=-1)
        return h_next, h_next

    _, states = jax.lax.scan(step, h0, (obs, mask))
    return states


def init_params(key, input_dim, hidden_dim, num_layers):
    """Deterministic synthetic parameters (nn.Linear + GRUCellStack shapes)."""
    L = hidden_dim // num_layers
    keys = jax.random.split(key, 2 + 4 * num_layers)
    params = {
        "lin_w": 0.1 * jax.random.normal(keys[0], (input_dim, hidden_dim), jnp.float32),
        "lin_b": 0.1 * jax.random.normal(keys[1], (hidden_dim,), jnp.float32),
    }
    kidx = 2
    for i in range(num_layers):
        in_size = hidden_dim if i == 0 else L
        params[f"w_ih_{i}"] = 0.1 * jax.random.normal(keys[kidx], (in_size, 3 * L), jnp.float32)
        params[f"w_hh_{i}"] = 0.1 * jax.random.normal(keys[kidx + 1], (L, 3 * L), jnp.float32)
        params[f"b_ih_{i}"] = 0.1 * jax.random.normal(keys[kidx + 2], (3 * L,), jnp.float32)
        params[f"b_hh_{i}"] = 0.1 * jax.random.normal(keys[kidx + 3], (3 * L,), jnp.float32)
        kidx += 4
    return params


if __name__ == "__main__":
    T, B = 8, 2
    input_dim, hidden_dim, gru_layers = 24, 32, 2

    key = jax.random.PRNGKey(0)
    k_obs, k_reset, k_params = jax.random.split(key, 3)

    obs = jax.random.normal(k_obs, (T, B, input_dim), jnp.float32)
    reset = jax.random.bernoulli(k_reset, p=0.25, shape=(T, B))
    h0 = jnp.zeros((B, hidden_dim), jnp.float32)   # matches init_hidden(batch_size)

    params = init_params(k_params, input_dim, hidden_dim, gru_layers)

    ref = jax.block_until_ready(
        reference_forward(obs, reset, h0, params, num_layers=gru_layers))

    def run(compute_dtype):
        # Prefer single-buffered weight blocks; fall back to the default
        # (double-buffered) specs if this Pallas build rejects Buffered(1).
        last_err = None
        for sbw in (True, False):
            try:
                fwd = jax.jit(functools.partial(
                    recurrent_model_forward, num_layers=gru_layers,
                    time_chunk=4, compute_dtype=compute_dtype,
                    unroll=True, single_buffer_weights=sbw))
                return jax.block_until_ready(fwd(obs, reset, h0, params))
            except Exception as e:      # noqa: BLE001 - try fallback, then re-raise
                last_err = e
        raise last_err

    # f32 recurrent matmuls + f32 gi0 stream: strict check against the reference.
    out_f32 = run(jnp.float32)
    assert out_f32.shape == (T, B, hidden_dim)
    assert jnp.allclose(out_f32, ref, atol=1e-4, rtol=1e-4), "f32 mismatch vs reference"

    # bf16 matmul operands + bf16 gi0 stream (fast path); gates / hidden state f32.
    # NOTE: validate drift at production sequence lengths before relying on bf16.
    out_bf16 = run(jnp.bfloat16)
    assert float(jnp.max(jnp.abs(out_bf16 - ref))) < 5e-2, "bf16 mismatch vs reference"

    # TODO(synk): do_open_loop=True and the nn.GRU (gru_implementation=False)
    # branches are not kernelized; only the default closed-loop GRUCellStack path is.
    print("KERNEL_OK")
</pallas_src>

<mosaic_0001>
module attributes {stable_mosaic.version = 11 : i64} {
  func.func @kernel(%arg0: i32, %arg1: i32, %arg2: memref<4x2x1xf32, #tpu.memory_space<vmem>>, %arg3: memref<4x2x48xf32, #tpu.memory_space<vmem>>, %arg4: memref<2x32xf32, #tpu.memory_space<vmem>>, %arg5: memref<2x16x48xf32, #tpu.memory_space<vmem>>, %arg6: memref<2x1x16xf32, #tpu.memory_space<vmem>>, %arg7: memref<1x16x48xf32, #tpu.memory_space<vmem>>, %arg8: memref<1x1x48xf32, #tpu.memory_space<vmem>>, %arg9: memref<4x2x32xf32, #tpu.memory_space<vmem>>, %arg10: memref<2x2x16xf32, #tpu.memory_space<vmem>>) attributes {dimension_semantics = [#tpu.dimension_semantics<parallel>, #tpu.dimension_semantics<arbitrary>], iteration_bounds = array<i64: 1, 2>, scalar_prefetch = 0 : i64, scratch_operands = 1 : i64, tpu.core_type = #tpu.core_type<tc>, window_params = [{transform_indices = @transform_0, window_bounds = array<i64: 4, 2, 1>}, {transform_indices = @transform_1, window_bounds = array<i64: 4, 2, 48>}, {transform_indices = @transform_2, window_bounds = array<i64: 2, 32>}, {pipeline_mode = #tpu.pipeline_mode<synchronous>, transform_indices = @transform_3, window_bounds = array<i64: 2, 16, 48>}, {pipeline_mode = #tpu.pipeline_mode<synchronous>, transform_indices = @transform_4, window_bounds = array<i64: 2, 1, 16>}, {pipeline_mode = #tpu.pipeline_mode<synchronous>, transform_indices = @transform_5, window_bounds = array<i64: 1, 16, 48>}, {pipeline_mode = #tpu.pipeline_mode<synchronous>, transform_indices = @transform_6, window_bounds = array<i64: 1, 1, 48>}, {transform_indices = @transform_7, window_bounds = array<i64: 4, 2, 32>}]} {
    %c0_i32 = arith.constant 0 : i32
    %0 = arith.cmpi eq, %arg1, %c0_i32 : i32
    %1 = arith.extui %0 : i1 to i32
    %c0_i32_0 = arith.constant 0 : i32
    %2 = arith.cmpi ne, %1, %c0_i32_0 : i32
    scf.if %2 {
      %c0_96 = arith.constant 0 : index
      %c0_97 = arith.constant 0 : index
      %335 = vector.load %arg4[%c0_96, %c0_97] : memref<2x32xf32, #tpu.memory_space<vmem>>, vector<2x16xf32>
      %c0_98 = arith.constant 0 : index
      %c0_99 = arith.constant 0 : index
      %c0_100 = arith.constant 0 : index
      %336 = vector.load %arg10[%c0_98, %c0_99, %c0_100] : memref<2x2x16xf32, #tpu.memory_space<vmem>>, vector<1x2x16xf32>
      %337 = vector.shape_cast %336 : vector<1x2x16xf32> to vector<2x16xf32>
      %338 = vector.shape_cast %335 : vector<2x16xf32> to vector<1x2x16xf32>
      tpu.vector_store %arg10[%c0_98, %c0_99, %c0_100], %338 {strides = array<i32>} : memref<2x2x16xf32, #tpu.memory_space<vmem>>, vector<1x2x16xf32>,
      %c0_101 = arith.constant 0 : index
      %c16_102 = arith.constant 16 : index
      %339 = vector.load %arg4[%c0_101, %c16_102] : memref<2x32xf32, #tpu.memory_space<vmem>>, vector<2x16xf32>
      %c1_103 = arith.constant 1 : index
      %c0_104 = arith.constant 0 : index
      %c0_105 = arith.constant 0 : index
      %340 = vector.load %arg10[%c1_103, %c0_104, %c0_105] : memref<2x2x16xf32, #tpu.memory_space<vmem>>, vector<1x2x16xf32>
      %341 = vector.shape_cast %340 : vector<1x2x16xf32> to vector<2x16xf32>
      %342 = vector.shape_cast %339 : vector<2x16xf32> to vector<1x2x16xf32>
      tpu.vector_store %arg10[%c1_103, %c0_104, %c0_105], %342 {strides = array<i32>} : memref<2x2x16xf32, #tpu.memory_space<vmem>>, vector<1x2x16xf32>,
    } else {
    }
    %c0 = arith.constant 0 : index
    %c0_1 = arith.constant 0 : index
    %c0_2 = arith.constant 0 : index
    %3 = vector.load %arg5[%c0, %c0_1, %c0_2] : memref<2x16x48xf32, #tpu.memory_space<vmem>>, vector<1x16x48xf32>
    %4 = vector.shape_cast %3 : vector<1x16x48xf32> to vector<16x48xf32>
    %c1 = arith.constant 1 : index
    %c0_3 = arith.constant 0 : index
    %c0_4 = arith.constant 0 : index
    %5 = vector.load %arg5[%c1, %c0_3, %c0_4] : memref<2x16x48xf32, #tpu.memory_space<vmem>>, vector<1x16x48xf32>
    %6 = vector.shape_cast %5 : vector<1x16x48xf32> to vector<16x48xf32>
    %c0_5 = arith.constant 0 : index
    %c0_6 = arith.constant 0 : index
    %c0_7 = arith.constant 0 : index
    %7 = vector.load %arg6[%c0_5, %c0_6, %c0_7] : memref<2x1x16xf32, #tpu.memory_space<vmem>>, vector<1x1x16xf32>
    %8 = vector.shape_cast %7 : vector<1x1x16xf32> to vector<1x16xf32>
    %9 = vector.shape_cast %8 : vector<1x16xf32> to vector<1x16xf32>
    %10 = vector.broadcast %9 : vector<1x16xf32> to vector<2x16xf32>
    %c1_8 = arith.constant 1 : index
    %c0_9 = arith.constant 0 : index
    %c0_10 = arith.constant 0 : index
    %11 = vector.load %arg6[%c1_8, %c0_9, %c0_10] : memref<2x1x16xf32, #tpu.memory_space<vmem>>, vector<1x1x16xf32>
    %12 = vector.shape_cast %11 : vector<1x1x16xf32> to vector<1x16xf32>
    %13 = vector.shape_cast %12 : vector<1x16xf32> to vector<1x16xf32>
    %14 = vector.broadcast %13 : vector<1x16xf32> to vector<2x16xf32>
    %c0_11 = arith.constant 0 : index
    %c0_12 = arith.constant 0 : index
    %c0_13 = arith.constant 0 : index
    %15 = vector.load %arg7[%c0_11, %c0_12, %c0_13] : memref<1x16x48xf32, #tpu.memory_space<vmem>>, vector<1x16x48xf32>
    %16 = vector.shape_cast %15 : vector<1x16x48xf32> to vector<16x48xf32>
    %c0_14 = arith.constant 0 : index
    %c0_15 = arith.constant 0 : index
    %c0_16 = arith.constant 0 : index
    %17 = vector.load %arg8[%c0_14, %c0_15, %c0_16] : memref<1x1x48xf32, #tpu.memory_space<vmem>>, vector<1x1x48xf32>
    %18 = vector.shape_cast %17 : vector<1x1x48xf32> to vector<1x48xf32>
    %19 = vector.shape_cast %18 : vector<1x48xf32> to vector<1x48xf32>
    %20 = vector.broadcast %19 : vector<1x48xf32> to vector<2x48xf32>
    %c0_17 = arith.constant 0 : index
    %c0_18 = arith.constant 0 : index
    %c0_19 = arith.constant 0 : index
    %21 = vector.load %arg10[%c0_17, %c0_18, %c0_19] : memref<2x2x16xf32, #tpu.memory_space<vmem>>, vector<1x2x16xf32>
    %22 = vector.shape_cast %21 : vector<1x2x16xf32> to vector<2x16xf32>
    %c1_20 = arith.constant 1 : index
    %c0_21 = arith.constant 0 : index
    %c0_22 = arith.constant 0 : index
    %23 = vector.load %arg10[%c1_20, %c0_21, %c0_22] : memref<2x2x16xf32, #tpu.memory_space<vmem>>, vector<1x2x16xf32>
    %24 = vector.shape_cast %23 : vector<1x2x16xf32> to vector<2x16xf32>
    %c0_i32_23 = arith.constant 0 : i32
    %25 = arith.index_cast %c0_i32_23 : i32 to index
    %c0_24 = arith.constant 0 : index
    %c0_25 = arith.constant 0 : index
    %26 = vector.load %arg2[%25, %c0_24, %c0_25] : memref<4x2x1xf32, #tpu.memory_space<vmem>>, vector<1x2x1xf32>
    %27 = vector.shape_cast %26 : vector<1x2x1xf32> to vector<2x1xf32>
    %28 = vector.shape_cast %27 : vector<2x1xf32> to vector<2x1xf32>
    %29 = vector.broadcast %28 : vector<2x1xf32> to vector<2x16xf32>
    %30 = arith.index_cast %c0_i32_23 : i32 to index
    %c0_26 = arith.constant 0 : index
    %c0_27 = arith.constant 0 : index
    %31 = vector.load %arg3[%30, %c0_26, %c0_27] : memref<4x2x48xf32, #tpu.memory_space<vmem>>, vector<1x2x48xf32>
    %32 = vector.shape_cast %31 : vector<1x2x48xf32> to vector<2x48xf32>
    %33 = arith.mulf %22, %29 : vector<2x16xf32>
    %cst = arith.constant dense<0.000000e+00> : vector<2x48xf32>
    %34 = tpu.matmul %33, %4, %cst {dimension_numbers = #tpu.dot_dimension_numbers<[1], [0], [0], [1], [0, 0, 1, 1], [], []>} : vector<2x16xf32>, vector<16x48xf32>, vector<2x48xf32> -> vector<2x48xf32>
    %35 = vector.extract_strided_slice %32 {offsets = [0, 0], sizes = [2, 16], strides = [1, 1]} : vector<2x48xf32> to vector<2x16xf32>
    %36 = vector.extract_strided_slice %34 {offsets = [0, 0], sizes = [2, 16], strides = [1, 1]} : vector<2x48xf32> to vector<2x16xf32>
    %37 = arith.addf %35, %36 : vector<2x16xf32>
    %38 = arith.negf %37 : vector<2x16xf32>
    %39 = math.exp %38 : vector<2x16xf32>
    %cst_28 = arith.constant 1.000000e+00 : f32
    %40 = vector.broadcast %cst_28 : f32 to vector<2x16xf32>
    %41 = arith.addf %40, %39 : vector<2x16xf32>
    %42 = arith.divf %40, %41 : vector<2x16xf32>
    %43 = vector.extract_strided_slice %32 {offsets = [0, 16], sizes = [2, 16], strides = [1, 1]} : vector<2x48xf32> to vector<2x16xf32>
    %44 = vector.extract_strided_slice %34 {offsets = [0, 16], sizes = [2, 16], strides = [1, 1]} : vector<2x48xf32> to vector<2x16xf32>
    %45 = arith.addf %43, %44 : vector<2x16xf32>
    %46 = arith.negf %45 : vector<2x16xf32>
    %47 = math.exp %46 : vector<2x16xf32>
    %cst_29 = arith.constant 1.000000e+00 : f32
    %48 = vector.broadcast %cst_29 : f32 to vector<2x16xf32>
    %49 = arith.addf %48, %47 : vector<2x16xf32>
    %50 = arith.divf %48, %49 : vector<2x16xf32>
    %51 = vector.extract_strided_slice %32 {offsets = [0, 32], sizes = [2, 16], strides = [1, 1]} : vector<2x48xf32> to vector<2x16xf32>
    %52 = vector.extract_strided_slice %34 {offsets = [0, 32], sizes = [2, 16], strides = [1, 1]} : vector<2x48xf32> to vector<2x16xf32>
    %53 = arith.addf %52, %10 : vector<2x16xf32>
    %54 = arith.mulf %42, %53 : vector<2x16xf32>
    %55 = arith.addf %51, %54 : vector<2x16xf32>
    %56 = math.tanh %55 : vector<2x16xf32>
    %cst_30 = arith.constant 1.000000e+00 : f32
    %57 = vector.broadcast %cst_30 : f32 to vector<2x16xf32>
    %58 = arith.subf %57, %50 : vector<2x16xf32>
    %59 = arith.mulf %58, %56 : vector<2x16xf32>
    %60 = arith.mulf %50, %33 : vector<2x16xf32>
    %61 = arith.addf %59, %60 : vector<2x16xf32>
    %62 = arith.index_cast %c0_i32_23 : i32 to index
    %c0_31 = arith.constant 0 : index
    %c0_32 = arith.constant 0 : index
    %63 = vector.load %arg9[%62, %c0_31, %c0_32] : memref<4x2x32xf32, #tpu.memory_space<vmem>>, vector<1x2x16xf32>
    %64 = vector.shape_cast %63 : vector<1x2x16xf32> to vector<2x16xf32>
    %65 = vector.shape_cast %61 : vector<2x16xf32> to vector<1x2x16xf32>
    tpu.vector_store %arg9[%62, %c0_31, %c0_32], %65 {strides = array<i32>} : memref<4x2x32xf32, #tpu.memory_space<vmem>>, vector<1x2x16xf32>,
    %66 = arith.mulf %24, %29 : vector<2x16xf32>
    %cst_33 = arith.constant dense<0.000000e+00> : vector<2x48xf32>
    %67 = tpu.matmul %61, %16, %cst_33 {dimension_numbers = #tpu.dot_dimension_numbers<[1], [0], [0], [1], [0, 0, 1, 1], [], []>} : vector<2x16xf32>, vector<16x48xf32>, vector<2x48xf32> -> vector<2x48xf32>
    %68 = arith.addf %67, %20 : vector<2x48xf32>
    %cst_34 = arith.constant dense<0.000000e+00> : vector<2x48xf32>
    %69 = tpu.matmul %66, %6, %cst_34 {dimension_numbers = #tpu.dot_dimension_numbers<[1], [0], [0], [1], [0, 0, 1, 1], [], []>} : vector<2x16xf32>, vector<16x48xf32>, vector<2x48xf32> -> vector<2x48xf32>
    %70 = vector.extract_strided_slice %68 {offsets = [0, 0], sizes = [2, 16], strides = [1, 1]} : vector<2x48xf32> to vector<2x16xf32>
    %71 = vector.extract_strided_slice %69 {offsets = [0, 0], sizes = [2, 16], strides = [1, 1]} : vector<2x48xf32> to vector<2x16xf32>
    %72 = arith.addf %70, %71 : vector<2x16xf32>
    %73 = arith.negf %72 : vector<2x16xf32>
    %74 = math.exp %73 : vector<2x16xf32>
    %cst_35 = arith.constant 1.000000e+00 : f32
    %75 = vector.broadcast %cst_35 : f32 to vector<2x16xf32>
    %76 = arith.addf %75, %74 : vector<2x16xf32>
    %77 = arith.divf %75, %76 : vector<2x16xf32>
    %78 = vector.extract_strided_slice %68 {offsets = [0, 16], sizes = [2, 16], strides = [1, 1]} : vector<2x48xf32> to vector<2x16xf32>
    %79 = vector.extract_strided_slice %69 {offsets = [0, 16], sizes = [2, 16], strides = [1, 1]} : vector<2x48xf32> to vector<2x16xf32>
    %80 = arith.addf %78, %79 : vector<2x16xf32>
    %81 = arith.negf %80 : vector<2x16xf32>
    %82 = math.exp %81 : vector<2x16xf32>
    %cst_36 = arith.constant 1.000000e+00 : f32
    %83 = vector.broadcast %cst_36 : f32 to vector<2x16xf32>
    %84 = arith.addf %83, %82 : vector<2x16xf32>
    %85 = arith.divf %83, %84 : vector<2x16xf32>
    %86 = vector.extract_strided_slice %68 {offsets = [0, 32], sizes = [2, 16], strides = [1, 1]} : vector<2x48xf32> to vector<2x16xf32>
    %87 = vector.extract_strided_slice %69 {offsets = [0, 32], sizes = [2, 16], strides = [1, 1]} : vector<2x48xf32> to vector<2x16xf32>
    %88 = arith.addf %87, %14 : vector<2x16xf32>
    %89 = arith.mulf %77, %88 : vector<2x16xf32>
    %90 = arith.addf %86, %89 : vector<2x16xf32>
    %91 = math.tanh %90 : vector<2x16xf32>
    %cst_37 = arith.constant 1.000000e+00 : f32
    %92 = vector.broadcast %cst_37 : f32 to vector<2x16xf32>
    %93 = arith.subf %92, %85 : vector<2x16xf32>
    %94 = arith.mulf %93, %91 : vector<2x16xf32>
    %95 = arith.mulf %85, %66 : vector<2x16xf32>
    %96 = arith.addf %94, %95 : vector<2x16xf32>
    %97 = arith.index_cast %c0_i32_23 : i32 to index
    %c0_38 = arith.constant 0 : index
    %c16 = arith.constant 16 : index
    %98 = vector.load %arg9[%97, %c0_38, %c16] : memref<4x2x32xf32, #tpu.memory_space<vmem>>, vector<1x2x16xf32>
    %99 = vector.shape_cast %98 : vector<1x2x16xf32> to vector<2x16xf32>
    %100 = vector.shape_cast %96 : vector<2x16xf32> to vector<1x2x16xf32>
    tpu.vector_store %arg9[%97, %c0_38, %c16], %100 {strides = array<i32>} : memref<4x2x32xf32, #tpu.memory_space<vmem>>, vector<1x2x16xf32>,
    %c1_i32 = arith.constant 1 : i32
    %101 = arith.index_cast %c1_i32 : i32 to index
    %c0_39 = arith.constant 0 : index
    %c0_40 = arith.constant 0 : index
    %102 = vector.load %arg2[%101, %c0_39, %c0_40] : memref<4x2x1xf32, #tpu.memory_space<vmem>>, vector<1x2x1xf32>
    %103 = vector.shape_cast %102 : vector<1x2x1xf32> to vector<2x1xf32>
    %104 = vector.shape_cast %103 : vector<2x1xf32> to vector<2x1xf32>
    %105 = vector.broadcast %104 : vector<2x1xf32> to vector<2x16xf32>
    %106 = arith.index_cast %c1_i32 : i32 to index
    %c0_41 = arith.constant 0 : index
    %c0_42 = arith.constant 0 : index
    %107 = vector.load %arg3[%106, %c0_41, %c0_42] : memref<4x2x48xf32, #tpu.memory_space<vmem>>, vector<1x2x48xf32>
    %108 = vector.shape_cast %107 : vector<1x2x48xf32> to vector<2x48xf32>
    %109 = arith.mulf %61, %105 : vector<2x16xf32>
    %cst_43 = arith.constant dense<0.000000e+00> : vector<2x48xf32>
    %110 = tpu.matmul %109, %4, %cst_43 {dimension_numbers = #tpu.dot_dimension_numbers<[1], [0], [0], [1], [0, 0, 1, 1], [], []>} : vector<2x16xf32>, vector<16x48xf32>, vector<2x48xf32> -> vector<2x48xf32>
    %111 = vector.extract_strided_slice %108 {offsets = [0, 0], sizes = [2, 16], strides = [1, 1]} : vector<2x48xf32> to vector<2x16xf32>
    %112 = vector.extract_strided_slice %110 {offsets = [0, 0], sizes = [2, 16], strides = [1, 1]} : vector<2x48xf32> to vector<2x16xf32>
    %113 = arith.addf %111, %112 : vector<2x16xf32>
    %114 = arith.negf %113 : vector<2x16xf32>
    %115 = math.exp %114 : vector<2x16xf32>
    %cst_44 = arith.constant 1.000000e+00 : f32
    %116 = vector.broadcast %cst_44 : f32 to vector<2x16xf32>
    %117 = arith.addf %116, %115 : vector<2x16xf32>
    %118 = arith.divf %116, %117 : vector<2x16xf32>
    %119 = vector.extract_strided_slice %108 {offsets = [0, 16], sizes = [2, 16], strides = [1, 1]} : vector<2x48xf32> to vector<2x16xf32>
    %120 = vector.extract_strided_slice %110 {offsets = [0, 16], sizes = [2, 16], strides = [1, 1]} : vector<2x48xf32> to vector<2x16xf32>
    %121 = arith.addf %119, %120 : vector<2x16xf32>
    %122 = arith.negf %121 : vector<2x16xf32>
    %123 = math.exp %122 : vector<2x16xf32>
    %cst_45 = arith.constant 1.000000e+00 : f32
    %124 = vector.broadcast %cst_45 : f32 to vector<2x16xf32>
    %125 = arith.addf %124, %123 : vector<2x16xf32>
    %126 = arith.divf %124, %125 : vector<2x16xf32>
    %127 = vector.extract_strided_slice %108 {offsets = [0, 32], sizes = [2, 16], strides = [1, 1]} : vector<2x48xf32> to vector<2x16xf32>
    %128 = vector.extract_strided_slice %110 {offsets = [0, 32], sizes = [2, 16], strides = [1, 1]} : vector<2x48xf32> to vector<2x16xf32>
    %129 = arith.addf %128, %10 : vector<2x16xf32>
    %130 = arith.mulf %118, %129 : vector<2x16xf32>
    %131 = arith.addf %127, %130 : vector<2x16xf32>
    %132 = math.tanh %131 : vector<2x16xf32>
    %cst_46 = arith.constant 1.000000e+00 : f32
    %133 = vector.broadcast %cst_46 : f32 to vector<2x16xf32>
    %134 = arith.subf %133, %126 : vector<2x16xf32>
    %135 = arith.mulf %134, %132 : vector<2x16xf32>
    %136 = arith.mulf %126, %109 : vector<2x16xf32>
    %137 = arith.addf %135, %136 : vector<2x16xf32>
    %138 = arith.index_cast %c1_i32 : i32 to index
    %c0_47 = arith.constant 0 : index
    %c0_48 = arith.constant 0 : index
    %139 = vector.load %arg9[%138, %c0_47, %c0_48] : memref<4x2x32xf32, #tpu.memory_space<vmem>>, vector<1x2x16xf32>
    %140 = vector.shape_cast %139 : vector<1x2x16xf32> to vector<2x16xf32>
    %141 = vector.shape_cast %137 : vector<2x16xf32> to vector<1x2x16xf32>
    tpu.vector_store %arg9[%138, %c0_47, %c0_48], %141 {strides = array<i32>} : memref<4x2x32xf32, #tpu.memory_space<vmem>>, vector<1x2x16xf32>,
    %142 = arith.mulf %96, %105 : vector<2x16xf32>
    %cst_49 = arith.constant dense<0.000000e+00> : vector<2x48xf32>
    %143 = tpu.matmul %137, %16, %cst_49 {dimension_numbers = #tpu.dot_dimension_numbers<[1], [0], [0], [1], [0, 0, 1, 1], [], []>} : vector<2x16xf32>, vector<16x48xf32>, vector<2x48xf32> -> vector<2x48xf32>
    %144 = arith.addf %143, %20 : vector<2x48xf32>
    %cst_50 = arith.constant dense<0.000000e+00> : vector<2x48xf32>
    %145 = tpu.matmul %142, %6, %cst_50 {dimension_numbers = #tpu.dot_dimension_numbers<[1], [0], [0], [1], [0, 0, 1, 1], [], []>} : vector<2x16xf32>, vector<16x48xf32>, vector<2x48xf32> -> vector<2x48xf32>
    %146 = vector.extract_strided_slice %144 {offsets = [0, 0], sizes = [2, 16], strides = [1, 1]} : vector<2x48xf32> to vector<2x16xf32>
    %147 = vector.extract_strided_slice %145 {offsets = [0, 0], sizes = [2, 16], strides = [1, 1]} : vector<2x48xf32> to vector<2x16xf32>
    %148 = arith.addf %146, %147 : vector<2x16xf32>
    %149 = arith.negf %148 : vector<2x16xf32>
    %150 = math.exp %149 : vector<2x16xf32>
    %cst_51 = arith.constant 1.000000e+00 : f32
    %151 = vector.broadcast %cst_51 : f32 to vector<2x16xf32>
    %152 = arith.addf %151, %150 : vector<2x16xf32>
    %153 = arith.divf %151, %152 : vector<2x16xf32>
    %154 = vector.extract_strided_slice %144 {offsets = [0, 16], sizes = [2, 16], strides = [1, 1]} : vector<2x48xf32> to vector<2x16xf32>
    %155 = vector.extract_strided_slice %145 {offsets = [0, 16], sizes = [2, 16], strides = [1, 1]} : vector<2x48xf32> to vector<2x16xf32>
    %156 = arith.addf %154, %155 : vector<2x16xf32>
    %157 = arith.negf %156 : vector<2x16xf32>
    %158 = math.exp %157 : vector<2x16xf32>
    %cst_52 = arith.constant 1.000000e+00 : f32
    %159 = vector.broadcast %cst_52 : f32 to vector<2x16xf32>
    %160 = arith.addf %159, %158 : vector<2x16xf32>
    %161 = arith.divf %159, %160 : vector<2x16xf32>
    %162 = vector.extract_strided_slice %144 {offsets = [0, 32], sizes = [2, 16], strides = [1, 1]} : vector<2x48xf32> to vector<2x16xf32>
    %163 = vector.extract_strided_slice %145 {offsets = [0, 32], sizes = [2, 16], strides = [1, 1]} : vector<2x48xf32> to vector<2x16xf32>
    %164 = arith.addf %163, %14 : vector<2x16xf32>
    %165 = arith.mulf %153, %164 : vector<2x16xf32>
    %166 = arith.addf %162, %165 : vector<2x16xf32>
    %167 = math.tanh %166 : vector<2x16xf32>
    %cst_53 = arith.constant 1.000000e+00 : f32
    %168 = vector.broadcast %cst_53 : f32 to vector<2x16xf32>
    %169 = arith.subf %168, %161 : vector<2x16xf32>
    %170 = arith.mulf %169, %167 : vector<2x16xf32>
    %171 = arith.mulf %161, %142 : vector<2x16xf32>
    %172 = arith.addf %170, %171 : vector<2x16xf32>
    %173 = arith.index_cast %c1_i32 : i32 to index
    %c0_54 = arith.constant 0 : index
    %c16_55 = arith.constant 16 : index
    %174 = vector.load %arg9[%173, %c0_54, %c16_55] : memref<4x2x32xf32, #tpu.memory_space<vmem>>, vector<1x2x16xf32>
    %175 = vector.shape_cast %174 : vector<1x2x16xf32> to vector<2x16xf32>
    %176 = vector.shape_cast %172 : vector<2x16xf32> to vector<1x2x16xf32>
    tpu.vector_store %arg9[%173, %c0_54, %c16_55], %176 {strides = array<i32>} : memref<4x2x32xf32, #tpu.memory_space<vmem>>, vector<1x2x16xf32>,
    %c2_i32 = arith.constant 2 : i32
    %177 = arith.index_cast %c2_i32 : i32 to index
    %c0_56 = arith.constant 0 : index
    %c0_57 = arith.constant 0 : index
    %178 = vector.load %arg2[%177, %c0_56, %c0_57] : memref<4x2x1xf32, #tpu.memory_space<vmem>>, vector<1x2x1xf32>
    %179 = vector.shape_cast %178 : vector<1x2x1xf32> to vector<2x1xf32>
    %180 = vector.shape_cast %179 : vector<2x1xf32> to vector<2x1xf32>
    %181 = vector.broadcast %180 : vector<2x1xf32> to vector<2x16xf32>
    %182 = arith.index_cast %c2_i32 : i32 to index
    %c0_58 = arith.constant 0 : index
    %c0_59 = arith.constant 0 : index
    %183 = vector.load %arg3[%182, %c0_58, %c0_59] : memref<4x2x48xf32, #tpu.memory_space<vmem>>, vector<1x2x48xf32>
    %184 = vector.shape_cast %183 : vector<1x2x48xf32> to vector<2x48xf32>
    %185 = arith.mulf %137, %181 : vector<2x16xf32>
    %cst_60 = arith.constant dense<0.000000e+00> : vector<2x48xf32>
    %186 = tpu.matmul %185, %4, %cst_60 {dimension_numbers = #tpu.dot_dimension_numbers<[1], [0], [0], [1], [0, 0, 1, 1], [], []>} : vector<2x16xf32>, vector<16x48xf32>, vector<2x48xf32> -> vector<2x48xf32>
    %187 = vector.extract_strided_slice %184 {offsets = [0, 0], sizes = [2, 16], strides = [1, 1]} : vector<2x48xf32> to vector<2x16xf32>
    %188 = vector.extract_strided_slice %186 {offsets = [0, 0], sizes = [2, 16], strides = [1, 1]} : vector<2x48xf32> to vector<2x16xf32>
    %189 = arith.addf %187, %188 : vector<2x16xf32>
    %190 = arith.negf %189 : vector<2x16xf32>
    %191 = math.exp %190 : vector<2x16xf32>
    %cst_61 = arith.constant 1.000000e+00 : f32
    %192 = vector.broadcast %cst_61 : f32 to vector<2x16xf32>
    %193 = arith.addf %192, %191 : vector<2x16xf32>
    %194 = arith.divf %192, %193 : vector<2x16xf32>
    %195 = vector.extract_strided_slice %184 {offsets = [0, 16], sizes = [2, 16], strides = [1, 1]} : vector<2x48xf32> to vector<2x16xf32>
    %196 = vector.extract_strided_slice %186 {offsets = [0, 16], sizes = [2, 16], strides = [1, 1]} : vector<2x48xf32> to vector<2x16xf32>
    %197 = arith.addf %195, %196 : vector<2x16xf32>
    %198 = arith.negf %197 : vector<2x16xf32>
    %199 = math.exp %198 : vector<2x16xf32>
    %cst_62 = arith.constant 1.000000e+00 : f32
    %200 = vector.broadcast %cst_62 : f32 to vector<2x16xf32>
    %201 = arith.addf %200, %199 : vector<2x16xf32>
    %202 = arith.divf %200, %201 : vector<2x16xf32>
    %203 = vector.extract_strided_slice %184 {offsets = [0, 32], sizes = [2, 16], strides = [1, 1]} : vector<2x48xf32> to vector<2x16xf32>
    %204 = vector.extract_strided_slice %186 {offsets = [0, 32], sizes = [2, 16], strides = [1, 1]} : vector<2x48xf32> to vector<2x16xf32>
    %205 = arith.addf %204, %10 : vector<2x16xf32>
    %206 = arith.mulf %194, %205 : vector<2x16xf32>
    %207 = arith.addf %203, %206 : vector<2x16xf32>
    %208 = math.tanh %207 : vector<2x16xf32>
    %cst_63 = arith.constant 1.000000e+00 : f32
    %209 = vector.broadcast %cst_63 : f32 to vector<2x16xf32>
    %210 = arith.subf %209, %202 : vector<2x16xf32>
    %211 = arith.mulf %210, %208 : vector<2x16xf32>
    %212 = arith.mulf %202, %185 : vector<2x16xf32>
    %213 = arith.addf %211, %212 : vector<2x16xf32>
    %214 = arith.index_cast %c2_i32 : i32 to index
    %c0_64 = arith.constant 0 : index
    %c0_65 = arith.constant 0 : index
    %215 = vector.load %arg9[%214, %c0_64, %c0_65] : memref<4x2x32xf32, #tpu.memory_space<vmem>>, vector<1x2x16xf32>
    %216 = vector.shape_cast %215 : vector<1x2x16xf32> to vector<2x16xf32>
    %217 = vector.shape_cast %213 : vector<2x16xf32> to vector<1x2x16xf32>
    tpu.vector_store %arg9[%214, %c0_64, %c0_65], %217 {strides = array<i32>} : memref<4x2x32xf32, #tpu.memory_space<vmem>>, vector<1x2x16xf32>,
    %218 = arith.mulf %172, %181 : vector<2x16xf32>
    %cst_66 = arith.constant dense<0.000000e+00> : vector<2x48xf32>
    %219 = tpu.matmul %213, %16, %cst_66 {dimension_numbers = #tpu.dot_dimension_numbers<[1], [0], [0], [1], [0, 0, 1, 1], [], []>} : vector<2x16xf32>, vector<16x48xf32>, vector<2x48xf32> -> vector<2x48xf32>
    %220 = arith.addf %219, %20 : vector<2x48xf32>
    %cst_67 = arith.constant dense<0.000000e+00> : vector<2x48xf32>
    %221 = tpu.matmul %218, %6, %cst_67 {dimension_numbers = #tpu.dot_dimension_numbers<[1], [0], [0], [1], [0, 0, 1, 1], [], []>} : vector<2x16xf32>, vector<16x48xf32>, vector<2x48xf32> -> vector<2x48xf32>
    %222 = vector.extract_strided_slice %220 {offsets = [0, 0], sizes = [2, 16], strides = [1, 1]} : vector<2x48xf32> to vector<2x16xf32>
    %223 = vector.extract_strided_slice %221 {offsets = [0, 0], sizes = [2, 16], strides = [1, 1]} : vector<2x48xf32> to vector<2x16xf32>
    %224 = arith.addf %222, %223 : vector<2x16xf32>
    %225 = arith.negf %224 : vector<2x16xf32>
    %226 = math.exp %225 : vector<2x16xf32>
    %cst_68 = arith.constant 1.000000e+00 : f32
    %227 = vector.broadcast %cst_68 : f32 to vector<2x16xf32>
    %228 = arith.addf %227, %226 : vector<2x16xf32>
    %229 = arith.divf %227, %228 : vector<2x16xf32>
    %230 = vector.extract_strided_slice %220 {offsets = [0, 16], sizes = [2, 16], strides = [1, 1]} : vector<2x48xf32> to vector<2x16xf32>
    %231 = vector.extract_strided_slice %221 {offsets = [0, 16], sizes = [2, 16], strides = [1, 1]} : vector<2x48xf32> to vector<2x16xf32>
    %232 = arith.addf %230, %231 : vector<2x16xf32>
    %233 = arith.negf %232 : vector<2x16xf32>
    %234 = math.exp %233 : vector<2x16xf32>
    %cst_69 = arith.constant 1.000000e+00 : f32
    %235 = vector.broadcast %cst_69 : f32 to vector<2x16xf32>
    %236 = arith.addf %235, %234 : vector<2x16xf32>
    %237 = arith.divf %235, %236 : vector<2x16xf32>
    %238 = vector.extract_strided_slice %220 {offsets = [0, 32], sizes = [2, 16], strides = [1, 1]} : vector<2x48xf32> to vector<2x16xf32>
    %239 = vector.extract_strided_slice %221 {offsets = [0, 32], sizes = [2, 16], strides = [1, 1]} : vector<2x48xf32> to vector<2x16xf32>
    %240 = arith.addf %239, %14 : vector<2x16xf32>
    %241 = arith.mulf %229, %240 : vector<2x16xf32>
    %242 = arith.addf %238, %241 : vector<2x16xf32>
    %243 = math.tanh %242 : vector<2x16xf32>
    %cst_70 = arith.constant 1.000000e+00 : f32
    %244 = vector.broadcast %cst_70 : f32 to vector<2x16xf32>
    %245 = arith.subf %244, %237 : vector<2x16xf32>
    %246 = arith.mulf %245, %243 : vector<2x16xf32>
    %247 = arith.mulf %237, %218 : vector<2x16xf32>
    %248 = arith.addf %246, %247 : vector<2x16xf32>
    %249 = arith.index_cast %c2_i32 : i32 to index
    %c0_71 = arith.constant 0 : index
    %c16_72 = arith.constant 16 : index
    %250 = vector.load %arg9[%249, %c0_71, %c16_72] : memref<4x2x32xf32, #tpu.memory_space<vmem>>, vector<1x2x16xf32>
    %251 = vector.shape_cast %250 : vector<1x2x16xf32> to vector<2x16xf32>
    %252 = vector.shape_cast %248 : vector<2x16xf32> to vector<1x2x16xf32>
    tpu.vector_store %arg9[%249, %c0_71, %c16_72], %252 {strides = array<i32>} : memref<4x2x32xf32, #tpu.memory_space<vmem>>, vector<1x2x16xf32>,
    %c3_i32 = arith.constant 3 : i32
    %253 = arith.index_cast %c3_i32 : i32 to index
    %c0_73 = arith.constant 0 : index
    %c0_74 = arith.constant 0 : index
    %254 = vector.load %arg2[%253, %c0_73, %c0_74] : memref<4x2x1xf32, #tpu.memory_space<vmem>>, vector<1x2x1xf32>
    %255 = vector.shape_cast %254 : vector<1x2x1xf32> to vector<2x1xf32>
    %256 = vector.shape_cast %255 : vector<2x1xf32> to vector<2x1xf32>
    %257 = vector.broadcast %256 : vector<2x1xf32> to vector<2x16xf32>
    %258 = arith.index_cast %c3_i32 : i32 to index
    %c0_75 = arith.constant 0 : index
    %c0_76 = arith.constant 0 : index
    %259 = vector.load %arg3[%258, %c0_75, %c0_76] : memref<4x2x48xf32, #tpu.memory_space<vmem>>, vector<1x2x48xf32>
    %260 = vector.shape_cast %259 : vector<1x2x48xf32> to vector<2x48xf32>
    %261 = arith.mulf %213, %257 : vector<2x16xf32>
    %cst_77 = arith.constant dense<0.000000e+00> : vector<2x48xf32>
    %262 = tpu.matmul %261, %4, %cst_77 {dimension_numbers = #tpu.dot_dimension_numbers<[1], [0], [0], [1], [0, 0, 1, 1], [], []>} : vector<2x16xf32>, vector<16x48xf32>, vector<2x48xf32> -> vector<2x48xf32>
    %263 = vector.extract_strided_slice %260 {offsets = [0, 0], sizes = [2, 16], strides = [1, 1]} : vector<2x48xf32> to vector<2x16xf32>
    %264 = vector.extract_strided_slice %262 {offsets = [0, 0], sizes = [2, 16], strides = [1, 1]} : vector<2x48xf32> to vector<2x16xf32>
    %265 = arith.addf %263, %264 : vector<2x16xf32>
    %266 = arith.negf %265 : vector<2x16xf32>
    %267 = math.exp %266 : vector<2x16xf32>
    %cst_78 = arith.constant 1.000000e+00 : f32
    %268 = vector.broadcast %cst_78 : f32 to vector<2x16xf32>
    %269 = arith.addf %268, %267 : vector<2x16xf32>
    %270 = arith.divf %268, %269 : vector<2x16xf32>
    %271 = vector.extract_strided_slice %260 {offsets = [0, 16], sizes = [2, 16], strides = [1, 1]} : vector<2x48xf32> to vector<2x16xf32>
    %272 = vector.extract_strided_slice %262 {offsets = [0, 16], sizes = [2, 16], strides = [1, 1]} : vector<2x48xf32> to vector<2x16xf32>
    %273 = arith.addf %271, %272 : vector<2x16xf32>
    %274 = arith.negf %273 : vector<2x16xf32>
    %275 = math.exp %274 : vector<2x16xf32>
    %cst_79 = arith.constant 1.000000e+00 : f32
    %276 = vector.broadcast %cst_79 : f32 to vector<2x16xf32>
    %277 = arith.addf %276, %275 : vector<2x16xf32>
    %278 = arith.divf %276, %277 : vector<2x16xf32>
    %279 = vector.extract_strided_slice %260 {offsets = [0, 32], sizes = [2, 16], strides = [1, 1]} : vector<2x48xf32> to vector<2x16xf32>
    %280 = vector.extract_strided_slice %262 {offsets = [0, 32], sizes = [2, 16], strides = [1, 1]} : vector<2x48xf32> to vector<2x16xf32>
    %281 = arith.addf %280, %10 : vector<2x16xf32>
    %282 = arith.mulf %270, %281 : vector<2x16xf32>
    %283 = arith.addf %279, %282 : vector<2x16xf32>
    %284 = math.tanh %283 : vector<2x16xf32>
    %cst_80 = arith.constant 1.000000e+00 : f32
    %285 = vector.broadcast %cst_80 : f32 to vector<2x16xf32>
    %286 = arith.subf %285, %278 : vector<2x16xf32>
    %287 = arith.mulf %286, %284 : vector<2x16xf32>
    %288 = arith.mulf %278, %261 : vector<2x16xf32>
    %289 = arith.addf %287, %288 : vector<2x16xf32>
    %290 = arith.index_cast %c3_i32 : i32 to index
    %c0_81 = arith.constant 0 : index
    %c0_82 = arith.constant 0 : index
    %291 = vector.load %arg9[%290, %c0_81, %c0_82] : memref<4x2x32xf32, #tpu.memory_space<vmem>>, vector<1x2x16xf32>
    %292 = vector.shape_cast %291 : vector<1x2x16xf32> to vector<2x16xf32>
    %293 = vector.shape_cast %289 : vector<2x16xf32> to vector<1x2x16xf32>
    tpu.vector_store %arg9[%290, %c0_81, %c0_82], %293 {strides = array<i32>} : memref<4x2x32xf32, #tpu.memory_space<vmem>>, vector<1x2x16xf32>,
    %294 = arith.mulf %248, %257 : vector<2x16xf32>
    %cst_83 = arith.constant dense<0.000000e+00> : vector<2x48xf32>
    %295 = tpu.matmul %289, %16, %cst_83 {dimension_numbers = #tpu.dot_dimension_numbers<[1], [0], [0], [1], [0, 0, 1, 1], [], []>} : vector<2x16xf32>, vector<16x48xf32>, vector<2x48xf32> -> vector<2x48xf32>
    %296 = arith.addf %295, %20 : vector<2x48xf32>
    %cst_84 = arith.constant dense<0.000000e+00> : vector<2x48xf32>
    %297 = tpu.matmul %294, %6, %cst_84 {dimension_numbers = #tpu.dot_dimension_numbers<[1], [0], [0], [1], [0, 0, 1, 1], [], []>} : vector<2x16xf32>, vector<16x48xf32>, vector<2x48xf32> -> vector<2x48xf32>
    %298 = vector.extract_strided_slice %296 {offsets = [0, 0], sizes = [2, 16], strides = [1, 1]} : vector<2x48xf32> to vector<2x16xf32>
    %299 = vector.extract_strided_slice %297 {offsets = [0, 0], sizes = [2, 16], strides = [1, 1]} : vector<2x48xf32> to vector<2x16xf32>
    %300 = arith.addf %298, %299 : vector<2x16xf32>
    %301 = arith.negf %300 : vector<2x16xf32>
    %302 = math.exp %301 : vector<2x16xf32>
    %cst_85 = arith.constant 1.000000e+00 : f32
    %303 = vector.broadcast %cst_85 : f32 to vector<2x16xf32>
    %304 = arith.addf %303, %302 : vector<2x16xf32>
    %305 = arith.divf %303, %304 : vector<2x16xf32>
    %306 = vector.extract_strided_slice %296 {offsets = [0, 16], sizes = [2, 16], strides = [1, 1]} : vector<2x48xf32> to vector<2x16xf32>
    %307 = vector.extract_strided_slice %297 {offsets = [0, 16], sizes = [2, 16], strides = [1, 1]} : vector<2x48xf32> to vector<2x16xf32>
    %308 = arith.addf %306, %307 : vector<2x16xf32>
    %309 = arith.negf %308 : vector<2x16xf32>
    %310 = math.exp %309 : vector<2x16xf32>
    %cst_86 = arith.constant 1.000000e+00 : f32
    %311 = vector.broadcast %cst_86 : f32 to vector<2x16xf32>
    %312 = arith.addf %311, %310 : vector<2x16xf32>
    %313 = arith.divf %311, %312 : vector<2x16xf32>
    %314 = vector.extract_strided_slice %296 {offsets = [0, 32], sizes = [2, 16], strides = [1, 1]} : vector<2x48xf32> to vector<2x16xf32>
    %315 = vector.extract_strided_slice %297 {offsets = [0, 32], sizes = [2, 16], strides = [1, 1]} : vector<2x48xf32> to vector<2x16xf32>
    %316 = arith.addf %315, %14 : vector<2x16xf32>
    %317 = arith.mulf %305, %316 : vector<2x16xf32>
    %318 = arith.addf %314, %317 : vector<2x16xf32>
    %319 = math.tanh %318 : vector<2x16xf32>
    %cst_87 = arith.constant 1.000000e+00 : f32
    %320 = vector.broadcast %cst_87 : f32 to vector<2x16xf32>
    %321 = arith.subf %320, %313 : vector<2x16xf32>
    %322 = arith.mulf %321, %319 : vector<2x16xf32>
    %323 = arith.mulf %313, %294 : vector<2x16xf32>
    %324 = arith.addf %322, %323 : vector<2x16xf32>
    %325 = arith.index_cast %c3_i32 : i32 to index
    %c0_88 = arith.constant 0 : index
    %c16_89 = arith.constant 16 : index
    %326 = vector.load %arg9[%325, %c0_88, %c16_89] : memref<4x2x32xf32, #tpu.memory_space<vmem>>, vector<1x2x16xf32>
    %327 = vector.shape_cast %326 : vector<1x2x16xf32> to vector<2x16xf32>
    %328 = vector.shape_cast %324 : vector<2x16xf32> to vector<1x2x16xf32>
    tpu.vector_store %arg9[%325, %c0_88, %c16_89], %328 {strides = array<i32>} : memref<4x2x32xf32, #tpu.memory_space<vmem>>, vector<1x2x16xf32>,
    %c4_i32 = arith.constant 4 : i32
    %c0_90 = arith.constant 0 : index
    %c0_91 = arith.constant 0 : index
    %c0_92 = arith.constant 0 : index
    %329 = vector.load %arg10[%c0_90, %c0_91, %c0_92] : memref<2x2x16xf32, #tpu.memory_space<vmem>>, vector<1x2x16xf32>
    %330 = vector.shape_cast %329 : vector<1x2x16xf32> to vector<2x16xf32>
    %331 = vector.shape_cast %289 : vector<2x16xf32> to vector<1x2x16xf32>
    tpu.vector_store %arg10[%c0_90, %c0_91, %c0_92], %331 {strides = array<i32>} : memref<2x2x16xf32, #tpu.memory_space<vmem>>, vector<1x2x16xf32>,
    %c1_93 = arith.constant 1 : index
    %c0_94 = arith.constant 0 : index
    %c0_95 = arith.constant 0 : index
    %332 = vector.load %arg10[%c1_93, %c0_94, %c0_95] : memref<2x2x16xf32, #tpu.memory_space<vmem>>, vector<1x2x16xf32>
    %333 = vector.shape_cast %332 : vector<1x2x16xf32> to vector<2x16xf32>
    %334 = vector.shape_cast %324 : vector<2x16xf32> to vector<1x2x16xf32>
    tpu.vector_store %arg10[%c1_93, %c0_94, %c0_95], %334 {strides = array<i32>} : memref<2x2x16xf32, #tpu.memory_space<vmem>>, vector<1x2x16xf32>,
    return
  }
  func.func @transform_0(%arg0: i32, %arg1: i32) -> (i32, i32, i32) {
    %c0_i32 = arith.constant 0 : i32
    %c0_i32_0 = arith.constant 0 : i32
    return %arg1, %arg0, %c0_i32 : i32, i32, i32
  }
  func.func @transform_1(%arg0: i32, %arg1: i32) -> (i32, i32, i32) {
    %c0_i32 = arith.constant 0 : i32
    %c0_i32_0 = arith.constant 0 : i32
    return %arg1, %arg0, %c0_i32 : i32, i32, i32
  }
  func.func @transform_2(%arg0: i32, %arg1: i32) -> (i32, i32) {
    %c0_i32 = arith.constant 0 : i32
    %c0_i32_0 = arith.constant 0 : i32
    return %arg0, %c0_i32 : i32, i32
  }
  func.func @transform_3(%arg0: i32, %arg1: i32) -> (i32, i32, i32) {
    %c0_i32 = arith.constant 0 : i32
    %c0_i32_0 = arith.constant 0 : i32
    %c0_i32_1 = arith.constant 0 : i32
    %c0_i32_2 = arith.constant 0 : i32
    return %c0_i32, %c0_i32_0, %c0_i32_1 : i32, i32, i32
  }
  func.func @transform_4(%arg0: i32, %arg1: i32) -> (i32, i32, i32) {
    %c0_i32 = arith.constant 0 : i32
    %c0_i32_0 = arith.constant 0 : i32
    %c0_i32_1 = arith.constant 0 : i32
    %c0_i32_2 = arith.constant 0 : i32
    return %c0_i32, %c0_i32_0, %c0_i32_1 : i32, i32, i32
  }
  func.func @transform_5(%arg0: i32, %arg1: i32) -> (i32, i32, i32) {
    %c0_i32 = arith.constant 0 : i32
    %c0_i32_0 = arith.constant 0 : i32
    %c0_i32_1 = arith.constant 0 : i32
    %c0_i32_2 = arith.constant 0 : i32
    return %c0_i32, %c0_i32_0, %c0_i32_1 : i32, i32, i32
  }
  func.func @transform_6(%arg0: i32, %arg1: i32) -> (i32, i32, i32) {
    %c0_i32 = arith.constant 0 : i32
    %c0_i32_0 = arith.constant 0 : i32
    %c0_i32_1 = arith.constant 0 : i32
    %c0_i32_2 = arith.constant 0 : i32
    return %c0_i32, %c0_i32_0, %c0_i32_1 : i32, i32, i32
  }
  func.func @transform_7(%arg0: i32, %arg1: i32) -> (i32, i32, i32) {
    %c0_i32 = arith.constant 0 : i32
    %c0_i32_0 = arith.constant 0 : i32
    return %arg1, %arg0, %c0_i32 : i32, i32, i32
  }
}

module attributes {stable_mosaic.version = 11 : i64} {
  func.func @kernel(%arg0: i32, %arg1: i32, %arg2: memref<4x2x1xf32, #tpu.memory_space<vmem>>, %arg3: memref<4x2x48xf32, #tpu.memory_space<vmem>>, %arg4: memref<2x32xf32, #tpu.memory_space<vmem>>, %arg5: memref<2x16x48xf32, #tpu.memory_space<vmem>>, %arg6: memref<2x1x16xf32, #tpu.memory_space<vmem>>, %arg7: memref<1x16x48xf32, #tpu.memory_space<vmem>>, %arg8: memref<1x1x48xf32, #tpu.memory_space<vmem>>, %arg9: memref<4x2x32xf32, #tpu.memory_space<vmem>>, %arg10: memref<2x2x16xf32, #tpu.memory_space<vmem>>) attributes {dimension_semantics = [#tpu.dimension_semantics<parallel>, #tpu.dimension_semantics<arbitrary>], iteration_bounds = array<i64: 1, 2>, scalar_prefetch = 0 : i64, scratch_operands = 1 : i64, tpu.core_type = #tpu.core_type<tc>, window_params = [{transform_indices = @transform_0, window_bounds = array<i64: 4, 2, 1>}, {transform_indices = @transform_1, window_bounds = array<i64: 4, 2, 48>}, {transform_indices = @transform_2, window_bounds = array<i64: 2, 32>}, {pipeline_mode = #tpu.pipeline_mode<synchronous>, transform_indices = @transform_3, window_bounds = array<i64: 2, 16, 48>}, {pipeline_mode = #tpu.pipeline_mode<synchronous>, transform_indices = @transform_4, window_bounds = array<i64: 2, 1, 16>}, {pipeline_mode = #tpu.pipeline_mode<synchronous>, transform_indices = @transform_5, window_bounds = array<i64: 1, 16, 48>}, {pipeline_mode = #tpu.pipeline_mode<synchronous>, transform_indices = @transform_6, window_bounds = array<i64: 1, 1, 48>}, {transform_indices = @transform_7, window_bounds = array<i64: 4, 2, 32>}]} {
    %c0_i32 = arith.constant 0 : i32
    %0 = arith.cmpi eq, %arg1, %c0_i32 : i32
    %1 = arith.extui %0 : i1 to i32
    %c0_i32_0 = arith.constant 0 : i32
    %2 = arith.cmpi ne, %1, %c0_i32_0 : i32
    scf.if %2 {
      %c0_96 = arith.constant 0 : index
      %c0_97 = arith.constant 0 : index
      %335 = vector.load %arg4[%c0_96, %c0_97] : memref<2x32xf32, #tpu.memory_space<vmem>>, vector<2x16xf32>
      %c0_98 = arith.constant 0 : index
      %c0_99 = arith.constant 0 : index
      %c0_100 = arith.constant 0 : index
      %336 = vector.load %arg10[%c0_98, %c0_99, %c0_100] : memref<2x2x16xf32, #tpu.memory_space<vmem>>, vector<1x2x16xf32>
      %337 = vector.shape_cast %336 : vector<1x2x16xf32> to vector<2x16xf32>
      %338 = vector.shape_cast %335 : vector<2x16xf32> to vector<1x2x16xf32>
      tpu.vector_store %arg10[%c0_98, %c0_99, %c0_100], %338 {strides = array<i32>} : memref<2x2x16xf32, #tpu.memory_space<vmem>>, vector<1x2x16xf32>,
      %c0_101 = arith.constant 0 : index
      %c16_102 = arith.constant 16 : index
      %339 = vector.load %arg4[%c0_101, %c16_102] : memref<2x32xf32, #tpu.memory_space<vmem>>, vector<2x16xf32>
      %c1_103 = arith.constant 1 : index
      %c0_104 = arith.constant 0 : index
      %c0_105 = arith.constant 0 : index
      %340 = vector.load %arg10[%c1_103, %c0_104, %c0_105] : memref<2x2x16xf32, #tpu.memory_space<vmem>>, vector<1x2x16xf32>
      %341 = vector.shape_cast %340 : vector<1x2x16xf32> to vector<2x16xf32>
      %342 = vector.shape_cast %339 : vector<2x16xf32> to vector<1x2x16xf32>
      tpu.vector_store %arg10[%c1_103, %c0_104, %c0_105], %342 {strides = array<i32>} : memref<2x2x16xf32, #tpu.memory_space<vmem>>, vector<1x2x16xf32>,
    } else {
    }
    %c0 = arith.constant 0 : index
    %c0_1 = arith.constant 0 : index
    %c0_2 = arith.constant 0 : index
    %3 = vector.load %arg5[%c0, %c0_1, %c0_2] : memref<2x16x48xf32, #tpu.memory_space<vmem>>, vector<1x16x48xf32>
    %4 = vector.shape_cast %3 : vector<1x16x48xf32> to vector<16x48xf32>
    %c1 = arith.constant 1 : index
    %c0_3 = arith.constant 0 : index
    %c0_4 = arith.constant 0 : index
    %5 = vector.load %arg5[%c1, %c0_3, %c0_4] : memref<2x16x48xf32, #tpu.memory_space<vmem>>, vector<1x16x48xf32>
    %6 = vector.shape_cast %5 : vector<1x16x48xf32> to vector<16x48xf32>
    %c0_5 = arith.constant 0 : index
    %c0_6 = arith.constant 0 : index
    %c0_7 = arith.constant 0 : index
    %7 = vector.load %arg6[%c0_5, %c0_6, %c0_7] : memref<2x1x16xf32, #tpu.memory_space<vmem>>, vector<1x1x16xf32>
    %8 = vector.shape_cast %7 : vector<1x1x16xf32> to vector<1x16xf32>
    %9 = vector.shape_cast %8 : vector<1x16xf32> to vector<1x16xf32>
    %10 = vector.broadcast %9 : vector<1x16xf32> to vector<2x16xf32>
    %c1_8 = arith.constant 1 : index
    %c0_9 = arith.constant 0 : index
    %c0_10 = arith.constant 0 : index
    %11 = vector.load %arg6[%c1_8, %c0_9, %c0_10] : memref<2x1x16xf32, #tpu.memory_space<vmem>>, vector<1x1x16xf32>
    %12 = vector.shape_cast %11 : vector<1x1x16xf32> to vector<1x16xf32>
    %13 = vector.shape_cast %12 : vector<1x16xf32> to vector<1x16xf32>
    %14 = vector.broadcast %13 : vector<1x16xf32> to vector<2x16xf32>
    %c0_11 = arith.constant 0 : index
    %c0_12 = arith.constant 0 : index
    %c0_13 = arith.constant 0 : index
    %15 = vector.load %arg7[%c0_11, %c0_12, %c0_13] : memref<1x16x48xf32, #tpu.memory_space<vmem>>, vector<1x16x48xf32>
    %16 = vector.shape_cast %15 : vector<1x16x48xf32> to vector<16x48xf32>
    %c0_14 = arith.constant 0 : index
    %c0_15 = arith.constant 0 : index
    %c0_16 = arith.constant 0 : index
    %17 = vector.load %arg8[%c0_14, %c0_15, %c0_16] : memref<1x1x48xf32, #tpu.memory_space<vmem>>, vector<1x1x48xf32>
    %18 = vector.shape_cast %17 : vector<1x1x48xf32> to vector<1x48xf32>
    %19 = vector.shape_cast %18 : vector<1x48xf32> to vector<1x48xf32>
    %20 = vector.broadcast %19 : vector<1x48xf32> to vector<2x48xf32>
    %c0_17 = arith.constant 0 : index
    %c0_18 = arith.constant 0 : index
    %c0_19 = arith.constant 0 : index
    %21 = vector.load %arg10[%c0_17, %c0_18, %c0_19] : memref<2x2x16xf32, #tpu.memory_space<vmem>>, vector<1x2x16xf32>
    %22 = vector.shape_cast %21 : vector<1x2x16xf32> to vector<2x16xf32>
    %c1_20 = arith.constant 1 : index
    %c0_21 = arith.constant 0 : index
    %c0_22 = arith.constant 0 : index
    %23 = vector.load %arg10[%c1_20, %c0_21, %c0_22] : memref<2x2x16xf32, #tpu.memory_space<vmem>>, vector<1x2x16xf32>
    %24 = vector.shape_cast %23 : vector<1x2x16xf32> to vector<2x16xf32>
    %c0_i32_23 = arith.constant 0 : i32
    %25 = arith.index_cast %c0_i32_23 : i32 to index
    %c0_24 = arith.constant 0 : index
    %c0_25 = arith.constant 0 : index
    %26 = vector.load %arg2[%25, %c0_24, %c0_25] : memref<4x2x1xf32, #tpu.memory_space<vmem>>, vector<1x2x1xf32>
    %27 = vector.shape_cast %26 : vector<1x2x1xf32> to vector<2x1xf32>
    %28 = vector.shape_cast %27 : vector<2x1xf32> to vector<2x1xf32>
    %29 = vector.broadcast %28 : vector<2x1xf32> to vector<2x16xf32>
    %30 = arith.index_cast %c0_i32_23 : i32 to index
    %c0_26 = arith.constant 0 : index
    %c0_27 = arith.constant 0 : index
    %31 = vector.load %arg3[%30, %c0_26, %c0_27] : memref<4x2x48xf32, #tpu.memory_space<vmem>>, vector<1x2x48xf32>
    %32 = vector.shape_cast %31 : vector<1x2x48xf32> to vector<2x48xf32>
    %33 = arith.mulf %22, %29 : vector<2x16xf32>
    %cst = arith.constant dense<0.000000e+00> : vector<2x48xf32>
    %34 = tpu.matmul %33, %4, %cst {dimension_numbers = #tpu.dot_dimension_numbers<[1], [0], [0], [1], [0, 0, 1, 1], [], []>} : vector<2x16xf32>, vector<16x48xf32>, vector<2x48xf32> -> vector<2x48xf32>
    %35 = vector.extract_strided_slice %32 {offsets = [0, 0], sizes = [2, 16], strides = [1, 1]} : vector<2x48xf32> to vector<2x16xf32>
    %36 = vector.extract_strided_slice %34 {offsets = [0, 0], sizes = [2, 16], strides = [1, 1]} : vector<2x48xf32> to vector<2x16xf32>
    %37 = arith.addf %35, %36 : vector<2x16xf32>
    %38 = arith.negf %37 : vector<2x16xf32>
    %39 = math.exp %38 : vector<2x16xf32>
    %cst_28 = arith.constant 1.000000e+00 : f32
    %40 = vector.broadcast %cst_28 : f32 to vector<2x16xf32>
    %41 = arith.addf %40, %39 : vector<2x16xf32>
    %42 = arith.divf %40, %41 : vector<2x16xf32>
    %43 = vector.extract_strided_slice %32 {offsets = [0, 16], sizes = [2, 16], strides = [1, 1]} : vector<2x48xf32> to vector<2x16xf32>
    %44 = vector.extract_strided_slice %34 {offsets = [0, 16], sizes = [2, 16], strides = [1, 1]} : vector<2x48xf32> to vector<2x16xf32>
    %45 = arith.addf %43, %44 : vector<2x16xf32>
    %46 = arith.negf %45 : vector<2x16xf32>
    %47 = math.exp %46 : vector<2x16xf32>
    %cst_29 = arith.constant 1.000000e+00 : f32
    %48 = vector.broadcast %cst_29 : f32 to vector<2x16xf32>
    %49 = arith.addf %48, %47 : vector<2x16xf32>
    %50 = arith.divf %48, %49 : vector<2x16xf32>
    %51 = vector.extract_strided_slice %32 {offsets = [0, 32], sizes = [2, 16], strides = [1, 1]} : vector<2x48xf32> to vector<2x16xf32>
    %52 = vector.extract_strided_slice %34 {offsets = [0, 32], sizes = [2, 16], strides = [1, 1]} : vector<2x48xf32> to vector<2x16xf32>
    %53 = arith.addf %52, %10 : vector<2x16xf32>
    %54 = arith.mulf %42, %53 : vector<2x16xf32>
    %55 = arith.addf %51, %54 : vector<2x16xf32>
    %56 = math.tanh %55 : vector<2x16xf32>
    %cst_30 = arith.constant 1.000000e+00 : f32
    %57 = vector.broadcast %cst_30 : f32 to vector<2x16xf32>
    %58 = arith.subf %57, %50 : vector<2x16xf32>
    %59 = arith.mulf %58, %56 : vector<2x16xf32>
    %60 = arith.mulf %50, %33 : vector<2x16xf32>
    %61 = arith.addf %59, %60 : vector<2x16xf32>
    %62 = arith.index_cast %c0_i32_23 : i32 to index
    %c0_31 = arith.constant 0 : index
    %c0_32 = arith.constant 0 : index
    %63 = vector.load %arg9[%62, %c0_31, %c0_32] : memref<4x2x32xf32, #tpu.memory_space<vmem>>, vector<1x2x16xf32>
    %64 = vector.shape_cast %63 : vector<1x2x16xf32> to vector<2x16xf32>
    %65 = vector.shape_cast %61 : vector<2x16xf32> to vector<1x2x16xf32>
    tpu.vector_store %arg9[%62, %c0_31, %c0_32], %65 {strides = array<i32>} : memref<4x2x32xf32, #tpu.memory_space<vmem>>, vector<1x2x16xf32>,
    %66 = arith.mulf %24, %29 : vector<2x16xf32>
    %cst_33 = arith.constant dense<0.000000e+00> : vector<2x48xf32>
    %67 = tpu.matmul %61, %16, %cst_33 {dimension_numbers = #tpu.dot_dimension_numbers<[1], [0], [0], [1], [0, 0, 1, 1], [], []>} : vector<2x16xf32>, vector<16x48xf32>, vector<2x48xf32> -> vector<2x48xf32>
    %68 = arith.addf %67, %20 : vector<2x48xf32>
    %cst_34 = arith.constant dense<0.000000e+00> : vector<2x48xf32>
    %69 = tpu.matmul %66, %6, %cst_34 {dimension_numbers = #tpu.dot_dimension_numbers<[1], [0], [0], [1], [0, 0, 1, 1], [], []>} : vector<2x16xf32>, vector<16x48xf32>, vector<2x48xf32> -> vector<2x48xf32>
    %70 = vector.extract_strided_slice %68 {offsets = [0, 0], sizes = [2, 16], strides = [1, 1]} : vector<2x48xf32> to vector<2x16xf32>
    %71 = vector.extract_strided_slice %69 {offsets = [0, 0], sizes = [2, 16], strides = [1, 1]} : vector<2x48xf32> to vector<2x16xf32>
    %72 = arith.addf %70, %71 : vector<2x16xf32>
    %73 = arith.negf %72 : vector<2x16xf32>
    %74 = math.exp %73 : vector<2x16xf32>
    %cst_35 = arith.constant 1.000000e+00 : f32
    %75 = vector.broadcast %cst_35 : f32 to vector<2x16xf32>
    %76 = arith.addf %75, %74 : vector<2x16xf32>
    %77 = arith.divf %75, %76 : vector<2x16xf32>
    %78 = vector.extract_strided_slice %68 {offsets = [0, 16], sizes = [2, 16], strides = [1, 1]} : vector<2x48xf32> to vector<2x16xf32>
    %79 = vector.extract_strided_slice %69 {offsets = [0, 16], sizes = [2, 16], strides = [1, 1]} : vector<2x48xf32> to vector<2x16xf32>
    %80 = arith.addf %78, %79 : vector<2x16xf32>
    %81 = arith.negf %80 : vector<2x16xf32>
    %82 = math.exp %81 : vector<2x16xf32>
    %cst_36 = arith.constant 1.000000e+00 : f32
    %83 = vector.broadcast %cst_36 : f32 to vector<2x16xf32>
    %84 = arith.addf %83, %82 : vector<2x16xf32>
    %85 = arith.divf %83, %84 : vector<2x16xf32>
    %86 = vector.extract_strided_slice %68 {offsets = [0, 32], sizes = [2, 16], strides = [1, 1]} : vector<2x48xf32> to vector<2x16xf32>
    %87 = vector.extract_strided_slice %69 {offsets = [0, 32], sizes = [2, 16], strides = [1, 1]} : vector<2x48xf32> to vector<2x16xf32>
    %88 = arith.addf %87, %14 : vector<2x16xf32>
    %89 = arith.mulf %77, %88 : vector<2x16xf32>
    %90 = arith.addf %86, %89 : vector<2x16xf32>
    %91 = math.tanh %90 : vector<2x16xf32>
    %cst_37 = arith.constant 1.000000e+00 : f32
    %92 = vector.broadcast %cst_37 : f32 to vector<2x16xf32>
    %93 = arith.subf %92, %85 : vector<2x16xf32>
    %94 = arith.mulf %93, %91 : vector<2x16xf32>
    %95 = arith.mulf %85, %66 : vector<2x16xf32>
    %96 = arith.addf %94, %95 : vector<2x16xf32>
    %97 = arith.index_cast %c0_i32_23 : i32 to index
    %c0_38 = arith.constant 0 : index
    %c16 = arith.constant 16 : index
    %98 = vector.load %arg9[%97, %c0_38, %c16] : memref<4x2x32xf32, #tpu.memory_space<vmem>>, vector<1x2x16xf32>
    %99 = vector.shape_cast %98 : vector<1x2x16xf32> to vector<2x16xf32>
    %100 = vector.shape_cast %96 : vector<2x16xf32> to vector<1x2x16xf32>
    tpu.vector_store %arg9[%97, %c0_38, %c16], %100 {strides = array<i32>} : memref<4x2x32xf32, #tpu.memory_space<vmem>>, vector<1x2x16xf32>,
    %c1_i32 = arith.constant 1 : i32
    %101 = arith.index_cast %c1_i32 : i32 to index
    %c0_39 = arith.constant 0 : index
    %c0_40 = arith.constant 0 : index
    %102 = vector.load %arg2[%101, %c0_39, %c0_40] : memref<4x2x1xf32, #tpu.memory_space<vmem>>, vector<1x2x1xf32>
    %103 = vector.shape_cast %102 : vector<1x2x1xf32> to vector<2x1xf32>
    %104 = vector.shape_cast %103 : vector<2x1xf32> to vector<2x1xf32>
    %105 = vector.broadcast %104 : vector<2x1xf32> to vector<2x16xf32>
    %106 = arith.index_cast %c1_i32 : i32 to index
    %c0_41 = arith.constant 0 : index
    %c0_42 = arith.constant 0 : index
    %107 = vector.load %arg3[%106, %c0_41, %c0_42] : memref<4x2x48xf32, #tpu.memory_space<vmem>>, vector<1x2x48xf32>
    %108 = vector.shape_cast %107 : vector<1x2x48xf32> to vector<2x48xf32>
    %109 = arith.mulf %61, %105 : vector<2x16xf32>
    %cst_43 = arith.constant dense<0.000000e+00> : vector<2x48xf32>
    %110 = tpu.matmul %109, %4, %cst_43 {dimension_numbers = #tpu.dot_dimension_numbers<[1], [0], [0], [1], [0, 0, 1, 1], [], []>} : vector<2x16xf32>, vector<16x48xf32>, vector<2x48xf32> -> vector<2x48xf32>
    %111 = vector.extract_strided_slice %108 {offsets = [0, 0], sizes = [2, 16], strides = [1, 1]} : vector<2x48xf32> to vector<2x16xf32>
    %112 = vector.extract_strided_slice %110 {offsets = [0, 0], sizes = [2, 16], strides = [1, 1]} : vector<2x48xf32> to vector<2x16xf32>
    %113 = arith.addf %111, %112 : vector<2x16xf32>
    %114 = arith.negf %113 : vector<2x16xf32>
    %115 = math.exp %114 : vector<2x16xf32>
    %cst_44 = arith.constant 1.000000e+00 : f32
    %116 = vector.broadcast %cst_44 : f32 to vector<2x16xf32>
    %117 = arith.addf %116, %115 : vector<2x16xf32>
    %118 = arith.divf %116, %117 : vector<2x16xf32>
    %119 = vector.extract_strided_slice %108 {offsets = [0, 16], sizes = [2, 16], strides = [1, 1]} : vector<2x48xf32> to vector<2x16xf32>
    %120 = vector.extract_strided_slice %110 {offsets = [0, 16], sizes = [2, 16], strides = [1, 1]} : vector<2x48xf32> to vector<2x16xf32>
    %121 = arith.addf %119, %120 : vector<2x16xf32>
    %122 = arith.negf %121 : vector<2x16xf32>
    %123 = math.exp %122 : vector<2x16xf32>
    %cst_45 = arith.constant 1.000000e+00 : f32
    %124 = vector.broadcast %cst_45 : f32 to vector<2x16xf32>
    %125 = arith.addf %124, %123 : vector<2x16xf32>
    %126 = arith.divf %124, %125 : vector<2x16xf32>
    %127 = vector.extract_strided_slice %108 {offsets = [0, 32], sizes = [2, 16], strides = [1, 1]} : vector<2x48xf32> to vector<2x16xf32>
    %128 = vector.extract_strided_slice %110 {offsets = [0, 32], sizes = [2, 16], strides = [1, 1]} : vector<2x48xf32> to vector<2x16xf32>
    %129 = arith.addf %128, %10 : vector<2x16xf32>
    %130 = arith.mulf %118, %129 : vector<2x16xf32>
    %131 = arith.addf %127, %130 : vector<2x16xf32>
    %132 = math.tanh %131 : vector<2x16xf32>
    %cst_46 = arith.constant 1.000000e+00 : f32
    %133 = vector.broadcast %cst_46 : f32 to vector<2x16xf32>
    %134 = arith.subf %133, %126 : vector<2x16xf32>
    %135 = arith.mulf %134, %132 : vector<2x16xf32>
    %136 = arith.mulf %126, %109 : vector<2x16xf32>
    %137 = arith.addf %135, %136 : vector<2x16xf32>
    %138 = arith.index_cast %c1_i32 : i32 to index
    %c0_47 = arith.constant 0 : index
    %c0_48 = arith.constant 0 : index
    %139 = vector.load %arg9[%138, %c0_47, %c0_48] : memref<4x2x32xf32, #tpu.memory_space<vmem>>, vector<1x2x16xf32>
    %140 = vector.shape_cast %139 : vector<1x2x16xf32> to vector<2x16xf32>
    %141 = vector.shape_cast %137 : vector<2x16xf32> to vector<1x2x16xf32>
    tpu.vector_store %arg9[%138, %c0_47, %c0_48], %141 {strides = array<i32>} : memref<4x2x32xf32, #tpu.memory_space<vmem>>, vector<1x2x16xf32>,
    %142 = arith.mulf %96, %105 : vector<2x16xf32>
    %cst_49 = arith.constant dense<0.000000e+00> : vector<2x48xf32>
    %143 = tpu.matmul %137, %16, %cst_49 {dimension_numbers = #tpu.dot_dimension_numbers<[1], [0], [0], [1], [0, 0, 1, 1], [], []>} : vector<2x16xf32>, vector<16x48xf32>, vector<2x48xf32> -> vector<2x48xf32>
    %144 = arith.addf %143, %20 : vector<2x48xf32>
    %cst_50 = arith.constant dense<0.000000e+00> : vector<2x48xf32>
    %145 = tpu.matmul %142, %6, %cst_50 {dimension_numbers = #tpu.dot_dimension_numbers<[1], [0], [0], [1], [0, 0, 1, 1], [], []>} : vector<2x16xf32>, vector<16x48xf32>, vector<2x48xf32> -> vector<2x48xf32>
    %146 = vector.extract_strided_slice %144 {offsets = [0, 0], sizes = [2, 16], strides = [1, 1]} : vector<2x48xf32> to vector<2x16xf32>
    %147 = vector.extract_strided_slice %145 {offsets = [0, 0], sizes = [2, 16], strides = [1, 1]} : vector<2x48xf32> to vector<2x16xf32>
    %148 = arith.addf %146, %147 : vector<2x16xf32>
    %149 = arith.negf %148 : vector<2x16xf32>
    %150 = math.exp %149 : vector<2x16xf32>
    %cst_51 = arith.constant 1.000000e+00 : f32
    %151 = vector.broadcast %cst_51 : f32 to vector<2x16xf32>
    %152 = arith.addf %151, %150 : vector<2x16xf32>
    %153 = arith.divf %151, %152 : vector<2x16xf32>
    %154 = vector.extract_strided_slice %144 {offsets = [0, 16], sizes = [2, 16], strides = [1, 1]} : vector<2x48xf32> to vector<2x16xf32>
    %155 = vector.extract_strided_slice %145 {offsets = [0, 16], sizes = [2, 16], strides = [1, 1]} : vector<2x48xf32> to vector<2x16xf32>
    %156 = arith.addf %154, %155 : vector<2x16xf32>
    %157 = arith.negf %156 : vector<2x16xf32>
    %158 = math.exp %157 : vector<2x16xf32>
    %cst_52 = arith.constant 1.000000e+00 : f32
    %159 = vector.broadcast %cst_52 : f32 to vector<2x16xf32>
    %160 = arith.addf %159, %158 : vector<2x16xf32>
    %161 = arith.divf %159, %160 : vector<2x16xf32>
    %162 = vector.extract_strided_slice %144 {offsets = [0, 32], sizes = [2, 16], strides = [1, 1]} : vector<2x48xf32> to vector<2x16xf32>
    %163 = vector.extract_strided_slice %145 {offsets = [0, 32], sizes = [2, 16], strides = [1, 1]} : vector<2x48xf32> to vector<2x16xf32>
    %164 = arith.addf %163, %14 : vector<2x16xf32>
    %165 = arith.mulf %153, %164 : vector<2x16xf32>
    %166 = arith.addf %162, %165 : vector<2x16xf32>
    %167 = math.tanh %166 : vector<2x16xf32>
    %cst_53 = arith.constant 1.000000e+00 : f32
    %168 = vector.broadcast %cst_53 : f32 to vector<2x16xf32>
    %169 = arith.subf %168, %161 : vector<2x16xf32>
    %170 = arith.mulf %169, %167 : vector<2x16xf32>
    %171 = arith.mulf %161, %142 : vector<2x16xf32>
    %172 = arith.addf %170, %171 : vector<2x16xf32>
    %173 = arith.index_cast %c1_i32 : i32 to index
    %c0_54 = arith.constant 0 : index
    %c16_55 = arith.constant 16 : index
    %174 = vector.load %arg9[%173, %c0_54, %c16_55] : memref<4x2x32xf32, #tpu.memory_space<vmem>>, vector<1x2x16xf32>
    %175 = vector.shape_cast %174 : vector<1x2x16xf32> to vector<2x16xf32>
    %176 = vector.shape_cast %172 : vector<2x16xf32> to vector<1x2x16xf32>
    tpu.vector_store %arg9[%173, %c0_54, %c16_55], %176 {strides = array<i32>} : memref<4x2x32xf32, #tpu.memory_space<vmem>>, vector<1x2x16xf32>,
    %c2_i32 = arith.constant 2 : i32
    %177 = arith.index_cast %c2_i32 : i32 to index
    %c0_56 = arith.constant 0 : index
    %c0_57 = arith.constant 0 : index
    %178 = vector.load %arg2[%177, %c0_56, %c0_57] : memref<4x2x1xf32, #tpu.memory_space<vmem>>, vector<1x2x1xf32>
    %179 = vector.shape_cast %178 : vector<1x2x1xf32> to vector<2x1xf32>
    %180 = vector.shape_cast %179 : vector<2x1xf32> to vector<2x1xf32>
    %181 = vector.broadcast %180 : vector<2x1xf32> to vector<2x16xf32>
    %182 = arith.index_cast %c2_i32 : i32 to index
    %c0_58 = arith.constant 0 : index
    %c0_59 = arith.constant 0 : index
    %183 = vector.load %arg3[%182, %c0_58, %c0_59] : memref<4x2x48xf32, #tpu.memory_space<vmem>>, vector<1x2x48xf32>
    %184 = vector.shape_cast %183 : vector<1x2x48xf32> to vector<2x48xf32>
    %185 = arith.mulf %137, %181 : vector<2x16xf32>
    %cst_60 = arith.constant dense<0.000000e+00> : vector<2x48xf32>
    %186 = tpu.matmul %185, %4, %cst_60 {dimension_numbers = #tpu.dot_dimension_numbers<[1], [0], [0], [1], [0, 0, 1, 1], [], []>} : vector<2x16xf32>, vector<16x48xf32>, vector<2x48xf32> -> vector<2x48xf32>
    %187 = vector.extract_strided_slice %184 {offsets = [0, 0], sizes = [2, 16], strides = [1, 1]} : vector<2x48xf32> to vector<2x16xf32>
    %188 = vector.extract_strided_slice %186 {offsets = [0, 0], sizes = [2, 16], strides = [1, 1]} : vector<2x48xf32> to vector<2x16xf32>
    %189 = arith.addf %187, %188 : vector<2x16xf32>
    %190 = arith.negf %189 : vector<2x16xf32>
    %191 = math.exp %190 : vector<2x16xf32>
    %cst_61 = arith.constant 1.000000e+00 : f32
    %192 = vector.broadcast %cst_61 : f32 to vector<2x16xf32>
    %193 = arith.addf %192, %191 : vector<2x16xf32>
    %194 = arith.divf %192, %193 : vector<2x16xf32>
    %195 = vector.extract_strided_slice %184 {offsets = [0, 16], sizes = [2, 16], strides = [1, 1]} : vector<2x48xf32> to vector<2x16xf32>
    %196 = vector.extract_strided_slice %186 {offsets = [0, 16], sizes = [2, 16], strides = [1, 1]} : vector<2x48xf32> to vector<2x16xf32>
    %197 = arith.addf %195, %196 : vector<2x16xf32>
    %198 = arith.negf %197 : vector<2x16xf32>
    %199 = math.exp %198 : vector<2x16xf32>
    %cst_62 = arith.constant 1.000000e+00 : f32
    %200 = vector.broadcast %cst_62 : f32 to vector<2x16xf32>
    %201 = arith.addf %200, %199 : vector<2x16xf32>
    %202 = arith.divf %200, %201 : vector<2x16xf32>
    %203 = vector.extract_strided_slice %184 {offsets = [0, 32], sizes = [2, 16], strides = [1, 1]} : vector<2x48xf32> to vector<2x16xf32>
    %204 = vector.extract_strided_slice %186 {offsets = [0, 32], sizes = [2, 16], strides = [1, 1]} : vector<2x48xf32> to vector<2x16xf32>
    %205 = arith.addf %204, %10 : vector<2x16xf32>
    %206 = arith.mulf %194, %205 : vector<2x16xf32>
    %207 = arith.addf %203, %206 : vector<2x16xf32>
    %208 = math.tanh %207 : vector<2x16xf32>
    %cst_63 = arith.constant 1.000000e+00 : f32
    %209 = vector.broadcast %cst_63 : f32 to vector<2x16xf32>
    %210 = arith.subf %209, %202 : vector<2x16xf32>
    %211 = arith.mulf %210, %208 : vector<2x16xf32>
    %212 = arith.mulf %202, %185 : vector<2x16xf32>
    %213 = arith.addf %211, %212 : vector<2x16xf32>
    %214 = arith.index_cast %c2_i32 : i32 to index
    %c0_64 = arith.constant 0 : index
    %c0_65 = arith.constant 0 : index
    %215 = vector.load %arg9[%214, %c0_64, %c0_65] : memref<4x2x32xf32, #tpu.memory_space<vmem>>, vector<1x2x16xf32>
    %216 = vector.shape_cast %215 : vector<1x2x16xf32> to vector<2x16xf32>
    %217 = vector.shape_cast %213 : vector<2x16xf32> to vector<1x2x16xf32>
    tpu.vector_store %arg9[%214, %c0_64, %c0_65], %217 {strides = array<i32>} : memref<4x2x32xf32, #tpu.memory_space<vmem>>, vector<1x2x16xf32>,
    %218 = arith.mulf %172, %181 : vector<2x16xf32>
    %cst_66 = arith.constant dense<0.000000e+00> : vector<2x48xf32>
    %219 = tpu.matmul %213, %16, %cst_66 {dimension_numbers = #tpu.dot_dimension_numbers<[1], [0], [0], [1], [0, 0, 1, 1], [], []>} : vector<2x16xf32>, vector<16x48xf32>, vector<2x48xf32> -> vector<2x48xf32>
    %220 = arith.addf %219, %20 : vector<2x48xf32>
    %cst_67 = arith.constant dense<0.000000e+00> : vector<2x48xf32>
    %221 = tpu.matmul %218, %6, %cst_67 {dimension_numbers = #tpu.dot_dimension_numbers<[1], [0], [0], [1], [0, 0, 1, 1], [], []>} : vector<2x16xf32>, vector<16x48xf32>, vector<2x48xf32> -> vector<2x48xf32>
    %222 = vector.extract_strided_slice %220 {offsets = [0, 0], sizes = [2, 16], strides = [1, 1]} : vector<2x48xf32> to vector<2x16xf32>
    %223 = vector.extract_strided_slice %221 {offsets = [0, 0], sizes = [2, 16], strides = [1, 1]} : vector<2x48xf32> to vector<2x16xf32>
    %224 = arith.addf %222, %223 : vector<2x16xf32>
    %225 = arith.negf %224 : vector<2x16xf32>
    %226 = math.exp %225 : vector<2x16xf32>
    %cst_68 = arith.constant 1.000000e+00 : f32
    %227 = vector.broadcast %cst_68 : f32 to vector<2x16xf32>
    %228 = arith.addf %227, %226 : vector<2x16xf32>
    %229 = arith.divf %227, %228 : vector<2x16xf32>
    %230 = vector.extract_strided_slice %220 {offsets = [0, 16], sizes = [2, 16], strides = [1, 1]} : vector<2x48xf32> to vector<2x16xf32>
    %231 = vector.extract_strided_slice %221 {offsets = [0, 16], sizes = [2, 16], strides = [1, 1]} : vector<2x48xf32> to vector<2x16xf32>
    %232 = arith.addf %230, %231 : vector<2x16xf32>
    %233 = arith.negf %232 : vector<2x16xf32>
    %234 = math.exp %233 : vector<2x16xf32>
    %cst_69 = arith.constant 1.000000e+00 : f32
    %235 = vector.broadcast %cst_69 : f32 to vector<2x16xf32>
    %236 = arith.addf %235, %234 : vector<2x16xf32>
    %237 = arith.divf %235, %236 : vector<2x16xf32>
    %238 = vector.extract_strided_slice %220 {offsets = [0, 32], sizes = [2, 16], strides = [1, 1]} : vector<2x48xf32> to vector<2x16xf32>
    %239 = vector.extract_strided_slice %221 {offsets = [0, 32], sizes = [2, 16], strides = [1, 1]} : vector<2x48xf32> to vector<2x16xf32>
    %240 = arith.addf %239, %14 : vector<2x16xf32>
    %241 = arith.mulf %229, %240 : vector<2x16xf32>
    %242 = arith.addf %238, %241 : vector<2x16xf32>
    %243 = math.tanh %242 : vector<2x16xf32>
    %cst_70 = arith.constant 1.000000e+00 : f32
    %244 = vector.broadcast %cst_70 : f32 to vector<2x16xf32>
    %245 = arith.subf %244, %237 : vector<2x16xf32>
    %246 = arith.mulf %245, %243 : vector<2x16xf32>
    %247 = arith.mulf %237, %218 : vector<2x16xf32>
    %248 = arith.addf %246, %247 : vector<2x16xf32>
    %249 = arith.index_cast %c2_i32 : i32 to index
    %c0_71 = arith.constant 0 : index
    %c16_72 = arith.constant 16 : index
    %250 = vector.load %arg9[%249, %c0_71, %c16_72] : memref<4x2x32xf32, #tpu.memory_space<vmem>>, vector<1x2x16xf32>
    %251 = vector.shape_cast %250 : vector<1x2x16xf32> to vector<2x16xf32>
    %252 = vector.shape_cast %248 : vector<2x16xf32> to vector<1x2x16xf32>
    tpu.vector_store %arg9[%249, %c0_71, %c16_72], %252 {strides = array<i32>} : memref<4x2x32xf32, #tpu.memory_space<vmem>>, vector<1x2x16xf32>,
    %c3_i32 = arith.constant 3 : i32
    %253 = arith.index_cast %c3_i32 : i32 to index
    %c0_73 = arith.constant 0 : index
    %c0_74 = arith.constant 0 : index
    %254 = vector.load %arg2[%253, %c0_73, %c0_74] : memref<4x2x1xf32, #tpu.memory_space<vmem>>, vector<1x2x1xf32>
    %255 = vector.shape_cast %254 : vector<1x2x1xf32> to vector<2x1xf32>
    %256 = vector.shape_cast %255 : vector<2x1xf32> to vector<2x1xf32>
    %257 = vector.broadcast %256 : vector<2x1xf32> to vector<2x16xf32>
    %258 = arith.index_cast %c3_i32 : i32 to index
    %c0_75 = arith.constant 0 : index
    %c0_76 = arith.constant 0 : index
    %259 = vector.load %arg3[%258, %c0_75, %c0_76] : memref<4x2x48xf32, #tpu.memory_space<vmem>>, vector<1x2x48xf32>
    %260 = vector.shape_cast %259 : vector<1x2x48xf32> to vector<2x48xf32>
    %261 = arith.mulf %213, %257 : vector<2x16xf32>
    %cst_77 = arith.constant dense<0.000000e+00> : vector<2x48xf32>
    %262 = tpu.matmul %261, %4, %cst_77 {dimension_numbers = #tpu.dot_dimension_numbers<[1], [0], [0], [1], [0, 0, 1, 1], [], []>} : vector<2x16xf32>, vector<16x48xf32>, vector<2x48xf32> -> vector<2x48xf32>
    %263 = vector.extract_strided_slice %260 {offsets = [0, 0], sizes = [2, 16], strides = [1, 1]} : vector<2x48xf32> to vector<2x16xf32>
    %264 = vector.extract_strided_slice %262 {offsets = [0, 0], sizes = [2, 16], strides = [1, 1]} : vector<2x48xf32> to vector<2x16xf32>
    %265 = arith.addf %263, %264 : vector<2x16xf32>
    %266 = arith.negf %265 : vector<2x16xf32>
    %267 = math.exp %266 : vector<2x16xf32>
    %cst_78 = arith.constant 1.000000e+00 : f32
    %268 = vector.broadcast %cst_78 : f32 to vector<2x16xf32>
    %269 = arith.addf %268, %267 : vector<2x16xf32>
    %270 = arith.divf %268, %269 : vector<2x16xf32>
    %271 = vector.extract_strided_slice %260 {offsets = [0, 16], sizes = [2, 16], strides = [1, 1]} : vector<2x48xf32> to vector<2x16xf32>
    %272 = vector.extract_strided_slice %262 {offsets = [0, 16], sizes = [2, 16], strides = [1, 1]} : vector<2x48xf32> to vector<2x16xf32>
    %273 = arith.addf %271, %272 : vector<2x16xf32>
    %274 = arith.negf %273 : vector<2x16xf32>
    %275 = math.exp %274 : vector<2x16xf32>
    %cst_79 = arith.constant 1.000000e+00 : f32
    %276 = vector.broadcast %cst_79 : f32 to vector<2x16xf32>
    %277 = arith.addf %276, %275 : vector<2x16xf32>
    %278 = arith.divf %276, %277 : vector<2x16xf32>
    %279 = vector.extract_strided_slice %260 {offsets = [0, 32], sizes = [2, 16], strides = [1, 1]} : vector<2x48xf32> to vector<2x16xf32>
    %280 = vector.extract_strided_slice %262 {offsets = [0, 32], sizes = [2, 16], strides = [1, 1]} : vector<2x48xf32> to vector<2x16xf32>
    %281 = arith.addf %280, %10 : vector<2x16xf32>
    %282 = arith.mulf %270, %281 : vector<2x16xf32>
    %283 = arith.addf %279, %282 : vector<2x16xf32>
    %284 = math.tanh %283 : vector<2x16xf32>
    %cst_80 = arith.constant 1.000000e+00 : f32
    %285 = vector.broadcast %cst_80 : f32 to vector<2x16xf32>
    %286 = arith.subf %285, %278 : vector<2x16xf32>
    %287 = arith.mulf %286, %284 : vector<2x16xf32>
    %288 = arith.mulf %278, %261 : vector<2x16xf32>
    %289 = arith.addf %287, %288 : vector<2x16xf32>
    %290 = arith.index_cast %c3_i32 : i32 to index
    %c0_81 = arith.constant 0 : index
    %c0_82 = arith.constant 0 : index
    %291 = vector.load %arg9[%290, %c0_81, %c0_82] : memref<4x2x32xf32, #tpu.memory_space<vmem>>, vector<1x2x16xf32>
    %292 = vector.shape_cast %291 : vector<1x2x16xf32> to vector<2x16xf32>
    %293 = vector.shape_cast %289 : vector<2x16xf32> to vector<1x2x16xf32>
    tpu.vector_store %arg9[%290, %c0_81, %c0_82], %293 {strides = array<i32>} : memref<4x2x32xf32, #tpu.memory_space<vmem>>, vector<1x2x16xf32>,
    %294 = arith.mulf %248, %257 : vector<2x16xf32>
    %cst_83 = arith.constant dense<0.000000e+00> : vector<2x48xf32>
    %295 = tpu.matmul %289, %16, %cst_83 {dimension_numbers = #tpu.dot_dimension_numbers<[1], [0], [0], [1], [0, 0, 1, 1], [], []>} : vector<2x16xf32>, vector<16x48xf32>, vector<2x48xf32> -> vector<2x48xf32>
    %296 = arith.addf %295, %20 : vector<2x48xf32>
    %cst_84 = arith.constant dense<0.000000e+00> : vector<2x48xf32>
    %297 = tpu.matmul %294, %6, %cst_84 {dimension_numbers = #tpu.dot_dimension_numbers<[1], [0], [0], [1], [0, 0, 1, 1], [], []>} : vector<2x16xf32>, vector<16x48xf32>, vector<2x48xf32> -> vector<2x48xf32>
    %298 = vector.extract_strided_slice %296 {offsets = [0, 0], sizes = [2, 16], strides = [1, 1]} : vector<2x48xf32> to vector<2x16xf32>
    %299 = vector.extract_strided_slice %297 {offsets = [0, 0], sizes = [2, 16], strides = [1, 1]} : vector<2x48xf32> to vector<2x16xf32>
    %300 = arith.addf %298, %299 : vector<2x16xf32>
    %301 = arith.negf %300 : vector<2x16xf32>
    %302 = math.exp %301 : vector<2x16xf32>
    %cst_85 = arith.constant 1.000000e+00 : f32
    %303 = vector.broadcast %cst_85 : f32 to vector<2x16xf32>
    %304 = arith.addf %303, %302 : vector<2x16xf32>
    %305 = arith.divf %303, %304 : vector<2x16xf32>
    %306 = vector.extract_strided_slice %296 {offsets = [0, 16], sizes = [2, 16], strides = [1, 1]} : vector<2x48xf32> to vector<2x16xf32>
    %307 = vector.extract_strided_slice %297 {offsets = [0, 16], sizes = [2, 16], strides = [1, 1]} : vector<2x48xf32> to vector<2x16xf32>
    %308 = arith.addf %306, %307 : vector<2x16xf32>
    %309 = arith.negf %308 : vector<2x16xf32>
    %310 = math.exp %309 : vector<2x16xf32>
    %cst_86 = arith.constant 1.000000e+00 : f32
    %311 = vector.broadcast %cst_86 : f32 to vector<2x16xf32>
    %312 = arith.addf %311, %310 : vector<2x16xf32>
    %313 = arith.divf %311, %312 : vector<2x16xf32>
    %314 = vector.extract_strided_slice %296 {offsets = [0, 32], sizes = [2, 16], strides = [1, 1]} : vector<2x48xf32> to vector<2x16xf32>
    %315 = vector.extract_strided_slice %297 {offsets = [0, 32], sizes = [2, 16], strides = [1, 1]} : vector<2x48xf32> to vector<2x16xf32>
    %316 = arith.addf %315, %14 : vector<2x16xf32>
    %317 = arith.mulf %305, %316 : vector<2x16xf32>
    %318 = arith.addf %314, %317 : vector<2x16xf32>
    %319 = math.tanh %318 : vector<2x16xf32>
    %cst_87 = arith.constant 1.000000e+00 : f32
    %320 = vector.broadcast %cst_87 : f32 to vector<2x16xf32>
    %321 = arith.subf %320, %313 : vector<2x16xf32>
    %322 = arith.mulf %321, %319 : vector<2x16xf32>
    %323 = arith.mulf %313, %294 : vector<2x16xf32>
    %324 = arith.addf %322, %323 : vector<2x16xf32>
    %325 = arith.index_cast %c3_i32 : i32 to index
    %c0_88 = arith.constant 0 : index
    %c16_89 = arith.constant 16 : index
    %326 = vector.load %arg9[%325, %c0_88, %c16_89] : memref<4x2x32xf32, #tpu.memory_space<vmem>>, vector<1x2x16xf32>
    %327 = vector.shape_cast %326 : vector<1x2x16xf32> to vector<2x16xf32>
    %328 = vector.shape_cast %324 : vector<2x16xf32> to vector<1x2x16xf32>
    tpu.vector_store %arg9[%325, %c0_88, %c16_89], %328 {strides = array<i32>} : memref<4x2x32xf32, #tpu.memory_space<vmem>>, vector<1x2x16xf32>,
    %c4_i32 = arith.constant 4 : i32
    %c0_90 = arith.constant 0 : index
    %c0_91 = arith.constant 0 : index
    %c0_92 = arith.constant 0 : index
    %329 = vector.load %arg10[%c0_90, %c0_91, %c0_92] : memref<2x2x16xf32, #tpu.memory_space<vmem>>, vector<1x2x16xf32>
    %330 = vector.shape_cast %329 : vector<1x2x16xf32> to vector<2x16xf32>
    %331 = vector.shape_cast %289 : vector<2x16xf32> to vector<1x2x16xf32>
    tpu.vector_store %arg10[%c0_90, %c0_91, %c0_92], %331 {strides = array<i32>} : memref<2x2x16xf32, #tpu.memory_space<vmem>>, vector<1x2x16xf32>,
    %c1_93 = arith.constant 1 : index
    %c0_94 = arith.constant 0 : index
    %c0_95 = arith.constant 0 : index
    %332 = vector.load %arg10[%c1_93, %c0_94, %c0_95] : memref<2x2x16xf32, #tpu.memory_space<vmem>>, vector<1x2x16xf32>
    %333 = vector.shape_cast %332 : vector<1x2x16xf32> to vector<2x16xf32>
    %334 = vector.shape_cast %324 : vector<2x16xf32> to vector<1x2x16xf32>
    tpu.vector_store %arg10[%c1_93, %c0_94, %c0_95], %334 {strides = array<i32>} : memref<2x2x16xf32, #tpu.memory_space<vmem>>, vector<1x2x16xf32>,
    return
  }
  func.func @transform_0(%arg0: i32, %arg1: i32) -> (i32, i32, i32) {
    %c0_i32 = arith.constant 0 : i32
    %c0_i32_0 = arith.constant 0 : i32
    return %arg1, %arg0, %c0_i32 : i32, i32, i32
  }
  func.func @transform_1(%arg0: i32, %arg1: i32) -> (i32, i32, i32) {
    %c0_i32 = arith.constant 0 : i32
    %c0_i32_0 = arith.constant 0 : i32
    return %arg1, %arg0, %c0_i32 : i32, i32, i32
  }
  func.func @transform_2(%arg0: i32, %arg1: i32) -> (i32, i32) {
    %c0_i32 = arith.constant 0 : i32
    %c0_i32_0 = arith.constant 0 : i32
    return %arg0, %c0_i32 : i32, i32
  }
  func.func @transform_3(%arg0: i32, %arg1: i32) -> (i32, i32, i32) {
    %c0_i32 = arith.constant 0 : i32
    %c0_i32_0 = arith.constant 0 : i32
    %c0_i32_1 = arith.constant 0 : i32
    %c0_i32_2 = arith.constant 0 : i32
    return %c0_i32, %c0_i32_0, %c0_i32_1 : i32, i32, i32
  }
  func.func @transform_4(%arg0: i32, %arg1: i32) -> (i32, i32, i32) {
    %c0_i32 = arith.constant 0 : i32
    %c0_i32_0 = arith.constant 0 : i32
    %c0_i32_1 = arith.constant 0 : i32
    %c0_i32_2 = arith.constant 0 : i32
    return %c0_i32, %c0_i32_0, %c0_i32_1 : i32, i32, i32
  }
  func.func @transform_5(%arg0: i32, %arg1: i32) -> (i32, i32, i32) {
    %c0_i32 = arith.constant 0 : i32
    %c0_i32_0 = arith.constant 0 : i32
    %c0_i32_1 = arith.constant 0 : i32
    %c0_i32_2 = arith.constant 0 : i32
    return %c0_i32, %c0_i32_0, %c0_i32_1 : i32, i32, i32
  }
  func.func @transform_6(%arg0: i32, %arg1: i32) -> (i32, i32, i32) {
    %c0_i32 = arith.constant 0 : i32
    %c0_i32_0 = arith.constant 0 : i32
    %c0_i32_1 = arith.constant 0 : i32
    %c0_i32_2 = arith.constant 0 : i32
    return %c0_i32, %c0_i32_0, %c0_i32_1 : i32, i32, i32
  }
  func.func @transform_7(%arg0: i32, %arg1: i32) -> (i32, i32, i32) {
    %c0_i32 = arith.constant 0 : i32
    %c0_i32_0 = arith.constant 0 : i32
    return %arg1, %arg0, %c0_i32 : i32, i32, i32
  }
}

</mosaic_0001>

<llo_original>
// kernel: recurrent_model_forward.1
$region0: #{recurrent_model_forward.1}
  #allocation0 [shape = 'u32[]', space=smem, size = 0x4, offset = 0x4, fixed_abs, tag = 'smem constant byte address 0x4 - core index']
  #allocation1 [shape = 'u32[72,128]{1,0:T(1,128)}', space=vmem, size = 0x9000, scoped, tag = 'internal scratch']
  #allocation2 [shape = 'f32[2,2,16]{2,1,0:T(2,128)}', space=vmem, size = 0x800, scoped, tag = 'scratch operand']
  %s0 = inlined_call_operand.vmem [shape: f32[8,2,1], index: 0, kind: input, shape index: {}]
  %s1 = inlined_call_operand.vmem [shape: f32[8,2,48], index: 1, kind: input, shape index: {}]
  %s2 = inlined_call_operand.vmem [shape: f32[2,32], index: 2, kind: input, shape index: {}]
  %s3 = inlined_call_operand.vmem [shape: f32[2,16,48], index: 3, kind: input, shape index: {}]
  %s4 = inlined_call_operand.vmem [shape: f32[2,1,16], index: 4, kind: input, shape index: {}]
  %s5 = inlined_call_operand.vmem [shape: f32[1,16,48], index: 5, kind: input, shape index: {}]
  %s6 = inlined_call_operand.vmem [shape: f32[1,1,48], index: 6, kind: input, shape index: {}]
  %s7 = inlined_call_operand.hbm [shape: f32[8,2,32], index: 7, kind: output, shape index: {}]
  %s8 = sld [smem:[#allocation0]]
  $region65: #{recurrent_model_forward.1} parent=0
    _
  %s10 = ssub.s32 1, %s8
  %s11 = scalar_select 0, %s10, %s8
  $region1: #{recurrent_model_forward.1} parent=0
    #allocation3 [shape = 'u8[8192]{0}', space=vmem, size = 0x2000, scoped, tag = 'output window, operand 0']
    #allocation4 [shape = 's32[2]{0}', space=sflag, size = 0x8, scoped, tag = 'scoped memory for recurrent_model_forward.1']
    %12 = vsyncpa [#allocation4], 0
    %s13 = scalar_lea.sflag [#allocation4], 1
    %14 = vsyncpa %s13, 0
    loop: start=0, step=1, limit=4
    $region2: #{recurrent_model_forward.1} parent=1 // loop_pre_header
      _
    $region3: #{recurrent_model_forward.1} parent=1 // loop_header
      %s16 = sphi 0, %s20
      %p17 = scmp.ge.s32.totalorder %s16, 4
      %s23 = sphi 0, %s35
      %s24 = sphi 0, %s31
      %s25 = sphi 0, %s23
      %s26 = sphi 0, %s24
      %s27 = sphi 0, %s25
      %s28 = sphi 0, %s26
      %s40 = sphi 0, %s42
      %s43 = sphi 0, %s40
      %s44 = sphi 0, %s43
      %s60 = sphi 0, %s44
      %s68 = sphi 0, %s70
      %s71 = sphi 0, %s68
      %s72 = sphi 0, %s71
      %s88 = sphi 0, %s72
      %s94 = sphi 0, %s96
      %s97 = sphi 0, %s94
      %s98 = sphi 0, %s97
      %s114 = sphi 0, %s98
      %s118 = sphi 0, %s118
      %s120 = sphi 0, %s118
      %s121 = sphi 0, %s120
      %s135 = sphi 0, %s121
      %s139 = sphi 0, %s139
      %s141 = sphi 0, %s139
      %s142 = sphi 0, %s141
      %s156 = sphi 0, %s142
      %s160 = sphi 0, %s160
      %s162 = sphi 0, %s160
      %s163 = sphi 0, %s162
      %s177 = sphi 0, %s163
      %s181 = sphi 0, %s181
      %s183 = sphi 0, %s181
      %s184 = sphi 0, %s183
      %s198 = sphi 0, %s184
      %s206 = sphi 0, %s208
      %s209 = sphi 0, %s206
      %s210 = sphi 0, %s209
      %s226 = sphi 0, %s210
    $region4: #{recurrent_model_forward.1} parent=1 // loop_header_branch
      %19 = sbr.rel (%p17) target = $region8
    $region5: #{recurrent_model_forward.1} parent=1 // loop_body
      %s21 = ssub.s32 %s16, 1
      %s22 = ssub.s32 %s16, 2
      %s29 = sadd.s32 1, %s24
      %p30 = scmp.ge.s32.totalorder %s29, 2
      %s31 = scalar_select %p30, 0, %s29
      %s32 = sadd.s32 1, %s23
      %s33 = scalar_select %p30, %s32, %s23
      %p34 = scmp.ge.s32.totalorder %s33, 1
      %s35 = scalar_select %p34, 0, %s33
      %s36 = ssub.s32 %s24, %s31
      %s37 = ssub.s32 %s23, %s35
      %s38 = sor.u32 %s36, %s37
      %p39 = scmp.eq.s32.totalorder %s38, 0
      %s41 = sadd.s32 %s40, 1
      %s42 = scalar_select %p39, %s40, %s41
      %p45 = pneg %p39
      %p46 = scmp.eq.s32.totalorder %s16, 1
      %p47 = por %p45, %p46
      %p48 = scmp.ne.s32.totalorder %s40, %s43
      %p49 = scmp.eq.s32.totalorder %s16, 0
      %p50 = por %p48, %p49
      %p51 = scmp.ne.s32.totalorder %s40, %s43
      %p52 = scmp.eq.s32.totalorder %s21, 1
      %p53 = por %p51, %p52
      %p54 = scmp.ne.s32.totalorder %s43, %s44
      %p55 = scmp.eq.s32.totalorder %s21, 0
      %p56 = por %p54, %p55
      %p57 = scmp.ne.s32.totalorder %s43, %s44
      %p58 = scmp.eq.s32.totalorder %s22, 1
      %p59 = por %p57, %p58
      %p61 = scmp.ne.s32.totalorder %s44, %s60
      %p62 = scmp.eq.s32.totalorder %s22, 0
      %p63 = por %p61, %p62
      %s64 = ssub.s32 %s24, %s31
      %s65 = ssub.s32 %s23, %s35
      %s66 = sor.u32 %s64, %s65
      %p67 = scmp.eq.s32.totalorder %s66, 0
      %s69 = sadd.s32 %s68, 1
      %s70 = scalar_select %p67, %s68, %s69
      %p73 = pneg %p67
      %p74 = scmp.eq.s32.totalorder %s16, 1
      %p75 = por %p73, %p74
      %p76 = scmp.ne.s32.totalorder %s68, %s71
      %p77 = scmp.eq.s32.totalorder %s16, 0
      %p78 = por %p76, %p77
      %p79 = scmp.ne.s32.totalorder %s68, %s71
      %p80 = scmp.eq.s32.totalorder %s21, 1
      %p81 = por %p79, %p80
      %p82 = scmp.ne.s32.totalorder %s71, %s72
      %p83 = scmp.eq.s32.totalorder %s21, 0
      %p84 = por %p82, %p83
      %p85 = scmp.ne.s32.totalorder %s71, %s72
      %p86 = scmp.eq.s32.totalorder %s22, 1
      %p87 = por %p85, %p86
      %p89 = scmp.ne.s32.totalorder %s72, %s88
      %p90 = scmp.eq.s32.totalorder %s22, 0
      %p91 = por %p89, %p90
      %s92 = ssub.s32 %s23, %s35
      %p93 = scmp.eq.s32.totalorder %s92, 0
      %s95 = sadd.s32 %s94, 1
      %s96 = scalar_select %p93, %s94, %s95
      %p99 = pneg %p93
      %p100 = scmp.eq.s32.totalorder %s16, 1
      %p101 = por %p99, %p100
      %p102 = scmp.ne.s32.totalorder %s94, %s97
      %p103 = scmp.eq.s32.totalorder %s16, 0
      %p104 = por %p102, %p103
      %p105 = scmp.ne.s32.totalorder %s94, %s97
      %p106 = scmp.eq.s32.totalorder %s21, 1
      %p107 = por %p105, %p106
      %p108 = scmp.ne.s32.totalorder %s97, %s98
      %p109 = scmp.eq.s32.totalorder %s21, 0
      %p110 = por %p108, %p109
      %p111 = scmp.ne.s32.totalorder %s97, %s98
      %p112 = scmp.eq.s32.totalorder %s22, 1
      %p113 = por %p111, %p112
      %p115 = scmp.ne.s32.totalorder %s98, %s114
      %p116 = scmp.eq.s32.totalorder %s22, 0
      %p117 = por %p115, %p116
      %s119 = sadd.s32 %s118, 1
      %p122 = scmp.eq.s32.totalorder %s16, 1
      %p123 = scmp.ne.s32.totalorder %s118, %s120
      %p124 = scmp.eq.s32.totalorder %s16, 0
      %p125 = por %p123, %p124
      %p126 = scmp.ne.s32.totalorder %s118, %s120
      %p127 = scmp.eq.s32.totalorder %s21, 1
      %p128 = por %p126, %p127
      %p129 = scmp.ne.s32.totalorder %s120, %s121
      %p130 = scmp.eq.s32.totalorder %s21, 0
      %p131 = por %p129, %p130
      %p132 = scmp.ne.s32.totalorder %s120, %s121
      %p133 = scmp.eq.s32.totalorder %s22, 1
      %p134 = por %p132, %p133
      %p136 = scmp.ne.s32.totalorder %s121, %s135
      %p137 = scmp.eq.s32.totalorder %s22, 0
      %p138 = por %p136, %p137
      %s140 = sadd.s32 %s139, 1
      %p143 = scmp.eq.s32.totalorder %s16, 1
      %p144 = scmp.ne.s32.totalorder %s139, %s141
      %p145 = scmp.eq.s32.totalorder %s16, 0
      %p146 = por %p144, %p145
      %p147 = scmp.ne.s32.totalorder %s139, %s141
      %p148 = scmp.eq.s32.totalorder %s21, 1
      %p149 = por %p147, %p148
      %p150 = scmp.ne.s32.totalorder %s141, %s142
      %p151 = scmp.eq.s32.totalorder %s21, 0
      %p152 = por %p150, %p151
      %p153 = scmp.ne.s32.totalorder %s141, %s142
      %p154 = scmp.eq.s32.totalorder %s22, 1
      %p155 = por %p153, %p154
      %p157 = scmp.ne.s32.totalorder %s142, %s156
      %p158 = scmp.eq.s32.totalorder %s22, 0
      %p159 = por %p157, %p158
      %s161 = sadd.s32 %s160, 1
      %p164 = scmp.eq.s32.totalorder %s16, 1
      %p165 = scmp.ne.s32.totalorder %s160, %s162
      %p166 = scmp.eq.s32.totalorder %s16, 0
      %p167 = por %p165, %p166
      %p168 = scmp.ne.s32.totalorder %s160, %s162
      %p169 = scmp.eq.s32.totalorder %s21, 1
      %p170 = por %p168, %p169
      %p171 = scmp.ne.s32.totalorder %s162, %s163
      %p172 = scmp.eq.s32.totalorder %s21, 0
      %p173 = por %p171, %p172
      %p174 = scmp.ne.s32.totalorder %s162, %s163
      %p175 = scmp.eq.s32.totalorder %s22, 1
      %p176 = por %p174, %p175
      %p178 = scmp.ne.s32.totalorder %s163, %s177
      %p179 = scmp.eq.s32.totalorder %s22, 0
      %p180 = por %p178, %p179
      %s182 = sadd.s32 %s181, 1
      %p185 = scmp.eq.s32.totalorder %s16, 1
      %p186 = scmp.ne.s32.totalorder %s181, %s183
      %p187 = scmp.eq.s32.totalorder %s16, 0
      %p188 = por %p186, %p187
      %p189 = scmp.ne.s32.totalorder %s181, %s183
      %p190 = scmp.eq.s32.totalorder %s21, 1
      %p191 = por %p189, %p190
      %p192 = scmp.ne.s32.totalorder %s183, %s184
      %p193 = scmp.eq.s32.totalorder %s21, 0
      %p194 = por %p192, %p193
      %p195 = scmp.ne.s32.totalorder %s183, %s184
      %p196 = scmp.eq.s32.totalorder %s22, 1
      %p197 = por %p195, %p196
      %p199 = scmp.ne.s32.totalorder %s184, %s198
      %p200 = scmp.eq.s32.totalorder %s22, 0
      %p201 = por %p199, %p200
      %s202 = ssub.s32 %s24, %s31
      %s203 = ssub.s32 %s23, %s35
      %s204 = sor.u32 %s202, %s203
      %p205 = scmp.eq.s32.totalorder %s204, 0
      %s207 = sadd.s32 %s206, 1
      %s208 = scalar_select %p205, %s206, %s207
      %p211 = pneg %p205
      %p212 = scmp.eq.s32.totalorder %s16, 1
      %p213 = por %p211, %p212
      %p214 = scmp.ne.s32.totalorder %s206, %s209
      %p215 = scmp.eq.s32.totalorder %s16, 0
      %p216 = por %p214, %p215
      %p217 = scmp.ne.s32.totalorder %s206, %s209
      %p218 = scmp.eq.s32.totalorder %s21, 1
      %p219 = por %p217, %p218
      %p220 = scmp.ne.s32.totalorder %s209, %s210
      %p221 = scmp.eq.s32.totalorder %s21, 0
      %p222 = por %p220, %p221
      %p223 = scmp.ne.s32.totalorder %s209, %s210
      %p224 = scmp.eq.s32.totalorder %s22, 1
      %p225 = por %p223, %p224
      %p227 = scmp.ne.s32.totalorder %s210, %s226
      %p228 = scmp.eq.s32.totalorder %s22, 0
      %p229 = por %p227, %p228
      %p230 = scmp.le.s32.totalorder 1, %s16
      %p231 = scmp.lt.s32.totalorder %s16, 3
      %p232 = pnand %p230, %p231
      %p233 = pneg %p232
      // Predicated region
      $region9: #{recurrent_model_forward.1} parent=5 // pred_check
        _
      $region10: #{recurrent_model_forward.1} parent=5 // pred_check_branch
        %235 = sbr.rel (%p232) target = $region12
      $region11: #{recurrent_model_forward.1} parent=5 // pred_region
        %s236 = ssub.s32 %s16, 1
        // Predicated region
        $region13: #{recurrent_model_forward.1} parent=11 // pred_check
          %p237 = pneg %p110
        $region14: #{recurrent_model_forward.1} parent=11 // pred_check_branch
          %239 = sbr.rel (%p237) target = $region16
        $region15: #{recurrent_model_forward.1} parent=11 // pred_region
          %p240 = scmp.lt.s32.totalorder %s25, 0
          %s241 = scalar_select %p240, %s25, 0
          %s242 = smul.addr %s241, 2
          %s243 = scalar_lea.vmem %s2, %s242
        $region16: #{recurrent_model_forward.1} parent=11 // pred_fallthru
          _
        // Predicated region
        $region17: #{recurrent_model_forward.1} parent=11 // pred_check
          %p244 = pneg %p131
        $region18: #{recurrent_model_forward.1} parent=11 // pred_check_branch
          %246 = sbr.rel (%p244) target = $region20
        $region19: #{recurrent_model_forward.1} parent=11 // pred_region
          _
        $region20: #{recurrent_model_forward.1} parent=11 // pred_fallthru
          _
        // Predicated region
        $region21: #{recurrent_model_forward.1} parent=11 // pred_check
          %p247 = pneg %p152
        $region22: #{recurrent_model_forward.1} parent=11 // pred_check_branch
          %249 = sbr.rel (%p247) target = $region24
        $region23: #{recurrent_model_forward.1} parent=11 // pred_region
          _
        $region24: #{recurrent_model_forward.1} parent=11 // pred_fallthru
          _
        // Predicated region
        $region25: #{recurrent_model_forward.1} parent=11 // pred_check
          %p250 = pneg %p173
        $region26: #{recurrent_model_forward.1} parent=11 // pred_check_branch
          %252 = sbr.rel (%p250) target = $region28
        $region27: #{recurrent_model_forward.1} parent=11 // pred_region
          _
        $region28: #{recurrent_model_forward.1} parent=11 // pred_fallthru
          _
        // Predicated region
        $region29: #{recurrent_model_forward.1} parent=11 // pred_check
          %p253 = pneg %p194
        $region30: #{recurrent_model_forward.1} parent=11 // pred_check_branch
          %255 = sbr.rel (%p253) target = $region32
        $region31: #{recurrent_model_forward.1} parent=11 // pred_region
          _
        $region32: #{recurrent_model_forward.1} parent=11 // pred_fallthru
          _
      $region12: #{recurrent_model_forward.1} parent=5 // pred_fallthru
        _
      %p256 = scmp.lt.s32.totalorder %s16, 2
      // Predicated region
      $region33: #{recurrent_model_forward.1} parent=5 // pred_check
        %p257 = pneg %p256
      $region34: #{recurrent_model_forward.1} parent=5 // pred_check_branch
        %259 = sbr.rel (%p257) target = $region36
      $region35: #{recurrent_model_forward.1} parent=5 // pred_region
        // Predicated region
        $region37: #{recurrent_model_forward.1} parent=35 // pred_check
          %p260 = pneg %p50
        $region38: #{recurrent_model_forward.1} parent=35 // pred_check_branch
          %262 = sbr.rel (%p260) target = $region40
        $region39: #{recurrent_model_forward.1} parent=35 // pred_region
          %s263 = smul.u32 4, %s24
          %p264 = scmp.lt.s32.totalorder %s263, 7
          %s265 = scalar_select %p264, %s263, 7
          %p266 = scmp.lt.s32.totalorder %s23, 0
          %s267 = scalar_select %p266, %s23, 0
          %s268 = sadd.s32 %s267, %s265
          %s269 = smul.addr %s268, 2
          %s270 = scalar_lea.vmem %s0, %s269
          %s271 = smul.u32 4, %s24
        $region40: #{recurrent_model_forward.1} parent=35 // pred_fallthru
          _
        // Predicated region
        $region41: #{recurrent_model_forward.1} parent=35 // pred_check
          %p272 = pneg %p78
        $region42: #{recurrent_model_forward.1} parent=35 // pred_check_branch
          %274 = sbr.rel (%p272) target = $region44
        $region43: #{recurrent_model_forward.1} parent=35 // pred_region
          %s275 = smul.u32 4, %s24
          %p276 = scmp.lt.s32.totalorder %s275, 7
          %s277 = scalar_select %p276, %s275, 7
          %p278 = scmp.lt.s32.totalorder %s23, 0
          %s279 = scalar_select %p278, %s23, 0
          %s280 = sadd.s32 %s279, %s277
          %s281 = smul.addr %s280, 2
          %s282 = scalar_lea.vmem %s1, %s281
          %s283 = smul.u32 4, %s24
        $region44: #{recurrent_model_forward.1} parent=35 // pred_fallthru
          _
      $region36: #{recurrent_model_forward.1} parent=5 // pred_fallthru
        _
      %p284 = scmp.le.s32.totalorder 1, %s16
      %p285 = scmp.lt.s32.totalorder %s16, 3
      %p286 = pnand %p284, %p285
      %p287 = pneg %p286
      // Predicated region
      $region45: #{recurrent_model_forward.1} parent=5 // pred_check
        _
      $region46: #{recurrent_model_forward.1} parent=5 // pred_check_branch
        %289 = sbr.rel (%p286) target = $region48
      $region47: #{recurrent_model_forward.1} parent=5 // pred_region
        %s290 = ssub.s32 %s16, 1
        %s291 = smul.u32 4, %s26
        %p292 = scmp.lt.s32.totalorder %s291, 7
        %s293 = scalar_select %p292, %s291, 7
        %p294 = scmp.lt.s32.totalorder %s25, 0
        %s295 = scalar_select %p294, %s25, 0
        %s296 = sadd.s32 %s295, %s293
        %s297 = smul.addr %s296, 2
        %s298 = scalar_lea.vmem %s0, %s297
        %p299 = pneg %p56
        %p300 = pneg %p53
        %s301 = smul.u32 4, %s26
        %p302 = scmp.lt.s32.totalorder %s301, 7
        %s303 = scalar_select %p302, %s301, 7
        %p304 = scmp.lt.s32.totalorder %s25, 0
        %s305 = scalar_select %p304, %s25, 0
        %s306 = sadd.s32 %s305, %s303
        %s307 = smul.addr %s306, 2
        %s308 = scalar_lea.vmem %s1, %s307
        %p309 = pneg %p84
        %p310 = pneg %p81
        %p311 = scmp.lt.s32.totalorder %s25, 0
        %s312 = scalar_select %p311, %s25, 0
        %s313 = smul.addr %s312, 2
        %s314 = scalar_lea.vmem %s2, %s313
        %p315 = pneg %p110
        %p316 = pneg %p107
        %p317 = pneg %p131
        %p318 = pneg %p128
        %p319 = pneg %p152
        %p320 = pneg %p149
        %p321 = pneg %p173
        %p322 = pneg %p170
        %p323 = pneg %p194
        %p324 = pneg %p191
        %p325 = pneg %p222
        %p326 = pneg %p219
        %s327 = sand.u32 %s209, 1
        %s328 = scalar_lea.sflag [#allocation4], %s327
        %s329 = sand.u32 %s209, 1
        %s330 = smul.addr %s329, 8
        %s331 = scalar_lea.vmem [#allocation3], %s330
        %s332 = smul.u32 4, %s26
        %p333 = scmp.lt.s32.totalorder %s332, 7
        %s334 = scalar_select %p333, %s332, 7
        %p335 = scmp.lt.s32.totalorder %s25, 0
        %s336 = scalar_select %p335, %s25, 0
        %s337 = sadd.s32 %s336, %s334
        %s338 = smul.addr %s337, 2
        %s339 = scalar_lea.vmem %s0, %s338
        %s340 = smul.u32 4, %s26
        %s341 = smul.u32 4, %s26
        %p342 = scmp.lt.s32.totalorder %s341, 7
        %s343 = scalar_select %p342, %s341, 7
        %p344 = scmp.lt.s32.totalorder %s25, 0
        %s345 = scalar_select %p344, %s25, 0
        %s346 = sadd.s32 %s345, %s343
        %s347 = smul.addr %s346, 2
        %s348 = scalar_lea.vmem %s1, %s347
        %s349 = smul.u32 4, %s26
        %p350 = scmp.lt.s32.totalorder %s25, 0
        %s351 = scalar_select %p350, %s25, 0
        %s352 = smul.addr %s351, 2
        %s353 = scalar_lea.vmem %s2, %s352
        %s354 = smul.u32 4, %s26
        %p355 = scmp.eq.s32.totalorder %s26, 0
        // Predicated region
        $region49: #{recurrent_model_forward.1} parent=47 // pred_check
          %p356 = pneg %p355
        $region50: #{recurrent_model_forward.1} parent=47 // pred_check_branch
          %358 = sbr.rel (%p356) target = $region52
        $region51: #{recurrent_model_forward.1} parent=47 // pred_region
          %v359 = vld [vmem:[%s353] sm:$0x3]
          %vm360 = vcmask 123904
          %361 = vst.msk [vmem:[#allocation2] sm:$0x3] %vm360, %v359
          %v362 = vld [vmem:[%s353] sm:$0x3]
          %364 = vrot.lane.b32.xlu0 %v362, 112
          %v365 = vpop.permute.xlu0 %364
          %s367 = scalar_lea.vmem [#allocation2], 2
          %368 = vst.msk [vmem:[%s367] sm:$0x3] %vm360, %v365
        $region52: #{recurrent_model_forward.1} parent=47 // pred_fallthru
          _
        %v369 = vld [vmem:[%s3] sm:$0xff]
        %v370 = vld [vmem:[%s3 + $0x8] sm:$0xff]
        %s371 = scalar_lea.vmem %s3, 16
        %v372 = vld [vmem:[%s371] sm:$0xff]
        %v373 = vld [vmem:[%s371 + $0x8] sm:$0xff]
        %v374 = vld [vmem:[%s4] sm:$0x1]
        %v376 = vperm.slane %v374, 0
        %s377 = scalar_lea.vmem %s4, 1
        %v378 = vld [vmem:[%s377] sm:$0x1]
        %v380 = vperm.slane %v378, 0
        %v381 = vld [vmem:[%s5] sm:$0xff]
        %v382 = vld [vmem:[%s5 + $0x8] sm:$0xff]
        %v383 = vld [vmem:[%s6] sm:$0x1]
        %v385 = vperm.slane %v383, 0
        %v387 = vld [vmem:[#allocation2] sm:$0x3]
        %s388 = scalar_lea.vmem [#allocation2], 2
        %v389 = vld [vmem:[%s388] sm:$0x3]
        %v390 = vld [vmem:[%s339] sm:$0x3]
        %392 = vset.pattern.permute.xlu0 0
        %393 = vperm.xlu0 %392, %v390
        %v394 = vpop.permute.xlu0 %393
        %v396 = vld [vmem:[%s348] sm:$0x3]
        %v397 = vmul.f32 %v387, %v394
        %vm398 = vcmask 130048
        %v400 = vsel %vm398, %v397, 0
        %402 = vmatpush.msra.mxu0 0.0
        %403 = vmatpush.msra.mxu0 0.0
        %404 = vmatpush.msra.mxu0 0.0
        %405 = vmatpush.msra.mxu0 0.0
        %406 = vmatpush.msra.mxu0 0.0
        %407 = vmatpush.msra.mxu0 0.0
        %408 = vmatpush.msra.mxu0 0.0
        %409 = vmatpush.msra.mxu0 0.0
        %410 = vmatpush.msra.mxu0 0.0
        %411 = vmatpush.msra.mxu0 0.0
        %412 = vmatpush.msra.mxu0 0.0
        %413 = vmatpush.msra.mxu0 0.0
        %414 = vmatpush.msra.mxu0 0.0
        %415 = vmatpush.msra.mxu0 0.0
        %416 = vmatpush.msra.mxu0 %v370
        %417 = vmatpush.msra.mxu0 %v369
        %418 = vmatmul.f32.gmra.mxu0 %v400
        %v419 = vpop.f32.mrf.mxu0
        %v420 = vadd.f32 0.0, %v419
        %421 = vdwg.mxu0
        %v422 = vadd.f32 %v396, %v420
        %v423 = vxor.u32 %v422, 2147483648
        %v424 = vmul.f32 %v423, 1.442695
        %v425 = vpow.pop %v424
        %v426 = vadd.f32 %v425, 1.0
        %v427 = vrcp.pop %v426
        %v428 = vmul.f32 %v426, %v427
        %v429 = vsub.f32 1.0, %v428
        %v430 = vmul.f32 %v427, %v429
        %v431 = vadd.f32 %v427, %v430
        %vm432 = vweird.f32 %v426
        %vm433 = vweird.f32 %v427
        %vm434 = vmor %vm432, %vm433
        %v435 = vsel %vm434, %v427, %v431
        %v436 = vand.u32 2147483647, %v426
        %vm437 = vcmp.eq.f32.partialorder %v436, 8.507059e+37
        %v438 = vand.u32 %v426, 2147483648
        %v439 = vor.u32 1.1754944e-38, %v438
        %v440 = vsel %vm437, %v439, %v435
        %v441 = vmul.f32 1.0, %v440
        %442 = vrot.lane.b32.xlu0 %v376, 32
        %v443 = vpop.permute.xlu0 %442
        %v445 = vadd.f32 %v420, %v443
        %447 = vrot.lane.b32.xlu0 %v445, 96
        %v448 = vpop.permute.xlu0 %447
        %v450 = vmul.f32 %v441, %v448
        %452 = vrot.lane.b32.xlu0 %v450, 32
        %v453 = vpop.permute.xlu0 %452
        %v455 = vadd.f32 %v396, %v453
        %v456 = vtanh.pop %v455
        %v457 = vsub.f32 1.0, %v441
        %459 = vrot.lane.b32.xlu0 %v456, 112
        %v460 = vpop.permute.xlu0 %459
        %v462 = vmul.f32 %v457, %v460
        %463 = vrot.lane.b32.xlu0 %v397, 16
        %v464 = vpop.permute.xlu0 %463
        %v466 = vmul.f32 %v441, %v464
        %v467 = vadd.f32 %v462, %v466
        %469 = vrot.lane.b32.xlu0 %v467, 112
        %v470 = vpop.permute.xlu0 %469
        %vm472 = vcmask 123904
        %473 = vst.msk [vmem:[%s331] sm:$0x3] %vm472, %v470
        %v474 = vmul.f32 %v389, %v394
        %v475 = vsel %vm398, %v470, 0
        %477 = vmatpush.msra.mxu0 0.0
        %478 = vmatpush.msra.mxu0 0.0
        %479 = vmatpush.msra.mxu0 0.0
        %480 = vmatpush.msra.mxu0 0.0
        %481 = vmatpush.msra.mxu0 0.0
        %482 = vmatpush.msra.mxu0 0.0
        %483 = vmatpush.msra.mxu0 0.0
        %484 = vmatpush.msra.mxu0 0.0
        %485 = vmatpush.msra.mxu0 0.0
        %486 = vmatpush.msra.mxu0 0.0
        %487 = vmatpush.msra.mxu0 0.0
        %488 = vmatpush.msra.mxu0 0.0
        %489 = vmatpush.msra.mxu0 0.0
        %490 = vmatpush.msra.mxu0 0.0
        %491 = vmatpush.msra.mxu0 %v382
        %492 = vmatpush.msra.mxu0 %v381
        %493 = vmatmul.f32.gmra.mxu0 %v475
        %v494 = vpop.f32.mrf.mxu0
        %v495 = vadd.f32 %v385, %v494
        %496 = vdwg.mxu0
        %v498 = vsel %vm398, %v474, 0
        %500 = vmatpush.msra.mxu0 0.0
        %501 = vmatpush.msra.mxu0 0.0
        %502 = vmatpush.msra.mxu0 0.0
        %503 = vmatpush.msra.mxu0 0.0
        %504 = vmatpush.msra.mxu0 0.0
        %505 = vmatpush.msra.mxu0 0.0
        %506 = vmatpush.msra.mxu0 0.0
        %507 = vmatpush.msra.mxu0 0.0
        %508 = vmatpush.msra.mxu0 0.0
        %509 = vmatpush.msra.mxu0 0.0
        %510 = vmatpush.msra.mxu0 0.0
        %511 = vmatpush.msra.mxu0 0.0
        %512 = vmatpush.msra.mxu0 0.0
        %513 = vmatpush.msra.mxu0 0.0
        %514 = vmatpush.msra.mxu0 %v373
        %515 = vmatpush.msra.mxu0 %v372
        %516 = vmatmul.f32.gmra.mxu0 %v498
        %v517 = vpop.f32.mrf.mxu0
        %v518 = vadd.f32 0.0, %v517
        %519 = vdwg.mxu0
        %v520 = vadd.f32 %v495, %v518
        %v521 = vxor.u32 %v520, 2147483648
        %v522 = vmul.f32 %v521, 1.442695
        %v523 = vpow.pop %v522
        %v524 = vadd.f32 %v523, 1.0
        %v525 = vrcp.pop %v524
        %v526 = vmul.f32 %v524, %v525
        %v527 = vsub.f32 1.0, %v526
        %v528 = vmul.f32 %v525, %v527
        %v529 = vadd.f32 %v525, %v528
        %vm530 = vweird.f32 %v524
        %vm531 = vweird.f32 %v525
        %vm532 = vmor %vm530, %vm531
        %v533 = vsel %vm532, %v525, %v529
        %v534 = vand.u32 2147483647, %v524
        %vm535 = vcmp.eq.f32.partialorder %v534, 8.507059e+37
        %v536 = vand.u32 %v524, 2147483648
        %v537 = vor.u32 1.1754944e-38, %v536
        %v538 = vsel %vm535, %v537, %v533
        %v539 = vmul.f32 1.0, %v538
        %540 = vrot.lane.b32.xlu0 %v380, 32
        %v541 = vpop.permute.xlu0 %540
        %v543 = vadd.f32 %v518, %v541
        %545 = vrot.lane.b32.xlu0 %v543, 96
        %v546 = vpop.permute.xlu0 %545
        %v548 = vmul.f32 %v539, %v546
        %550 = vrot.lane.b32.xlu0 %v548, 32
        %v551 = vpop.permute.xlu0 %550
        %v553 = vadd.f32 %v495, %v551
        %v554 = vtanh.pop %v553
        %v555 = vsub.f32 1.0, %v539
        %557 = vrot.lane.b32.xlu0 %v554, 112
        %v558 = vpop.permute.xlu0 %557
        %v560 = vmul.f32 %v555, %v558
        %561 = vrot.lane.b32.xlu0 %v474, 16
        %v562 = vpop.permute.xlu0 %561
        %v564 = vmul.f32 %v539, %v562
        %v565 = vadd.f32 %v560, %v564
        %vm566 = vcmask 255104
        %567 = vst.msk [vmem:[%s331] sm:$0x3] %vm566, %v565
        %s568 = scalar_lea.vmem %s339, 2
        %v569 = vld [vmem:[%s568] sm:$0x3]
        %571 = vset.pattern.permute.xlu0 0
        %572 = vperm.xlu0 %571, %v569
        %v573 = vpop.permute.xlu0 %572
        %s575 = scalar_lea.vmem %s348, 2
        %v576 = vld [vmem:[%s575] sm:$0x3]
        %v577 = vmul.f32 %v467, %v573
        %579 = vrot.lane.b32.xlu0 %v577, 112
        %v580 = vpop.permute.xlu0 %579
        %v581 = vsel %vm398, %v580, 0
        %583 = vmatpush.msra.mxu0 0.0
        %584 = vmatpush.msra.mxu0 0.0
        %585 = vmatpush.msra.mxu0 0.0
        %586 = vmatpush.msra.mxu0 0.0
        %587 = vmatpush.msra.mxu0 0.0
        %588 = vmatpush.msra.mxu0 0.0
        %589 = vmatpush.msra.mxu0 0.0
        %590 = vmatpush.msra.mxu0 0.0
        %591 = vmatpush.msra.mxu0 0.0
        %592 = vmatpush.msra.mxu0 0.0
        %593 = vmatpush.msra.mxu0 0.0
        %594 = vmatpush.msra.mxu0 0.0
        %595 = vmatpush.msra.mxu0 0.0
        %596 = vmatpush.msra.mxu0 0.0
        %597 = vmatpush.msra.mxu0 %v370
        %598 = vmatpush.msra.mxu0 %v369
        %599 = vmatmul.f32.gmra.mxu0 %v581
        %v600 = vpop.f32.mrf.mxu0
        %v601 = vadd.f32 0.0, %v600
        %602 = vdwg.mxu0
        %v603 = vadd.f32 %v576, %v601
        %v604 = vxor.u32 %v603, 2147483648
        %v605 = vmul.f32 %v604, 1.442695
        %v606 = vpow.pop %v605
        %v607 = vadd.f32 %v606, 1.0
        %v608 = vrcp.pop %v607
        %v609 = vmul.f32 %v607, %v608
        %v610 = vsub.f32 1.0, %v609
        %v611 = vmul.f32 %v608, %v610
        %v612 = vadd.f32 %v608, %v611
        %vm613 = vweird.f32 %v607
        %vm614 = vweird.f32 %v608
        %vm615 = vmor %vm613, %vm614
        %v616 = vsel %vm615, %v608, %v612
        %v617 = vand.u32 2147483647, %v607
        %vm618 = vcmp.eq.f32.partialorder %v617, 8.507059e+37
        %v619 = vand.u32 %v607, 2147483648
        %v620 = vor.u32 1.1754944e-38, %v619
        %v621 = vsel %vm618, %v620, %v616
        %v622 = vmul.f32 1.0, %v621
        %v623 = vadd.f32 %v601, %v443
        %625 = vrot.lane.b32.xlu0 %v623, 96
        %v626 = vpop.permute.xlu0 %625
        %v628 = vmul.f32 %v622, %v626
        %630 = vrot.lane.b32.xlu0 %v628, 32
        %v631 = vpop.permute.xlu0 %630
        %v633 = vadd.f32 %v576, %v631
        %v634 = vtanh.pop %v633
        %v635 = vsub.f32 1.0, %v622
        %637 = vrot.lane.b32.xlu0 %v634, 112
        %v638 = vpop.permute.xlu0 %637
        %v640 = vmul.f32 %v635, %v638
        %v641 = vmul.f32 %v622, %v577
        %v642 = vadd.f32 %v640, %v641
        %644 = vrot.lane.b32.xlu0 %v642, 112
        %v645 = vpop.permute.xlu0 %644
        %s647 = scalar_lea.vmem %s331, 2 [#allocation3]
        %648 = vst.msk [vmem:[%s647] sm:$0x3] %vm472, %v645
        %v649 = vmul.f32 %v565, %v573
        %v650 = vsel %vm398, %v645, 0
        %652 = vmatpush.msra.mxu0 0.0
        %653 = vmatpush.msra.mxu0 0.0
        %654 = vmatpush.msra.mxu0 0.0
        %655 = vmatpush.msra.mxu0 0.0
        %656 = vmatpush.msra.mxu0 0.0
        %657 = vmatpush.msra.mxu0 0.0
        %658 = vmatpush.msra.mxu0 0.0
        %659 = vmatpush.msra.mxu0 0.0
        %660 = vmatpush.msra.mxu0 0.0
        %661 = vmatpush.msra.mxu0 0.0
        %662 = vmatpush.msra.mxu0 0.0
        %663 = vmatpush.msra.mxu0 0.0
        %664 = vmatpush.msra.mxu0 0.0
        %665 = vmatpush.msra.mxu0 0.0
        %666 = vmatpush.msra.mxu0 %v382
        %667 = vmatpush.msra.mxu0 %v381
        %668 = vmatmul.f32.gmra.mxu0 %v650
        %v669 = vpop.f32.mrf.mxu0
        %v670 = vadd.f32 %v385, %v669
        %671 = vdwg.mxu0
        %673 = vrot.lane.b32.xlu0 %v649, 112
        %v674 = vpop.permute.xlu0 %673
        %v675 = vsel %vm398, %v674, 0
        %677 = vmatpush.msra.mxu0 0.0
        %678 = vmatpush.msra.mxu0 0.0
        %679 = vmatpush.msra.mxu0 0.0
        %680 = vmatpush.msra.mxu0 0.0
        %681 = vmatpush.msra.mxu0 0.0
        %682 = vmatpush.msra.mxu0 0.0
        %683 = vmatpush.msra.mxu0 0.0
        %684 = vmatpush.msra.mxu0 0.0
        %685 = vmatpush.msra.mxu0 0.0
        %686 = vmatpush.msra.mxu0 0.0
        %687 = vmatpush.msra.mxu0 0.0
        %688 = vmatpush.msra.mxu0 0.0
        %689 = vmatpush.msra.mxu0 0.0
        %690 = vmatpush.msra.mxu0 0.0
        %691 = vmatpush.msra.mxu0 %v373
        %692 = vmatpush.msra.mxu0 %v372
        %693 = vmatmul.f32.gmra.mxu0 %v675
        %v694 = vpop.f32.mrf.mxu0
        %v695 = vadd.f32 0.0, %v694
        %696 = vdwg.mxu0
        %v697 = vadd.f32 %v670, %v695
        %v698 = vxor.u32 %v697, 2147483648
        %v699 = vmul.f32 %v698, 1.442695
        %v700 = vpow.pop %v699
        %v701 = vadd.f32 %v700, 1.0
        %v702 = vrcp.pop %v701
        %v703 = vmul.f32 %v701, %v702
        %v704 = vsub.f32 1.0, %v703
        %v705 = vmul.f32 %v702, %v704
        %v706 = vadd.f32 %v702, %v705
        %vm707 = vweird.f32 %v701
        %vm708 = vweird.f32 %v702
        %vm709 = vmor %vm707, %vm708
        %v710 = vsel %vm709, %v702, %v706
        %v711 = vand.u32 2147483647, %v701
        %vm712 = vcmp.eq.f32.partialorder %v711, 8.507059e+37
        %v713 = vand.u32 %v701, 2147483648
        %v714 = vor.u32 1.1754944e-38, %v713
        %v715 = vsel %vm712, %v714, %v710
        %v716 = vmul.f32 1.0, %v715
        %v717 = vadd.f32 %v695, %v541
        %719 = vrot.lane.b32.xlu0 %v717, 96
        %v720 = vpop.permute.xlu0 %719
        %v722 = vmul.f32 %v716, %v720
        %724 = vrot.lane.b32.xlu0 %v722, 32
        %v725 = vpop.permute.xlu0 %724
        %v727 = vadd.f32 %v670, %v725
        %v728 = vtanh.pop %v727
        %v729 = vsub.f32 1.0, %v716
        %731 = vrot.lane.b32.xlu0 %v728, 112
        %v732 = vpop.permute.xlu0 %731
        %v734 = vmul.f32 %v729, %v732
        %v735 = vmul.f32 %v716, %v649
        %v736 = vadd.f32 %v734, %v735
        %737 = vst.msk [vmem:[%s647] sm:$0x3] %vm566, %v736
        %s738 = scalar_lea.vmem %s339, 4
        %v739 = vld [vmem:[%s738] sm:$0x3]
        %741 = vset.pattern.permute.xlu0 0
        %742 = vperm.xlu0 %741, %v739
        %v743 = vpop.permute.xlu0 %742
        %s745 = scalar_lea.vmem %s348, 4
        %v746 = vld [vmem:[%s745] sm:$0x3]
        %v747 = vmul.f32 %v642, %v743
        %749 = vrot.lane.b32.xlu0 %v747, 112
        %v750 = vpop.permute.xlu0 %749
        %v751 = vsel %vm398, %v750, 0
        %753 = vmatpush.msra.mxu0 0.0
        %754 = vmatpush.msra.mxu0 0.0
        %755 = vmatpush.msra.mxu0 0.0
        %756 = vmatpush.msra.mxu0 0.0
        %757 = vmatpush.msra.mxu0 0.0
        %758 = vmatpush.msra.mxu0 0.0
        %759 = vmatpush.msra.mxu0 0.0
        %760 = vmatpush.msra.mxu0 0.0
        %761 = vmatpush.msra.mxu0 0.0
        %762 = vmatpush.msra.mxu0 0.0
        %763 = vmatpush.msra.mxu0 0.0
        %764 = vmatpush.msra.mxu0 0.0
        %765 = vmatpush.msra.mxu0 0.0
        %766 = vmatpush.msra.mxu0 0.0
        %767 = vmatpush.msra.mxu0 %v370
        %768 = vmatpush.msra.mxu0 %v369
        %769 = vmatmul.f32.gmra.mxu0 %v751
        %v770 = vpop.f32.mrf.mxu0
        %v771 = vadd.f32 0.0, %v770
        %772 = vdwg.mxu0
        %v773 = vadd.f32 %v746, %v771
        %v774 = vxor.u32 %v773, 2147483648
        %v775 = vmul.f32 %v774, 1.442695
        %v776 = vpow.pop %v775
        %v777 = vadd.f32 %v776, 1.0
        %v778 = vrcp.pop %v777
        %v779 = vmul.f32 %v777, %v778
        %v780 = vsub.f32 1.0, %v779
        %v781 = vmul.f32 %v778, %v780
        %v782 = vadd.f32 %v778, %v781
        %vm783 = vweird.f32 %v777
        %vm784 = vweird.f32 %v778
        %vm785 = vmor %vm783, %vm784
        %v786 = vsel %vm785, %v778, %v782
        %v787 = vand.u32 2147483647, %v777
        %vm788 = vcmp.eq.f32.partialorder %v787, 8.507059e+37
        %v789 = vand.u32 %v777, 2147483648
        %v790 = vor.u32 1.1754944e-38, %v789
        %v791 = vsel %vm788, %v790, %v786
        %v792 = vmul.f32 1.0, %v791
        %v793 = vadd.f32 %v771, %v443
        %795 = vrot.lane.b32.xlu0 %v793, 96
        %v796 = vpop.permute.xlu0 %795
        %v798 = vmul.f32 %v792, %v796
        %800 = vrot.lane.b32.xlu0 %v798, 32
        %v801 = vpop.permute.xlu0 %800
        %v803 = vadd.f32 %v746, %v801
        %v804 = vtanh.pop %v803
        %v805 = vsub.f32 1.0, %v792
        %807 = vrot.lane.b32.xlu0 %v804, 112
        %v808 = vpop.permute.xlu0 %807
        %v810 = vmul.f32 %v805, %v808
        %v811 = vmul.f32 %v792, %v747
        %v812 = vadd.f32 %v810, %v811
        %814 = vrot.lane.b32.xlu0 %v812, 112
        %v815 = vpop.permute.xlu0 %814
        %s817 = scalar_lea.vmem %s331, 4 [#allocation3]
        %818 = vst.msk [vmem:[%s817] sm:$0x3] %vm472, %v815
        %v819 = vmul.f32 %v736, %v743
        %v820 = vsel %vm398, %v815, 0
        %822 = vmatpush.msra.mxu0 0.0
        %823 = vmatpush.msra.mxu0 0.0
        %824 = vmatpush.msra.mxu0 0.0
        %825 = vmatpush.msra.mxu0 0.0
        %826 = vmatpush.msra.mxu0 0.0
        %827 = vmatpush.msra.mxu0 0.0
        %828 = vmatpush.msra.mxu0 0.0
        %829 = vmatpush.msra.mxu0 0.0
        %830 = vmatpush.msra.mxu0 0.0
        %831 = vmatpush.msra.mxu0 0.0
        %832 = vmatpush.msra.mxu0 0.0
        %833 = vmatpush.msra.mxu0 0.0
        %834 = vmatpush.msra.mxu0 0.0
        %835 = vmatpush.msra.mxu0 0.0
        %836 = vmatpush.msra.mxu0 %v382
        %837 = vmatpush.msra.mxu0 %v381
        %838 = vmatmul.f32.gmra.mxu0 %v820
        %v839 = vpop.f32.mrf.mxu0
        %v840 = vadd.f32 %v385, %v839
        %841 = vdwg.mxu0
        %843 = vrot.lane.b32.xlu0 %v819, 112
        %v844 = vpop.permute.xlu0 %843
        %v845 = vsel %vm398, %v844, 0
        %847 = vmatpush.msra.mxu0 0.0
        %848 = vmatpush.msra.mxu0 0.0
        %849 = vmatpush.msra.mxu0 0.0
        %850 = vmatpush.msra.mxu0 0.0
        %851 = vmatpush.msra.mxu0 0.0
        %852 = vmatpush.msra.mxu0 0.0
        %853 = vmatpush.msra.mxu0 0.0
        %854 = vmatpush.msra.mxu0 0.0
        %855 = vmatpush.msra.mxu0 0.0
        %856 = vmatpush.msra.mxu0 0.0
        %857 = vmatpush.msra.mxu0 0.0
        %858 = vmatpush.msra.mxu0 0.0
        %859 = vmatpush.msra.mxu0 0.0
        %860 = vmatpush.msra.mxu0 0.0
        %861 = vmatpush.msra.mxu0 %v373
        %862 = vmatpush.msra.mxu0 %v372
        %863 = vmatmul.f32.gmra.mxu0 %v845
        %v864 = vpop.f32.mrf.mxu0
        %v865 = vadd.f32 0.0, %v864
        %866 = vdwg.mxu0
        %v867 = vadd.f32 %v840, %v865
        %v868 = vxor.u32 %v867, 2147483648
        %v869 = vmul.f32 %v868, 1.442695
        %v870 = vpow.pop %v869
        %v871 = vadd.f32 %v870, 1.0
        %v872 = vrcp.pop %v871
        %v873 = vmul.f32 %v871, %v872
        %v874 = vsub.f32 1.0, %v873
        %v875 = vmul.f32 %v872, %v874
        %v876 = vadd.f32 %v872, %v875
        %vm877 = vweird.f32 %v871
        %vm878 = vweird.f32 %v872
        %vm879 = vmor %vm877, %vm878
        %v880 = vsel %vm879, %v872, %v876
        %v881 = vand.u32 2147483647, %v871
        %vm882 = vcmp.eq.f32.partialorder %v881, 8.507059e+37
        %v883 = vand.u32 %v871, 2147483648
        %v884 = vor.u32 1.1754944e-38, %v883
        %v885 = vsel %vm882, %v884, %v880
        %v886 = vmul.f32 1.0, %v885
        %v887 = vadd.f32 %v865, %v541
        %889 = vrot.lane.b32.xlu0 %v887, 96
        %v890 = vpop.permute.xlu0 %889
        %v892 = vmul.f32 %v886, %v890
        %894 = vrot.lane.b32.xlu0 %v892, 32
        %v895 = vpop.permute.xlu0 %894
        %v897 = vadd.f32 %v840, %v895
        %v898 = vtanh.pop %v897
        %v899 = vsub.f32 1.0, %v886
        %901 = vrot.lane.b32.xlu0 %v898, 112
        %v902 = vpop.permute.xlu0 %901
        %v904 = vmul.f32 %v899, %v902
        %v905 = vmul.f32 %v886, %v819
        %v906 = vadd.f32 %v904, %v905
        %907 = vst.msk [vmem:[%s817] sm:$0x3] %vm566, %v906
        %s908 = scalar_lea.vmem %s339, 6
        %v909 = vld [vmem:[%s908] sm:$0x3]
        %911 = vset.pattern.permute.xlu0 0
        %912 = vperm.xlu0 %911, %v909
        %v913 = vpop.permute.xlu0 %912
        %s915 = scalar_lea.vmem %s348, 6
        %v916 = vld [vmem:[%s915] sm:$0x3]
        %v917 = vmul.f32 %v812, %v913
        %919 = vrot.lane.b32.xlu0 %v917, 112
        %v920 = vpop.permute.xlu0 %919
        %v921 = vsel %vm398, %v920, 0
        %923 = vmatpush.msra.mxu0 0.0
        %924 = vmatpush.msra.mxu0 0.0
        %925 = vmatpush.msra.mxu0 0.0
        %926 = vmatpush.msra.mxu0 0.0
        %927 = vmatpush.msra.mxu0 0.0
        %928 = vmatpush.msra.mxu0 0.0
        %929 = vmatpush.msra.mxu0 0.0
        %930 = vmatpush.msra.mxu0 0.0
        %931 = vmatpush.msra.mxu0 0.0
        %932 = vmatpush.msra.mxu0 0.0
        %933 = vmatpush.msra.mxu0 0.0
        %934 = vmatpush.msra.mxu0 0.0
        %935 = vmatpush.msra.mxu0 0.0
        %936 = vmatpush.msra.mxu0 0.0
        %937 = vmatpush.msra.mxu0 %v370
        %938 = vmatpush.msra.mxu0 %v369
        %939 = vmatmul.f32.gmra.mxu0 %v921
        %v940 = vpop.f32.mrf.mxu0
        %v941 = vadd.f32 0.0, %v940
        %942 = vdwg.mxu0
        %v943 = vadd.f32 %v916, %v941
        %v944 = vxor.u32 %v943, 2147483648
        %v945 = vmul.f32 %v944, 1.442695
        %v946 = vpow.pop %v945
        %v947 = vadd.f32 %v946, 1.0
        %v948 = vrcp.pop %v947
        %v949 = vmul.f32 %v947, %v948
        %v950 = vsub.f32 1.0, %v949
        %v951 = vmul.f32 %v948, %v950
        %v952 = vadd.f32 %v948, %v951
        %vm953 = vweird.f32 %v947
        %vm954 = vweird.f32 %v948
        %vm955 = vmor %vm953, %vm954
        %v956 = vsel %vm955, %v948, %v952
        %v957 = vand.u32 2147483647, %v947
        %vm958 = vcmp.eq.f32.partialorder %v957, 8.507059e+37
        %v959 = vand.u32 %v947, 2147483648
        %v960 = vor.u32 1.1754944e-38, %v959
        %v961 = vsel %vm958, %v960, %v956
        %v962 = vmul.f32 1.0, %v961
        %v963 = vadd.f32 %v941, %v443
        %965 = vrot.lane.b32.xlu0 %v963, 96
        %v966 = vpop.permute.xlu0 %965
        %v968 = vmul.f32 %v962, %v966
        %970 = vrot.lane.b32.xlu0 %v968, 32
        %v971 = vpop.permute.xlu0 %970
        %v973 = vadd.f32 %v916, %v971
        %v974 = vtanh.pop %v973
        %v975 = vsub.f32 1.0, %v962
        %977 = vrot.lane.b32.xlu0 %v974, 112
        %v978 = vpop.permute.xlu0 %977
        %v980 = vmul.f32 %v975, %v978
        %v981 = vmul.f32 %v962, %v917
        %v982 = vadd.f32 %v980, %v981
        %984 = vrot.lane.b32.xlu0 %v982, 112
        %v985 = vpop.permute.xlu0 %984
        %s987 = scalar_lea.vmem %s331, 6 [#allocation3]
        %988 = vst.msk [vmem:[%s987] sm:$0x3] %vm472, %v985
        %v989 = vmul.f32 %v906, %v913
        %v990 = vsel %vm398, %v985, 0
        %992 = vmatpush.msra.mxu0 0.0
        %993 = vmatpush.msra.mxu0 0.0
        %994 = vmatpush.msra.mxu0 0.0
        %995 = vmatpush.msra.mxu0 0.0
        %996 = vmatpush.msra.mxu0 0.0
        %997 = vmatpush.msra.mxu0 0.0
        %998 = vmatpush.msra.mxu0 0.0
        %999 = vmatpush.msra.mxu0 0.0
        %1000 = vmatpush.msra.mxu0 0.0
        %1001 = vmatpush.msra.mxu0 0.0
        %1002 = vmatpush.msra.mxu0 0.0
        %1003 = vmatpush.msra.mxu0 0.0
        %1004 = vmatpush.msra.mxu0 0.0
        %1005 = vmatpush.msra.mxu0 0.0
        %1006 = vmatpush.msra.mxu0 %v382
        %1007 = vmatpush.msra.mxu0 %v381
        %1008 = vmatmul.f32.gmra.mxu0 %v990
        %v1009 = vpop.f32.mrf.mxu0
        %v1010 = vadd.f32 %v385, %v1009
        %1011 = vdwg.mxu0
        %1013 = vrot.lane.b32.xlu0 %v989, 112
        %v1014 = vpop.permute.xlu0 %1013
        %v1015 = vsel %vm398, %v1014, 0
        %1017 = vmatpush.msra.mxu0 0.0
        %1018 = vmatpush.msra.mxu0 0.0
        %1019 = vmatpush.msra.mxu0 0.0
        %1020 = vmatpush.msra.mxu0 0.0
        %1021 = vmatpush.msra.mxu0 0.0
        %1022 = vmatpush.msra.mxu0 0.0
        %1023 = vmatpush.msra.mxu0 0.0
        %1024 = vmatpush.msra.mxu0 0.0
        %1025 = vmatpush.msra.mxu0 0.0
        %1026 = vmatpush.msra.mxu0 0.0
        %1027 = vmatpush.msra.mxu0 0.0
        %1028 = vmatpush.msra.mxu0 0.0
        %1029 = vmatpush.msra.mxu0 0.0
        %1030 = vmatpush.msra.mxu0 0.0
        %1031 = vmatpush.msra.mxu0 %v373
        %1032 = vmatpush.msra.mxu0 %v372
        %1033 = vmatmul.f32.gmra.mxu0 %v1015
        %v1034 = vpop.f32.mrf.mxu0
        %v1035 = vadd.f32 0.0, %v1034
        %1036 = vdwg.mxu0
        %v1037 = vadd.f32 %v1010, %v1035
        %v1038 = vxor.u32 %v1037, 2147483648
        %v1039 = vmul.f32 %v1038, 1.442695
        %v1040 = vpow.pop %v1039
        %v1041 = vadd.f32 %v1040, 1.0
        %v1042 = vrcp.pop %v1041
        %v1043 = vmul.f32 %v1041, %v1042
        %v1044 = vsub.f32 1.0, %v1043
        %v1045 = vmul.f32 %v1042, %v1044
        %v1046 = vadd.f32 %v1042, %v1045
        %vm1047 = vweird.f32 %v1041
        %vm1048 = vweird.f32 %v1042
        %vm1049 = vmor %vm1047, %vm1048
        %v1050 = vsel %vm1049, %v1042, %v1046
        %v1051 = vand.u32 2147483647, %v1041
        %vm1052 = vcmp.eq.f32.partialorder %v1051, 8.507059e+37
        %v1053 = vand.u32 %v1041, 2147483648
        %v1054 = vor.u32 1.1754944e-38, %v1053
        %v1055 = vsel %vm1052, %v1054, %v1050
        %v1056 = vmul.f32 1.0, %v1055
        %v1057 = vadd.f32 %v1035, %v541
        %1059 = vrot.lane.b32.xlu0 %v1057, 96
        %v1060 = vpop.permute.xlu0 %1059
        %v1062 = vmul.f32 %v1056, %v1060
        %1064 = vrot.lane.b32.xlu0 %v1062, 32
        %v1065 = vpop.permute.xlu0 %1064
        %v1067 = vadd.f32 %v1010, %v1065
        %v1068 = vtanh.pop %v1067
        %v1069 = vsub.f32 1.0, %v1056
        %1071 = vrot.lane.b32.xlu0 %v1068, 112
        %v1072 = vpop.permute.xlu0 %1071
        %v1074 = vmul.f32 %v1069, %v1072
        %v1075 = vmul.f32 %v1056, %v989
        %v1076 = vadd.f32 %v1074, %v1075
        %1077 = vst.msk [vmem:[%s987] sm:$0x3] %vm566, %v1076
        %1078 = vst.msk [vmem:[#allocation2] sm:$0x3] %vm472, %v985
        %1080 = vrot.lane.b32.xlu0 %v1076, 112
        %v1081 = vpop.permute.xlu0 %1080
        %1083 = vst.msk [vmem:[%s388] sm:$0x3] %vm472, %v1081
        %s1084 = sand.u32 %s209, 1
        %s1085 = scalar_lea.sflag [#allocation4], %s1084
        %s1086 = sand.u32 %s209, 1
        %s1087 = smul.addr %s1086, 8
        %s1088 = scalar_lea.vmem [#allocation3], %s1087
        // Predicated region
        $region53: #{recurrent_model_forward.1} parent=47 // pred_check
          %p1089 = pneg %p219
        $region54: #{recurrent_model_forward.1} parent=47 // pred_check_branch
          %1091 = sbr.rel (%p1089) target = $region56
        $region55: #{recurrent_model_forward.1} parent=47 // pred_region
          %s1092 = smul.u32 4, %s26
          %1094 = vsyncadd %s1085, 0
          %s1095 = sadd.s32 %s25, %s1092
          %s1096 = smul.addr %s1095, 2
          %s1097 = scalar_lea.hbm %s7, %s1096
          %s1098 = sshll.u32 %s1088, 4
          %s1099 = int_to_ptr.vmem [resolvable:$true] %s1098
          %s1100 = sshll.u32 %s1097, 4
          %s1101 = int_to_ptr.hbm [resolvable:$true] %s1100
          %1106 = dma.vmem_to_hbm [thread:$0]  %s1099, 128, %s1101, %s1085, 32, 32, 2
        $region56: #{recurrent_model_forward.1} parent=47 // pred_fallthru
          _
      $region48: #{recurrent_model_forward.1} parent=5 // pred_fallthru
        _
      %p1107 = scmp.le.s32.totalorder 2, %s16
      // Predicated region
      $region57: #{recurrent_model_forward.1} parent=5 // pred_check
        %p1108 = pneg %p1107
      $region58: #{recurrent_model_forward.1} parent=5 // pred_check_branch
        %1110 = sbr.rel (%p1108) target = $region60
      $region59: #{recurrent_model_forward.1} parent=5 // pred_region
        %s1111 = ssub.s32 %s16, 2
        // Predicated region
        $region61: #{recurrent_model_forward.1} parent=59 // pred_check
          %p1112 = pneg %p225
        $region62: #{recurrent_model_forward.1} parent=59 // pred_check_branch
          %1114 = sbr.rel (%p1112) target = $region64
        $region63: #{recurrent_model_forward.1} parent=59 // pred_region
          %s1115 = sand.u32 %s210, 1
          %s1116 = scalar_lea.sflag [#allocation4], %s1115
          %s1117 = sand.u32 %s210, 1
          %s1118 = smul.addr %s1117, 8
          %s1119 = scalar_lea.vmem [#allocation3], %s1118
          %1121 = dma.done %s1116, 128
        $region64: #{recurrent_model_forward.1} parent=59 // pred_fallthru
          _
      $region60: #{recurrent_model_forward.1} parent=5 // pred_fallthru
        _
    $region6: #{recurrent_model_forward.1} parent=1 // loop_footer
      %s20 = sadd.s32 1, %s16
    $region7: #{recurrent_model_forward.1} parent=1 // loop_footer_branch
      %15 = sbr.rel target = $region3
    $region8: #{recurrent_model_forward.1} parent=1 // loop_exit
      _
    %1122 = vsyncpa [#allocation4], 1
    %s1123 = scalar_lea.sflag [#allocation4], 1
    %1124 = vsyncpa %s1123, 1

// kernel: recurrent_model_forward.1
$region0: #{recurrent_model_forward.1}
  #allocation0 [shape = 'u32[]', space=smem, size = 0x4, offset = 0x4, fixed_abs, tag = 'smem constant byte address 0x4 - core index']
  #allocation1 [shape = 'u32[72,128]{1,0:T(1,128)}', space=vmem, size = 0x9000, scoped, tag = 'internal scratch']
  #allocation2 [shape = 'f32[2,2,16]{2,1,0:T(2,128)}', space=vmem, size = 0x800, scoped, tag = 'scratch operand']
  %s0 = inlined_call_operand.vmem [shape: f32[8,2,1], index: 0, kind: input, shape index: {}]
  %s1 = inlined_call_operand.vmem [shape: f32[8,2,48], index: 1, kind: input, shape index: {}]
  %s2 = inlined_call_operand.vmem [shape: f32[2,32], index: 2, kind: input, shape index: {}]
  %s3 = inlined_call_operand.vmem [shape: f32[2,16,48], index: 3, kind: input, shape index: {}]
  %s4 = inlined_call_operand.vmem [shape: f32[2,1,16], index: 4, kind: input, shape index: {}]
  %s5 = inlined_call_operand.vmem [shape: f32[1,16,48], index: 5, kind: input, shape index: {}]
  %s6 = inlined_call_operand.vmem [shape: f32[1,1,48], index: 6, kind: input, shape index: {}]
  %s7 = inlined_call_operand.hbm [shape: f32[8,2,32], index: 7, kind: output, shape index: {}]
  %s8 = sld [smem:[#allocation0]]
  $region65: #{recurrent_model_forward.1} parent=0
    _
  %s10 = ssub.s32 1, %s8
  %s11 = scalar_select 0, %s10, %s8
  $region1: #{recurrent_model_forward.1} parent=0
    #allocation3 [shape = 'u8[8192]{0}', space=vmem, size = 0x2000, scoped, tag = 'output window, operand 0']
    #allocation4 [shape = 's32[2]{0}', space=sflag, size = 0x8, scoped, tag = 'scoped memory for recurrent_model_forward.1']
    %12 = vsyncpa [#allocation4], 0
    %s13 = scalar_lea.sflag [#allocation4], 1
    %14 = vsyncpa %s13, 0
    loop: start=0, step=1, limit=4
    $region2: #{recurrent_model_forward.1} parent=1 // loop_pre_header
      _
    $region3: #{recurrent_model_forward.1} parent=1 // loop_header
      %s16 = sphi 0, %s20
      %p17 = scmp.ge.s32.totalorder %s16, 4
      %s23 = sphi 0, %s35
      %s24 = sphi 0, %s31
      %s25 = sphi 0, %s23
      %s26 = sphi 0, %s24
      %s27 = sphi 0, %s25
      %s28 = sphi 0, %s26
      %s40 = sphi 0, %s42
      %s43 = sphi 0, %s40
      %s44 = sphi 0, %s43
      %s60 = sphi 0, %s44
      %s68 = sphi 0, %s70
      %s71 = sphi 0, %s68
      %s72 = sphi 0, %s71
      %s88 = sphi 0, %s72
      %s94 = sphi 0, %s96
      %s97 = sphi 0, %s94
      %s98 = sphi 0, %s97
      %s114 = sphi 0, %s98
      %s118 = sphi 0, %s118
      %s120 = sphi 0, %s118
      %s121 = sphi 0, %s120
      %s135 = sphi 0, %s121
      %s139 = sphi 0, %s139
      %s141 = sphi 0, %s139
      %s142 = sphi 0, %s141
      %s156 = sphi 0, %s142
      %s160 = sphi 0, %s160
      %s162 = sphi 0, %s160
      %s163 = sphi 0, %s162
      %s177 = sphi 0, %s163
      %s181 = sphi 0, %s181
      %s183 = sphi 0, %s181
      %s184 = sphi 0, %s183
      %s198 = sphi 0, %s184
      %s206 = sphi 0, %s208
      %s209 = sphi 0, %s206
      %s210 = sphi 0, %s209
      %s226 = sphi 0, %s210
    $region4: #{recurrent_model_forward.1} parent=1 // loop_header_branch
      %19 = sbr.rel (%p17) target = $region8
    $region5: #{recurrent_model_forward.1} parent=1 // loop_body
      %s21 = ssub.s32 %s16, 1
      %s22 = ssub.s32 %s16, 2
      %s29 = sadd.s32 1, %s24
      %p30 = scmp.ge.s32.totalorder %s29, 2
      %s31 = scalar_select %p30, 0, %s29
      %s32 = sadd.s32 1, %s23
      %s33 = scalar_select %p30, %s32, %s23
      %p34 = scmp.ge.s32.totalorder %s33, 1
      %s35 = scalar_select %p34, 0, %s33
      %s36 = ssub.s32 %s24, %s31
      %s37 = ssub.s32 %s23, %s35
      %s38 = sor.u32 %s36, %s37
      %p39 = scmp.eq.s32.totalorder %s38, 0
      %s41 = sadd.s32 %s40, 1
      %s42 = scalar_select %p39, %s40, %s41
      %p45 = pneg %p39
      %p46 = scmp.eq.s32.totalorder %s16, 1
      %p47 = por %p45, %p46
      %p48 = scmp.ne.s32.totalorder %s40, %s43
      %p49 = scmp.eq.s32.totalorder %s16, 0
      %p50 = por %p48, %p49
      %p51 = scmp.ne.s32.totalorder %s40, %s43
      %p52 = scmp.eq.s32.totalorder %s21, 1
      %p53 = por %p51, %p52
      %p54 = scmp.ne.s32.totalorder %s43, %s44
      %p55 = scmp.eq.s32.totalorder %s21, 0
      %p56 = por %p54, %p55
      %p57 = scmp.ne.s32.totalorder %s43, %s44
      %p58 = scmp.eq.s32.totalorder %s22, 1
      %p59 = por %p57, %p58
      %p61 = scmp.ne.s32.totalorder %s44, %s60
      %p62 = scmp.eq.s32.totalorder %s22, 0
      %p63 = por %p61, %p62
      %s64 = ssub.s32 %s24, %s31
      %s65 = ssub.s32 %s23, %s35
      %s66 = sor.u32 %s64, %s65
      %p67 = scmp.eq.s32.totalorder %s66, 0
      %s69 = sadd.s32 %s68, 1
      %s70 = scalar_select %p67, %s68, %s69
      %p73 = pneg %p67
      %p74 = scmp.eq.s32.totalorder %s16, 1
      %p75 = por %p73, %p74
      %p76 = scmp.ne.s32.totalorder %s68, %s71
      %p77 = scmp.eq.s32.totalorder %s16, 0
      %p78 = por %p76, %p77
      %p79 = scmp.ne.s32.totalorder %s68, %s71
      %p80 = scmp.eq.s32.totalorder %s21, 1
      %p81 = por %p79, %p80
      %p82 = scmp.ne.s32.totalorder %s71, %s72
      %p83 = scmp.eq.s32.totalorder %s21, 0
      %p84 = por %p82, %p83
      %p85 = scmp.ne.s32.totalorder %s71, %s72
      %p86 = scmp.eq.s32.totalorder %s22, 1
      %p87 = por %p85, %p86
      %p89 = scmp.ne.s32.totalorder %s72, %s88
      %p90 = scmp.eq.s32.totalorder %s22, 0
      %p91 = por %p89, %p90
      %s92 = ssub.s32 %s23, %s35
      %p93 = scmp.eq.s32.totalorder %s92, 0
      %s95 = sadd.s32 %s94, 1
      %s96 = scalar_select %p93, %s94, %s95
      %p99 = pneg %p93
      %p100 = scmp.eq.s32.totalorder %s16, 1
      %p101 = por %p99, %p100
      %p102 = scmp.ne.s32.totalorder %s94, %s97
      %p103 = scmp.eq.s32.totalorder %s16, 0
      %p104 = por %p102, %p103
      %p105 = scmp.ne.s32.totalorder %s94, %s97
      %p106 = scmp.eq.s32.totalorder %s21, 1
      %p107 = por %p105, %p106
      %p108 = scmp.ne.s32.totalorder %s97, %s98
      %p109 = scmp.eq.s32.totalorder %s21, 0
      %p110 = por %p108, %p109
      %p111 = scmp.ne.s32.totalorder %s97, %s98
      %p112 = scmp.eq.s32.totalorder %s22, 1
      %p113 = por %p111, %p112
      %p115 = scmp.ne.s32.totalorder %s98, %s114
      %p116 = scmp.eq.s32.totalorder %s22, 0
      %p117 = por %p115, %p116
      %s119 = sadd.s32 %s118, 1
      %p122 = scmp.eq.s32.totalorder %s16, 1
      %p123 = scmp.ne.s32.totalorder %s118, %s120
      %p124 = scmp.eq.s32.totalorder %s16, 0
      %p125 = por %p123, %p124
      %p126 = scmp.ne.s32.totalorder %s118, %s120
      %p127 = scmp.eq.s32.totalorder %s21, 1
      %p128 = por %p126, %p127
      %p129 = scmp.ne.s32.totalorder %s120, %s121
      %p130 = scmp.eq.s32.totalorder %s21, 0
      %p131 = por %p129, %p130
      %p132 = scmp.ne.s32.totalorder %s120, %s121
      %p133 = scmp.eq.s32.totalorder %s22, 1
      %p134 = por %p132, %p133
      %p136 = scmp.ne.s32.totalorder %s121, %s135
      %p137 = scmp.eq.s32.totalorder %s22, 0
      %p138 = por %p136, %p137
      %s140 = sadd.s32 %s139, 1
      %p143 = scmp.eq.s32.totalorder %s16, 1
      %p144 = scmp.ne.s32.totalorder %s139, %s141
      %p145 = scmp.eq.s32.totalorder %s16, 0
      %p146 = por %p144, %p145
      %p147 = scmp.ne.s32.totalorder %s139, %s141
      %p148 = scmp.eq.s32.totalorder %s21, 1
      %p149 = por %p147, %p148
      %p150 = scmp.ne.s32.totalorder %s141, %s142
      %p151 = scmp.eq.s32.totalorder %s21, 0
      %p152 = por %p150, %p151
      %p153 = scmp.ne.s32.totalorder %s141, %s142
      %p154 = scmp.eq.s32.totalorder %s22, 1
      %p155 = por %p153, %p154
      %p157 = scmp.ne.s32.totalorder %s142, %s156
      %p158 = scmp.eq.s32.totalorder %s22, 0
      %p159 = por %p157, %p158
      %s161 = sadd.s32 %s160, 1
      %p164 = scmp.eq.s32.totalorder %s16, 1
      %p165 = scmp.ne.s32.totalorder %s160, %s162
      %p166 = scmp.eq.s32.totalorder %s16, 0
      %p167 = por %p165, %p166
      %p168 = scmp.ne.s32.totalorder %s160, %s162
      %p169 = scmp.eq.s32.totalorder %s21, 1
      %p170 = por %p168, %p169
      %p171 = scmp.ne.s32.totalorder %s162, %s163
      %p172 = scmp.eq.s32.totalorder %s21, 0
      %p173 = por %p171, %p172
      %p174 = scmp.ne.s32.totalorder %s162, %s163
      %p175 = scmp.eq.s32.totalorder %s22, 1
      %p176 = por %p174, %p175
      %p178 = scmp.ne.s32.totalorder %s163, %s177
      %p179 = scmp.eq.s32.totalorder %s22, 0
      %p180 = por %p178, %p179
      %s182 = sadd.s32 %s181, 1
      %p185 = scmp.eq.s32.totalorder %s16, 1
      %p186 = scmp.ne.s32.totalorder %s181, %s183
      %p187 = scmp.eq.s32.totalorder %s16, 0
      %p188 = por %p186, %p187
      %p189 = scmp.ne.s32.totalorder %s181, %s183
      %p190 = scmp.eq.s32.totalorder %s21, 1
      %p191 = por %p189, %p190
      %p192 = scmp.ne.s32.totalorder %s183, %s184
      %p193 = scmp.eq.s32.totalorder %s21, 0
      %p194 = por %p192, %p193
      %p195 = scmp.ne.s32.totalorder %s183, %s184
      %p196 = scmp.eq.s32.totalorder %s22, 1
      %p197 = por %p195, %p196
      %p199 = scmp.ne.s32.totalorder %s184, %s198
      %p200 = scmp.eq.s32.totalorder %s22, 0
      %p201 = por %p199, %p200
      %s202 = ssub.s32 %s24, %s31
      %s203 = ssub.s32 %s23, %s35
      %s204 = sor.u32 %s202, %s203
      %p205 = scmp.eq.s32.totalorder %s204, 0
      %s207 = sadd.s32 %s206, 1
      %s208 = scalar_select %p205, %s206, %s207
      %p211 = pneg %p205
      %p212 = scmp.eq.s32.totalorder %s16, 1
      %p213 = por %p211, %p212
      %p214 = scmp.ne.s32.totalorder %s206, %s209
      %p215 = scmp.eq.s32.totalorder %s16, 0
      %p216 = por %p214, %p215
      %p217 = scmp.ne.s32.totalorder %s206, %s209
      %p218 = scmp.eq.s32.totalorder %s21, 1
      %p219 = por %p217, %p218
      %p220 = scmp.ne.s32.totalorder %s209, %s210
      %p221 = scmp.eq.s32.totalorder %s21, 0
      %p222 = por %p220, %p221
      %p223 = scmp.ne.s32.totalorder %s209, %s210
      %p224 = scmp.eq.s32.totalorder %s22, 1
      %p225 = por %p223, %p224
      %p227 = scmp.ne.s32.totalorder %s210, %s226
      %p228 = scmp.eq.s32.totalorder %s22, 0
      %p229 = por %p227, %p228
      %p230 = scmp.le.s32.totalorder 1, %s16
      %p231 = scmp.lt.s32.totalorder %s16, 3
      %p232 = pnand %p230, %p231
      %p233 = pneg %p232
      // Predicated region
      $region9: #{recurrent_model_forward.1} parent=5 // pred_check
        _
      $region10: #{recurrent_model_forward.1} parent=5 // pred_check_branch
        %235 = sbr.rel (%p232) target = $region12
      $region11: #{recurrent_model_forward.1} parent=5 // pred_region
        %s236 = ssub.s32 %s16, 1
        // Predicated region
        $region13: #{recurrent_model_forward.1} parent=11 // pred_check
          %p237 = pneg %p110
        $region14: #{recurrent_model_forward.1} parent=11 // pred_check_branch
          %239 = sbr.rel (%p237) target = $region16
        $region15: #{recurrent_model_forward.1} parent=11 // pred_region
          %p240 = scmp.lt.s32.totalorder %s25, 0
          %s241 = scalar_select %p240, %s25, 0
          %s242 = smul.addr %s241, 2
          %s243 = scalar_lea.vmem %s2, %s242
        $region16: #{recurrent_model_forward.1} parent=11 // pred_fallthru
          _
        // Predicated region
        $region17: #{recurrent_model_forward.1} parent=11 // pred_check
          %p244 = pneg %p131
        $region18: #{recurrent_model_forward.1} parent=11 // pred_check_branch
          %246 = sbr.rel (%p244) target = $region20
        $region19: #{recurrent_model_forward.1} parent=11 // pred_region
          _
        $region20: #{recurrent_model_forward.1} parent=11 // pred_fallthru
          _
        // Predicated region
        $region21: #{recurrent_model_forward.1} parent=11 // pred_check
          %p247 = pneg %p152
        $region22: #{recurrent_model_forward.1} parent=11 // pred_check_branch
          %249 = sbr.rel (%p247) target = $region24
        $region23: #{recurrent_model_forward.1} parent=11 // pred_region
          _
        $region24: #{recurrent_model_forward.1} parent=11 // pred_fallthru
          _
        // Predicated region
        $region25: #{recurrent_model_forward.1} parent=11 // pred_check
          %p250 = pneg %p173
        $region26: #{recurrent_model_forward.1} parent=11 // pred_check_branch
          %252 = sbr.rel (%p250) target = $region28
        $region27: #{recurrent_model_forward.1} parent=11 // pred_region
          _
        $region28: #{recurrent_model_forward.1} parent=11 // pred_fallthru
          _
        // Predicated region
        $region29: #{recurrent_model_forward.1} parent=11 // pred_check
          %p253 = pneg %p194
        $region30: #{recurrent_model_forward.1} parent=11 // pred_check_branch
          %255 = sbr.rel (%p253) target = $region32
        $region31: #{recurrent_model_forward.1} parent=11 // pred_region
          _
        $region32: #{recurrent_model_forward.1} parent=11 // pred_fallthru
          _
      $region12: #{recurrent_model_forward.1} parent=5 // pred_fallthru
        _
      %p256 = scmp.lt.s32.totalorder %s16, 2
      // Predicated region
      $region33: #{recurrent_model_forward.1} parent=5 // pred_check
        %p257 = pneg %p256
      $region34: #{recurrent_model_forward.1} parent=5 // pred_check_branch
        %259 = sbr.rel (%p257) target = $region36
      $region35: #{recurrent_model_forward.1} parent=5 // pred_region
        // Predicated region
        $region37: #{recurrent_model_forward.1} parent=35 // pred_check
          %p260 = pneg %p50
        $region38: #{recurrent_model_forward.1} parent=35 // pred_check_branch
          %262 = sbr.rel (%p260) target = $region40
        $region39: #{recurrent_model_forward.1} parent=35 // pred_region
          %s263 = smul.u32 4, %s24
          %p264 = scmp.lt.s32.totalorder %s263, 7
          %s265 = scalar_select %p264, %s263, 7
          %p266 = scmp.lt.s32.totalorder %s23, 0
          %s267 = scalar_select %p266, %s23, 0
          %s268 = sadd.s32 %s267, %s265
          %s269 = smul.addr %s268, 2
          %s270 = scalar_lea.vmem %s0, %s269
          %s271 = smul.u32 4, %s24
        $region40: #{recurrent_model_forward.1} parent=35 // pred_fallthru
          _
        // Predicated region
        $region41: #{recurrent_model_forward.1} parent=35 // pred_check
          %p272 = pneg %p78
        $region42: #{recurrent_model_forward.1} parent=35 // pred_check_branch
          %274 = sbr.rel (%p272) target = $region44
        $region43: #{recurrent_model_forward.1} parent=35 // pred_region
          %s275 = smul.u32 4, %s24
          %p276 = scmp.lt.s32.totalorder %s275, 7
          %s277 = scalar_select %p276, %s275, 7
          %p278 = scmp.lt.s32.totalorder %s23, 0
          %s279 = scalar_select %p278, %s23, 0
          %s280 = sadd.s32 %s279, %s277
          %s281 = smul.addr %s280, 2
          %s282 = scalar_lea.vmem %s1, %s281
          %s283 = smul.u32 4, %s24
        $region44: #{recurrent_model_forward.1} parent=35 // pred_fallthru
          _
      $region36: #{recurrent_model_forward.1} parent=5 // pred_fallthru
        _
      %p284 = scmp.le.s32.totalorder 1, %s16
      %p285 = scmp.lt.s32.totalorder %s16, 3
      %p286 = pnand %p284, %p285
      %p287 = pneg %p286
      // Predicated region
      $region45: #{recurrent_model_forward.1} parent=5 // pred_check
        _
      $region46: #{recurrent_model_forward.1} parent=5 // pred_check_branch
        %289 = sbr.rel (%p286) target = $region48
      $region47: #{recurrent_model_forward.1} parent=5 // pred_region
        %s290 = ssub.s32 %s16, 1
        %s291 = smul.u32 4, %s26
        %p292 = scmp.lt.s32.totalorder %s291, 7
        %s293 = scalar_select %p292, %s291, 7
        %p294 = scmp.lt.s32.totalorder %s25, 0
        %s295 = scalar_select %p294, %s25, 0
        %s296 = sadd.s32 %s295, %s293
        %s297 = smul.addr %s296, 2
        %s298 = scalar_lea.vmem %s0, %s297
        %p299 = pneg %p56
        %p300 = pneg %p53
        %s301 = smul.u32 4, %s26
        %p302 = scmp.lt.s32.totalorder %s301, 7
        %s303 = scalar_select %p302, %s301, 7
        %p304 = scmp.lt.s32.totalorder %s25, 0
        %s305 = scalar_select %p304, %s25, 0
        %s306 = sadd.s32 %s305, %s303
        %s307 = smul.addr %s306, 2
        %s308 = scalar_lea.vmem %s1, %s307
        %p309 = pneg %p84
        %p310 = pneg %p81
        %p311 = scmp.lt.s32.totalorder %s25, 0
        %s312 = scalar_select %p311, %s25, 0
        %s313 = smul.addr %s312, 2
        %s314 = scalar_lea.vmem %s2, %s313
        %p315 = pneg %p110
        %p316 = pneg %p107
        %p317 = pneg %p131
        %p318 = pneg %p128
        %p319 = pneg %p152
        %p320 = pneg %p149
        %p321 = pneg %p173
        %p322 = pneg %p170
        %p323 = pneg %p194
        %p324 = pneg %p191
        %p325 = pneg %p222
        %p326 = pneg %p219
        %s327 = sand.u32 %s209, 1
        %s328 = scalar_lea.sflag [#allocation4], %s327
        %s329 = sand.u32 %s209, 1
        %s330 = smul.addr %s329, 8
        %s331 = scalar_lea.vmem [#allocation3], %s330
        %s332 = smul.u32 4, %s26
        %p333 = scmp.lt.s32.totalorder %s332, 7
        %s334 = scalar_select %p333, %s332, 7
        %p335 = scmp.lt.s32.totalorder %s25, 0
        %s336 = scalar_select %p335, %s25, 0
        %s337 = sadd.s32 %s336, %s334
        %s338 = smul.addr %s337, 2
        %s339 = scalar_lea.vmem %s0, %s338
        %s340 = smul.u32 4, %s26
        %s341 = smul.u32 4, %s26
        %p342 = scmp.lt.s32.totalorder %s341, 7
        %s343 = scalar_select %p342, %s341, 7
        %p344 = scmp.lt.s32.totalorder %s25, 0
        %s345 = scalar_select %p344, %s25, 0
        %s346 = sadd.s32 %s345, %s343
        %s347 = smul.addr %s346, 2
        %s348 = scalar_lea.vmem %s1, %s347
        %s349 = smul.u32 4, %s26
        %p350 = scmp.lt.s32.totalorder %s25, 0
        %s351 = scalar_select %p350, %s25, 0
        %s352 = smul.addr %s351, 2
        %s353 = scalar_lea.vmem %s2, %s352
        %s354 = smul.u32 4, %s26
        %p355 = scmp.eq.s32.totalorder %s26, 0
        // Predicated region
        $region49: #{recurrent_model_forward.1} parent=47 // pred_check
          %p356 = pneg %p355
        $region50: #{recurrent_model_forward.1} parent=47 // pred_check_branch
          %358 = sbr.rel (%p356) target = $region52
        $region51: #{recurrent_model_forward.1} parent=47 // pred_region
          %v359 = vld [vmem:[%s353] sm:$0x3]
          %vm360 = vcmask 123904
          %361 = vst.msk [vmem:[#allocation2] sm:$0x3] %vm360, %v359
          %v362 = vld [vmem:[%s353] sm:$0x3]
          %364 = vrot.lane.b32.xlu0 %v362, 112
          %v365 = vpop.permute.xlu0 %364
          %s367 = scalar_lea.vmem [#allocation2], 2
          %368 = vst.msk [vmem:[%s367] sm:$0x3] %vm360, %v365
        $region52: #{recurrent_model_forward.1} parent=47 // pred_fallthru
          _
        %v369 = vld [vmem:[%s3] sm:$0xff]
        %v370 = vld [vmem:[%s3 + $0x8] sm:$0xff]
        %s371 = scalar_lea.vmem %s3, 16
        %v372 = vld [vmem:[%s371] sm:$0xff]
        %v373 = vld [vmem:[%s371 + $0x8] sm:$0xff]
        %v374 = vld [vmem:[%s4] sm:$0x1]
        %v376 = vperm.slane %v374, 0
        %s377 = scalar_lea.vmem %s4, 1
        %v378 = vld [vmem:[%s377] sm:$0x1]
        %v380 = vperm.slane %v378, 0
        %v381 = vld [vmem:[%s5] sm:$0xff]
        %v382 = vld [vmem:[%s5 + $0x8] sm:$0xff]
        %v383 = vld [vmem:[%s6] sm:$0x1]
        %v385 = vperm.slane %v383, 0
        %v387 = vld [vmem:[#allocation2] sm:$0x3]
        %s388 = scalar_lea.vmem [#allocation2], 2
        %v389 = vld [vmem:[%s388] sm:$0x3]
        %v390 = vld [vmem:[%s339] sm:$0x3]
        %392 = vset.pattern.permute.xlu0 0
        %393 = vperm.xlu0 %392, %v390
        %v394 = vpop.permute.xlu0 %393
        %v396 = vld [vmem:[%s348] sm:$0x3]
        %v397 = vmul.f32 %v387, %v394
        %vm398 = vcmask 130048
        %v400 = vsel %vm398, %v397, 0
        %402 = vmatpush.msra.mxu0 0.0
        %403 = vmatpush.msra.mxu0 0.0
        %404 = vmatpush.msra.mxu0 0.0
        %405 = vmatpush.msra.mxu0 0.0
        %406 = vmatpush.msra.mxu0 0.0
        %407 = vmatpush.msra.mxu0 0.0
        %408 = vmatpush.msra.mxu0 0.0
        %409 = vmatpush.msra.mxu0 0.0
        %410 = vmatpush.msra.mxu0 0.0
        %411 = vmatpush.msra.mxu0 0.0
        %412 = vmatpush.msra.mxu0 0.0
        %413 = vmatpush.msra.mxu0 0.0
        %414 = vmatpush.msra.mxu0 0.0
        %415 = vmatpush.msra.mxu0 0.0
        %416 = vmatpush.msra.mxu0 %v370
        %417 = vmatpush.msra.mxu0 %v369
        %418 = vmatmul.f32.gmra.mxu0 %v400
        %v419 = vpop.f32.mrf.mxu0
        %v420 = vadd.f32 0.0, %v419
        %421 = vdwg.mxu0
        %v422 = vadd.f32 %v396, %v420
        %v423 = vxor.u32 %v422, 2147483648
        %v424 = vmul.f32 %v423, 1.442695
        %v425 = vpow.pop %v424
        %v426 = vadd.f32 %v425, 1.0
        %v427 = vrcp.pop %v426
        %v428 = vmul.f32 %v426, %v427
        %v429 = vsub.f32 1.0, %v428
        %v430 = vmul.f32 %v427, %v429
        %v431 = vadd.f32 %v427, %v430
        %vm432 = vweird.f32 %v426
        %vm433 = vweird.f32 %v427
        %vm434 = vmor %vm432, %vm433
        %v435 = vsel %vm434, %v427, %v431
        %v436 = vand.u32 2147483647, %v426
        %vm437 = vcmp.eq.f32.partialorder %v436, 8.507059e+37
        %v438 = vand.u32 %v426, 2147483648
        %v439 = vor.u32 1.1754944e-38, %v438
        %v440 = vsel %vm437, %v439, %v435
        %v441 = vmul.f32 1.0, %v440
        %442 = vrot.lane.b32.xlu0 %v376, 32
        %v443 = vpop.permute.xlu0 %442
        %v445 = vadd.f32 %v420, %v443
        %447 = vrot.lane.b32.xlu0 %v445, 96
        %v448 = vpop.permute.xlu0 %447
        %v450 = vmul.f32 %v441, %v448
        %452 = vrot.lane.b32.xlu0 %v450, 32
        %v453 = vpop.permute.xlu0 %452
        %v455 = vadd.f32 %v396, %v453
        %v456 = vtanh.pop %v455
        %v457 = vsub.f32 1.0, %v441
        %459 = vrot.lane.b32.xlu0 %v456, 112
        %v460 = vpop.permute.xlu0 %459
        %v462 = vmul.f32 %v457, %v460
        %463 = vrot.lane.b32.xlu0 %v397, 16
        %v464 = vpop.permute.xlu0 %463
        %v466 = vmul.f32 %v441, %v464
        %v467 = vadd.f32 %v462, %v466
        %469 = vrot.lane.b32.xlu0 %v467, 112
        %v470 = vpop.permute.xlu0 %469
        %vm472 = vcmask 123904
        %473 = vst.msk [vmem:[%s331] sm:$0x3] %vm472, %v470
        %v474 = vmul.f32 %v389, %v394
        %v475 = vsel %vm398, %v470, 0
        %477 = vmatpush.msra.mxu0 0.0
        %478 = vmatpush.msra.mxu0 0.0
        %479 = vmatpush.msra.mxu0 0.0
        %480 = vmatpush.msra.mxu0 0.0
        %481 = vmatpush.msra.mxu0 0.0
        %482 = vmatpush.msra.mxu0 0.0
        %483 = vmatpush.msra.mxu0 0.0
        %484 = vmatpush.msra.mxu0 0.0
        %485 = vmatpush.msra.mxu0 0.0
        %486 = vmatpush.msra.mxu0 0.0
        %487 = vmatpush.msra.mxu0 0.0
        %488 = vmatpush.msra.mxu0 0.0
        %489 = vmatpush.msra.mxu0 0.0
        %490 = vmatpush.msra.mxu0 0.0
        %491 = vmatpush.msra.mxu0 %v382
        %492 = vmatpush.msra.mxu0 %v381
        %493 = vmatmul.f32.gmra.mxu0 %v475
        %v494 = vpop.f32.mrf.mxu0
        %v495 = vadd.f32 %v385, %v494
        %496 = vdwg.mxu0
        %v498 = vsel %vm398, %v474, 0
        %500 = vmatpush.msra.mxu0 0.0
        %501 = vmatpush.msra.mxu0 0.0
        %502 = vmatpush.msra.mxu0 0.0
        %503 = vmatpush.msra.mxu0 0.0
        %504 = vmatpush.msra.mxu0 0.0
        %505 = vmatpush.msra.mxu0 0.0
        %506 = vmatpush.msra.mxu0 0.0
        %507 = vmatpush.msra.mxu0 0.0
        %508 = vmatpush.msra.mxu0 0.0
        %509 = vmatpush.msra.mxu0 0.0
        %510 = vmatpush.msra.mxu0 0.0
        %511 = vmatpush.msra.mxu0 0.0
        %512 = vmatpush.msra.mxu0 0.0
        %513 = vmatpush.msra.mxu0 0.0
        %514 = vmatpush.msra.mxu0 %v373
        %515 = vmatpush.msra.mxu0 %v372
        %516 = vmatmul.f32.gmra.mxu0 %v498
        %v517 = vpop.f32.mrf.mxu0
        %v518 = vadd.f32 0.0, %v517
        %519 = vdwg.mxu0
        %v520 = vadd.f32 %v495, %v518
        %v521 = vxor.u32 %v520, 2147483648
        %v522 = vmul.f32 %v521, 1.442695
        %v523 = vpow.pop %v522
        %v524 = vadd.f32 %v523, 1.0
        %v525 = vrcp.pop %v524
        %v526 = vmul.f32 %v524, %v525
        %v527 = vsub.f32 1.0, %v526
        %v528 = vmul.f32 %v525, %v527
        %v529 = vadd.f32 %v525, %v528
        %vm530 = vweird.f32 %v524
        %vm531 = vweird.f32 %v525
        %vm532 = vmor %vm530, %vm531
        %v533 = vsel %vm532, %v525, %v529
        %v534 = vand.u32 2147483647, %v524
        %vm535 = vcmp.eq.f32.partialorder %v534, 8.507059e+37
        %v536 = vand.u32 %v524, 2147483648
        %v537 = vor.u32 1.1754944e-38, %v536
        %v538 = vsel %vm535, %v537, %v533
        %v539 = vmul.f32 1.0, %v538
        %540 = vrot.lane.b32.xlu0 %v380, 32
        %v541 = vpop.permute.xlu0 %540
        %v543 = vadd.f32 %v518, %v541
        %545 = vrot.lane.b32.xlu0 %v543, 96
        %v546 = vpop.permute.xlu0 %545
        %v548 = vmul.f32 %v539, %v546
        %550 = vrot.lane.b32.xlu0 %v548, 32
        %v551 = vpop.permute.xlu0 %550
        %v553 = vadd.f32 %v495, %v551
        %v554 = vtanh.pop %v553
        %v555 = vsub.f32 1.0, %v539
        %557 = vrot.lane.b32.xlu0 %v554, 112
        %v558 = vpop.permute.xlu0 %557
        %v560 = vmul.f32 %v555, %v558
        %561 = vrot.lane.b32.xlu0 %v474, 16
        %v562 = vpop.permute.xlu0 %561
        %v564 = vmul.f32 %v539, %v562
        %v565 = vadd.f32 %v560, %v564
        %vm566 = vcmask 255104
        %567 = vst.msk [vmem:[%s331] sm:$0x3] %vm566, %v565
        %s568 = scalar_lea.vmem %s339, 2
        %v569 = vld [vmem:[%s568] sm:$0x3]
        %571 = vset.pattern.permute.xlu0 0
        %572 = vperm.xlu0 %571, %v569
        %v573 = vpop.permute.xlu0 %572
        %s575 = scalar_lea.vmem %s348, 2
        %v576 = vld [vmem:[%s575] sm:$0x3]
        %v577 = vmul.f32 %v467, %v573
        %579 = vrot.lane.b32.xlu0 %v577, 112
        %v580 = vpop.permute.xlu0 %579
        %v581 = vsel %vm398, %v580, 0
        %583 = vmatpush.msra.mxu0 0.0
        %584 = vmatpush.msra.mxu0 0.0
        %585 = vmatpush.msra.mxu0 0.0
        %586 = vmatpush.msra.mxu0 0.0
        %587 = vmatpush.msra.mxu0 0.0
        %588 = vmatpush.msra.mxu0 0.0
        %589 = vmatpush.msra.mxu0 0.0
        %590 = vmatpush.msra.mxu0 0.0
        %591 = vmatpush.msra.mxu0 0.0
        %592 = vmatpush.msra.mxu0 0.0
        %593 = vmatpush.msra.mxu0 0.0
        %594 = vmatpush.msra.mxu0 0.0
        %595 = vmatpush.msra.mxu0 0.0
        %596 = vmatpush.msra.mxu0 0.0
        %597 = vmatpush.msra.mxu0 %v370
        %598 = vmatpush.msra.mxu0 %v369
        %599 = vmatmul.f32.gmra.mxu0 %v581
        %v600 = vpop.f32.mrf.mxu0
        %v601 = vadd.f32 0.0, %v600
        %602 = vdwg.mxu0
        %v603 = vadd.f32 %v576, %v601
        %v604 = vxor.u32 %v603, 2147483648
        %v605 = vmul.f32 %v604, 1.442695
        %v606 = vpow.pop %v605
        %v607 = vadd.f32 %v606, 1.0
        %v608 = vrcp.pop %v607
        %v609 = vmul.f32 %v607, %v608
        %v610 = vsub.f32 1.0, %v609
        %v611 = vmul.f32 %v608, %v610
        %v612 = vadd.f32 %v608, %v611
        %vm613 = vweird.f32 %v607
        %vm614 = vweird.f32 %v608
        %vm615 = vmor %vm613, %vm614
        %v616 = vsel %vm615, %v608, %v612
        %v617 = vand.u32 2147483647, %v607
        %vm618 = vcmp.eq.f32.partialorder %v617, 8.507059e+37
        %v619 = vand.u32 %v607, 2147483648
        %v620 = vor.u32 1.1754944e-38, %v619
        %v621 = vsel %vm618, %v620, %v616
        %v622 = vmul.f32 1.0, %v621
        %v623 = vadd.f32 %v601, %v443
        %625 = vrot.lane.b32.xlu0 %v623, 96
        %v626 = vpop.permute.xlu0 %625
        %v628 = vmul.f32 %v622, %v626
        %630 = vrot.lane.b32.xlu0 %v628, 32
        %v631 = vpop.permute.xlu0 %630
        %v633 = vadd.f32 %v576, %v631
        %v634 = vtanh.pop %v633
        %v635 = vsub.f32 1.0, %v622
        %637 = vrot.lane.b32.xlu0 %v634, 112
        %v638 = vpop.permute.xlu0 %637
        %v640 = vmul.f32 %v635, %v638
        %v641 = vmul.f32 %v622, %v577
        %v642 = vadd.f32 %v640, %v641
        %644 = vrot.lane.b32.xlu0 %v642, 112
        %v645 = vpop.permute.xlu0 %644
        %s647 = scalar_lea.vmem %s331, 2 [#allocation3]
        %648 = vst.msk [vmem:[%s647] sm:$0x3] %vm472, %v645
        %v649 = vmul.f32 %v565, %v573
        %v650 = vsel %vm398, %v645, 0
        %652 = vmatpush.msra.mxu0 0.0
        %653 = vmatpush.msra.mxu0 0.0
        %654 = vmatpush.msra.mxu0 0.0
        %655 = vmatpush.msra.mxu0 0.0
        %656 = vmatpush.msra.mxu0 0.0
        %657 = vmatpush.msra.mxu0 0.0
        %658 = vmatpush.msra.mxu0 0.0
        %659 = vmatpush.msra.mxu0 0.0
        %660 = vmatpush.msra.mxu0 0.0
        %661 = vmatpush.msra.mxu0 0.0
        %662 = vmatpush.msra.mxu0 0.0
        %663 = vmatpush.msra.mxu0 0.0
        %664 = vmatpush.msra.mxu0 0.0
        %665 = vmatpush.msra.mxu0 0.0
        %666 = vmatpush.msra.mxu0 %v382
        %667 = vmatpush.msra.mxu0 %v381
        %668 = vmatmul.f32.gmra.mxu0 %v650
        %v669 = vpop.f32.mrf.mxu0
        %v670 = vadd.f32 %v385, %v669
        %671 = vdwg.mxu0
        %673 = vrot.lane.b32.xlu0 %v649, 112
        %v674 = vpop.permute.xlu0 %673
        %v675 = vsel %vm398, %v674, 0
        %677 = vmatpush.msra.mxu0 0.0
        %678 = vmatpush.msra.mxu0 0.0
        %679 = vmatpush.msra.mxu0 0.0
        %680 = vmatpush.msra.mxu0 0.0
        %681 = vmatpush.msra.mxu0 0.0
        %682 = vmatpush.msra.mxu0 0.0
        %683 = vmatpush.msra.mxu0 0.0
        %684 = vmatpush.msra.mxu0 0.0
        %685 = vmatpush.msra.mxu0 0.0
        %686 = vmatpush.msra.mxu0 0.0
        %687 = vmatpush.msra.mxu0 0.0
        %688 = vmatpush.msra.mxu0 0.0
        %689 = vmatpush.msra.mxu0 0.0
        %690 = vmatpush.msra.mxu0 0.0
        %691 = vmatpush.msra.mxu0 %v373
        %692 = vmatpush.msra.mxu0 %v372
        %693 = vmatmul.f32.gmra.mxu0 %v675
        %v694 = vpop.f32.mrf.mxu0
        %v695 = vadd.f32 0.0, %v694
        %696 = vdwg.mxu0
        %v697 = vadd.f32 %v670, %v695
        %v698 = vxor.u32 %v697, 2147483648
        %v699 = vmul.f32 %v698, 1.442695
        %v700 = vpow.pop %v699
        %v701 = vadd.f32 %v700, 1.0
        %v702 = vrcp.pop %v701
        %v703 = vmul.f32 %v701, %v702
        %v704 = vsub.f32 1.0, %v703
        %v705 = vmul.f32 %v702, %v704
        %v706 = vadd.f32 %v702, %v705
        %vm707 = vweird.f32 %v701
        %vm708 = vweird.f32 %v702
        %vm709 = vmor %vm707, %vm708
        %v710 = vsel %vm709, %v702, %v706
        %v711 = vand.u32 2147483647, %v701
        %vm712 = vcmp.eq.f32.partialorder %v711, 8.507059e+37
        %v713 = vand.u32 %v701, 2147483648
        %v714 = vor.u32 1.1754944e-38, %v713
        %v715 = vsel %vm712, %v714, %v710
        %v716 = vmul.f32 1.0, %v715
        %v717 = vadd.f32 %v695, %v541
        %719 = vrot.lane.b32.xlu0 %v717, 96
        %v720 = vpop.permute.xlu0 %719
        %v722 = vmul.f32 %v716, %v720
        %724 = vrot.lane.b32.xlu0 %v722, 32
        %v725 = vpop.permute.xlu0 %724
        %v727 = vadd.f32 %v670, %v725
        %v728 = vtanh.pop %v727
        %v729 = vsub.f32 1.0, %v716
        %731 = vrot.lane.b32.xlu0 %v728, 112
        %v732 = vpop.permute.xlu0 %731
        %v734 = vmul.f32 %v729, %v732
        %v735 = vmul.f32 %v716, %v649
        %v736 = vadd.f32 %v734, %v735
        %737 = vst.msk [vmem:[%s647] sm:$0x3] %vm566, %v736
        %s738 = scalar_lea.vmem %s339, 4
        %v739 = vld [vmem:[%s738] sm:$0x3]
        %741 = vset.pattern.permute.xlu0 0
        %742 = vperm.xlu0 %741, %v739
        %v743 = vpop.permute.xlu0 %742
        %s745 = scalar_lea.vmem %s348, 4
        %v746 = vld [vmem:[%s745] sm:$0x3]
        %v747 = vmul.f32 %v642, %v743
        %749 = vrot.lane.b32.xlu0 %v747, 112
        %v750 = vpop.permute.xlu0 %749
        %v751 = vsel %vm398, %v750, 0
        %753 = vmatpush.msra.mxu0 0.0
        %754 = vmatpush.msra.mxu0 0.0
        %755 = vmatpush.msra.mxu0 0.0
        %756 = vmatpush.msra.mxu0 0.0
        %757 = vmatpush.msra.mxu0 0.0
        %758 = vmatpush.msra.mxu0 0.0
        %759 = vmatpush.msra.mxu0 0.0
        %760 = vmatpush.msra.mxu0 0.0
        %761 = vmatpush.msra.mxu0 0.0
        %762 = vmatpush.msra.mxu0 0.0
        %763 = vmatpush.msra.mxu0 0.0
        %764 = vmatpush.msra.mxu0 0.0
        %765 = vmatpush.msra.mxu0 0.0
        %766 = vmatpush.msra.mxu0 0.0
        %767 = vmatpush.msra.mxu0 %v370
        %768 = vmatpush.msra.mxu0 %v369
        %769 = vmatmul.f32.gmra.mxu0 %v751
        %v770 = vpop.f32.mrf.mxu0
        %v771 = vadd.f32 0.0, %v770
        %772 = vdwg.mxu0
        %v773 = vadd.f32 %v746, %v771
        %v774 = vxor.u32 %v773, 2147483648
        %v775 = vmul.f32 %v774, 1.442695
        %v776 = vpow.pop %v775
        %v777 = vadd.f32 %v776, 1.0
        %v778 = vrcp.pop %v777
        %v779 = vmul.f32 %v777, %v778
        %v780 = vsub.f32 1.0, %v779
        %v781 = vmul.f32 %v778, %v780
        %v782 = vadd.f32 %v778, %v781
        %vm783 = vweird.f32 %v777
        %vm784 = vweird.f32 %v778
        %vm785 = vmor %vm783, %vm784
        %v786 = vsel %vm785, %v778, %v782
        %v787 = vand.u32 2147483647, %v777
        %vm788 = vcmp.eq.f32.partialorder %v787, 8.507059e+37
        %v789 = vand.u32 %v777, 2147483648
        %v790 = vor.u32 1.1754944e-38, %v789
        %v791 = vsel %vm788, %v790, %v786
        %v792 = vmul.f32 1.0, %v791
        %v793 = vadd.f32 %v771, %v443
        %795 = vrot.lane.b32.xlu0 %v793, 96
        %v796 = vpop.permute.xlu0 %795
        %v798 = vmul.f32 %v792, %v796
        %800 = vrot.lane.b32.xlu0 %v798, 32
        %v801 = vpop.permute.xlu0 %800
        %v803 = vadd.f32 %v746, %v801
        %v804 = vtanh.pop %v803
        %v805 = vsub.f32 1.0, %v792
        %807 = vrot.lane.b32.xlu0 %v804, 112
        %v808 = vpop.permute.xlu0 %807
        %v810 = vmul.f32 %v805, %v808
        %v811 = vmul.f32 %v792, %v747
        %v812 = vadd.f32 %v810, %v811
        %814 = vrot.lane.b32.xlu0 %v812, 112
        %v815 = vpop.permute.xlu0 %814
        %s817 = scalar_lea.vmem %s331, 4 [#allocation3]
        %818 = vst.msk [vmem:[%s817] sm:$0x3] %vm472, %v815
        %v819 = vmul.f32 %v736, %v743
        %v820 = vsel %vm398, %v815, 0
        %822 = vmatpush.msra.mxu0 0.0
        %823 = vmatpush.msra.mxu0 0.0
        %824 = vmatpush.msra.mxu0 0.0
        %825 = vmatpush.msra.mxu0 0.0
        %826 = vmatpush.msra.mxu0 0.0
        %827 = vmatpush.msra.mxu0 0.0
        %828 = vmatpush.msra.mxu0 0.0
        %829 = vmatpush.msra.mxu0 0.0
        %830 = vmatpush.msra.mxu0 0.0
        %831 = vmatpush.msra.mxu0 0.0
        %832 = vmatpush.msra.mxu0 0.0
        %833 = vmatpush.msra.mxu0 0.0
        %834 = vmatpush.msra.mxu0 0.0
        %835 = vmatpush.msra.mxu0 0.0
        %836 = vmatpush.msra.mxu0 %v382
        %837 = vmatpush.msra.mxu0 %v381
        %838 = vmatmul.f32.gmra.mxu0 %v820
        %v839 = vpop.f32.mrf.mxu0
        %v840 = vadd.f32 %v385, %v839
        %841 = vdwg.mxu0
        %843 = vrot.lane.b32.xlu0 %v819, 112
        %v844 = vpop.permute.xlu0 %843
        %v845 = vsel %vm398, %v844, 0
        %847 = vmatpush.msra.mxu0 0.0
        %848 = vmatpush.msra.mxu0 0.0
        %849 = vmatpush.msra.mxu0 0.0
        %850 = vmatpush.msra.mxu0 0.0
        %851 = vmatpush.msra.mxu0 0.0
        %852 = vmatpush.msra.mxu0 0.0
        %853 = vmatpush.msra.mxu0 0.0
        %854 = vmatpush.msra.mxu0 0.0
        %855 = vmatpush.msra.mxu0 0.0
        %856 = vmatpush.msra.mxu0 0.0
        %857 = vmatpush.msra.mxu0 0.0
        %858 = vmatpush.msra.mxu0 0.0
        %859 = vmatpush.msra.mxu0 0.0
        %860 = vmatpush.msra.mxu0 0.0
        %861 = vmatpush.msra.mxu0 %v373
        %862 = vmatpush.msra.mxu0 %v372
        %863 = vmatmul.f32.gmra.mxu0 %v845
        %v864 = vpop.f32.mrf.mxu0
        %v865 = vadd.f32 0.0, %v864
        %866 = vdwg.mxu0
        %v867 = vadd.f32 %v840, %v865
        %v868 = vxor.u32 %v867, 2147483648
        %v869 = vmul.f32 %v868, 1.442695
        %v870 = vpow.pop %v869
        %v871 = vadd.f32 %v870, 1.0
        %v872 = vrcp.pop %v871
        %v873 = vmul.f32 %v871, %v872
        %v874 = vsub.f32 1.0, %v873
        %v875 = vmul.f32 %v872, %v874
        %v876 = vadd.f32 %v872, %v875
        %vm877 = vweird.f32 %v871
        %vm878 = vweird.f32 %v872
        %vm879 = vmor %vm877, %vm878
        %v880 = vsel %vm879, %v872, %v876
        %v881 = vand.u32 2147483647, %v871
        %vm882 = vcmp.eq.f32.partialorder %v881, 8.507059e+37
        %v883 = vand.u32 %v871, 2147483648
        %v884 = vor.u32 1.1754944e-38, %v883
        %v885 = vsel %vm882, %v884, %v880
        %v886 = vmul.f32 1.0, %v885
        %v887 = vadd.f32 %v865, %v541
        %889 = vrot.lane.b32.xlu0 %v887, 96
        %v890 = vpop.permute.xlu0 %889
        %v892 = vmul.f32 %v886, %v890
        %894 = vrot.lane.b32.xlu0 %v892, 32
        %v895 = vpop.permute.xlu0 %894
        %v897 = vadd.f32 %v840, %v895
        %v898 = vtanh.pop %v897
        %v899 = vsub.f32 1.0, %v886
        %901 = vrot.lane.b32.xlu0 %v898, 112
        %v902 = vpop.permute.xlu0 %901
        %v904 = vmul.f32 %v899, %v902
        %v905 = vmul.f32 %v886, %v819
        %v906 = vadd.f32 %v904, %v905
        %907 = vst.msk [vmem:[%s817] sm:$0x3] %vm566, %v906
        %s908 = scalar_lea.vmem %s339, 6
        %v909 = vld [vmem:[%s908] sm:$0x3]
        %911 = vset.pattern.permute.xlu0 0
        %912 = vperm.xlu0 %911, %v909
        %v913 = vpop.permute.xlu0 %912
        %s915 = scalar_lea.vmem %s348, 6
        %v916 = vld [vmem:[%s915] sm:$0x3]
        %v917 = vmul.f32 %v812, %v913
        %919 = vrot.lane.b32.xlu0 %v917, 112
        %v920 = vpop.permute.xlu0 %919
        %v921 = vsel %vm398, %v920, 0
        %923 = vmatpush.msra.mxu0 0.0
        %924 = vmatpush.msra.mxu0 0.0
        %925 = vmatpush.msra.mxu0 0.0
        %926 = vmatpush.msra.mxu0 0.0
        %927 = vmatpush.msra.mxu0 0.0
        %928 = vmatpush.msra.mxu0 0.0
        %929 = vmatpush.msra.mxu0 0.0
        %930 = vmatpush.msra.mxu0 0.0
        %931 = vmatpush.msra.mxu0 0.0
        %932 = vmatpush.msra.mxu0 0.0
        %933 = vmatpush.msra.mxu0 0.0
        %934 = vmatpush.msra.mxu0 0.0
        %935 = vmatpush.msra.mxu0 0.0
        %936 = vmatpush.msra.mxu0 0.0
        %937 = vmatpush.msra.mxu0 %v370
        %938 = vmatpush.msra.mxu0 %v369
        %939 = vmatmul.f32.gmra.mxu0 %v921
        %v940 = vpop.f32.mrf.mxu0
        %v941 = vadd.f32 0.0, %v940
        %942 = vdwg.mxu0
        %v943 = vadd.f32 %v916, %v941
        %v944 = vxor.u32 %v943, 2147483648
        %v945 = vmul.f32 %v944, 1.442695
        %v946 = vpow.pop %v945
        %v947 = vadd.f32 %v946, 1.0
        %v948 = vrcp.pop %v947
        %v949 = vmul.f32 %v947, %v948
        %v950 = vsub.f32 1.0, %v949
        %v951 = vmul.f32 %v948, %v950
        %v952 = vadd.f32 %v948, %v951
        %vm953 = vweird.f32 %v947
        %vm954 = vweird.f32 %v948
        %vm955 = vmor %vm953, %vm954
        %v956 = vsel %vm955, %v948, %v952
        %v957 = vand.u32 2147483647, %v947
        %vm958 = vcmp.eq.f32.partialorder %v957, 8.507059e+37
        %v959 = vand.u32 %v947, 2147483648
        %v960 = vor.u32 1.1754944e-38, %v959
        %v961 = vsel %vm958, %v960, %v956
        %v962 = vmul.f32 1.0, %v961
        %v963 = vadd.f32 %v941, %v443
        %965 = vrot.lane.b32.xlu0 %v963, 96
        %v966 = vpop.permute.xlu0 %965
        %v968 = vmul.f32 %v962, %v966
        %970 = vrot.lane.b32.xlu0 %v968, 32
        %v971 = vpop.permute.xlu0 %970
        %v973 = vadd.f32 %v916, %v971
        %v974 = vtanh.pop %v973
        %v975 = vsub.f32 1.0, %v962
        %977 = vrot.lane.b32.xlu0 %v974, 112
        %v978 = vpop.permute.xlu0 %977
        %v980 = vmul.f32 %v975, %v978
        %v981 = vmul.f32 %v962, %v917
        %v982 = vadd.f32 %v980, %v981
        %984 = vrot.lane.b32.xlu0 %v982, 112
        %v985 = vpop.permute.xlu0 %984
        %s987 = scalar_lea.vmem %s331, 6 [#allocation3]
        %988 = vst.msk [vmem:[%s987] sm:$0x3] %vm472, %v985
        %v989 = vmul.f32 %v906, %v913
        %v990 = vsel %vm398, %v985, 0
        %992 = vmatpush.msra.mxu0 0.0
        %993 = vmatpush.msra.mxu0 0.0
        %994 = vmatpush.msra.mxu0 0.0
        %995 = vmatpush.msra.mxu0 0.0
        %996 = vmatpush.msra.mxu0 0.0
        %997 = vmatpush.msra.mxu0 0.0
        %998 = vmatpush.msra.mxu0 0.0
        %999 = vmatpush.msra.mxu0 0.0
        %1000 = vmatpush.msra.mxu0 0.0
        %1001 = vmatpush.msra.mxu0 0.0
        %1002 = vmatpush.msra.mxu0 0.0
        %1003 = vmatpush.msra.mxu0 0.0
        %1004 = vmatpush.msra.mxu0 0.0
        %1005 = vmatpush.msra.mxu0 0.0
        %1006 = vmatpush.msra.mxu0 %v382
        %1007 = vmatpush.msra.mxu0 %v381
        %1008 = vmatmul.f32.gmra.mxu0 %v990
        %v1009 = vpop.f32.mrf.mxu0
        %v1010 = vadd.f32 %v385, %v1009
        %1011 = vdwg.mxu0
        %1013 = vrot.lane.b32.xlu0 %v989, 112
        %v1014 = vpop.permute.xlu0 %1013
        %v1015 = vsel %vm398, %v1014, 0
        %1017 = vmatpush.msra.mxu0 0.0
        %1018 = vmatpush.msra.mxu0 0.0
        %1019 = vmatpush.msra.mxu0 0.0
        %1020 = vmatpush.msra.mxu0 0.0
        %1021 = vmatpush.msra.mxu0 0.0
        %1022 = vmatpush.msra.mxu0 0.0
        %1023 = vmatpush.msra.mxu0 0.0
        %1024 = vmatpush.msra.mxu0 0.0
        %1025 = vmatpush.msra.mxu0 0.0
        %1026 = vmatpush.msra.mxu0 0.0
        %1027 = vmatpush.msra.mxu0 0.0
        %1028 = vmatpush.msra.mxu0 0.0
        %1029 = vmatpush.msra.mxu0 0.0
        %1030 = vmatpush.msra.mxu0 0.0
        %1031 = vmatpush.msra.mxu0 %v373
        %1032 = vmatpush.msra.mxu0 %v372
        %1033 = vmatmul.f32.gmra.mxu0 %v1015
        %v1034 = vpop.f32.mrf.mxu0
        %v1035 = vadd.f32 0.0, %v1034
        %1036 = vdwg.mxu0
        %v1037 = vadd.f32 %v1010, %v1035
        %v1038 = vxor.u32 %v1037, 2147483648
        %v1039 = vmul.f32 %v1038, 1.442695
        %v1040 = vpow.pop %v1039
        %v1041 = vadd.f32 %v1040, 1.0
        %v1042 = vrcp.pop %v1041
        %v1043 = vmul.f32 %v1041, %v1042
        %v1044 = vsub.f32 1.0, %v1043
        %v1045 = vmul.f32 %v1042, %v1044
        %v1046 = vadd.f32 %v1042, %v1045
        %vm1047 = vweird.f32 %v1041
        %vm1048 = vweird.f32 %v1042
        %vm1049 = vmor %vm1047, %vm1048
        %v1050 = vsel %vm1049, %v1042, %v1046
        %v1051 = vand.u32 2147483647, %v1041
        %vm1052 = vcmp.eq.f32.partialorder %v1051, 8.507059e+37
        %v1053 = vand.u32 %v1041, 2147483648
        %v1054 = vor.u32 1.1754944e-38, %v1053
        %v1055 = vsel %vm1052, %v1054, %v1050
        %v1056 = vmul.f32 1.0, %v1055
        %v1057 = vadd.f32 %v1035, %v541
        %1059 = vrot.lane.b32.xlu0 %v1057, 96
        %v1060 = vpop.permute.xlu0 %1059
        %v1062 = vmul.f32 %v1056, %v1060
        %1064 = vrot.lane.b32.xlu0 %v1062, 32
        %v1065 = vpop.permute.xlu0 %1064
        %v1067 = vadd.f32 %v1010, %v1065
        %v1068 = vtanh.pop %v1067
        %v1069 = vsub.f32 1.0, %v1056
        %1071 = vrot.lane.b32.xlu0 %v1068, 112
        %v1072 = vpop.permute.xlu0 %1071
        %v1074 = vmul.f32 %v1069, %v1072
        %v1075 = vmul.f32 %v1056, %v989
        %v1076 = vadd.f32 %v1074, %v1075
        %1077 = vst.msk [vmem:[%s987] sm:$0x3] %vm566, %v1076
        %1078 = vst.msk [vmem:[#allocation2] sm:$0x3] %vm472, %v985
        %1080 = vrot.lane.b32.xlu0 %v1076, 112
        %v1081 = vpop.permute.xlu0 %1080
        %1083 = vst.msk [vmem:[%s388] sm:$0x3] %vm472, %v1081
        %s1084 = sand.u32 %s209, 1
        %s1085 = scalar_lea.sflag [#allocation4], %s1084
        %s1086 = sand.u32 %s209, 1
        %s1087 = smul.addr %s1086, 8
        %s1088 = scalar_lea.vmem [#allocation3], %s1087
        // Predicated region
        $region53: #{recurrent_model_forward.1} parent=47 // pred_check
          %p1089 = pneg %p219
        $region54: #{recurrent_model_forward.1} parent=47 // pred_check_branch
          %1091 = sbr.rel (%p1089) target = $region56
        $region55: #{recurrent_model_forward.1} parent=47 // pred_region
          %s1092 = smul.u32 4, %s26
          %1094 = vsyncadd %s1085, 0
          %s1095 = sadd.s32 %s25, %s1092
          %s1096 = smul.addr %s1095, 2
          %s1097 = scalar_lea.hbm %s7, %s1096
          %s1098 = sshll.u32 %s1088, 4
          %s1099 = int_to_ptr.vmem [resolvable:$true] %s1098
          %s1100 = sshll.u32 %s1097, 4
          %s1101 = int_to_ptr.hbm [resolvable:$true] %s1100
          %1106 = dma.vmem_to_hbm [thread:$0]  %s1099, 128, %s1101, %s1085, 32, 32, 2
        $region56: #{recurrent_model_forward.1} parent=47 // pred_fallthru
          _
      $region48: #{recurrent_model_forward.1} parent=5 // pred_fallthru
        _
      %p1107 = scmp.le.s32.totalorder 2, %s16
      // Predicated region
      $region57: #{recurrent_model_forward.1} parent=5 // pred_check
        %p1108 = pneg %p1107
      $region58: #{recurrent_model_forward.1} parent=5 // pred_check_branch
        %1110 = sbr.rel (%p1108) target = $region60
      $region59: #{recurrent_model_forward.1} parent=5 // pred_region
        %s1111 = ssub.s32 %s16, 2
        // Predicated region
        $region61: #{recurrent_model_forward.1} parent=59 // pred_check
          %p1112 = pneg %p225
        $region62: #{recurrent_model_forward.1} parent=59 // pred_check_branch
          %1114 = sbr.rel (%p1112) target = $region64
        $region63: #{recurrent_model_forward.1} parent=59 // pred_region
          %s1115 = sand.u32 %s210, 1
          %s1116 = scalar_lea.sflag [#allocation4], %s1115
          %s1117 = sand.u32 %s210, 1
          %s1118 = smul.addr %s1117, 8
          %s1119 = scalar_lea.vmem [#allocation3], %s1118
          %1121 = dma.done %s1116, 128
        $region64: #{recurrent_model_forward.1} parent=59 // pred_fallthru
          _
      $region60: #{recurrent_model_forward.1} parent=5 // pred_fallthru
        _
    $region6: #{recurrent_model_forward.1} parent=1 // loop_footer
      %s20 = sadd.s32 1, %s16
    $region7: #{recurrent_model_forward.1} parent=1 // loop_footer_branch
      %15 = sbr.rel target = $region3
    $region8: #{recurrent_model_forward.1} parent=1 // loop_exit
      _
    %1122 = vsyncpa [#allocation4], 1
    %s1123 = scalar_lea.sflag [#allocation4], 1
    %1124 = vsyncpa %s1123, 1

</llo_original>
